<compile_context>
chip_gen: v6e
topology: v6e:2x2x1
jax: 0.10.0
libtpu: 0.0.40
codegen_flags: <defaults>
</compile_context>

<pallas_src>
import functools
import math

import jax
import jax.numpy as jnp
from jax.experimental import pallas as pl
from jax.experimental.pallas import tpu as pltpu


def _vmem_capacity_bytes():
    """Per-generation VMEM capacity (v5e/v6e: 128 MiB, v7x: 64 MiB per TC)."""
    try:
        info = pltpu.get_tpu_info()
        cap = getattr(info, "vmem_capacity_bytes", None)
        if cap:
            return int(cap)
    except Exception:
        pass
    return 64 * 2 ** 20  # conservative fallback (v7x per-core size)


# ----------------------------------------------------------------------------
# Pallas kernel: one full transformer-encoder layer for a block of Bt batch
# elements.  Grid = (B/Bt,); every grid step processes x[b0:b0+Bt] : (Bt, S, D)
# entirely in VMEM.  `q_rows` = number of query rows whose outputs are needed
# (S normally, 1 for the final layer of the CLS-only path).
# ----------------------------------------------------------------------------
def _encoder_layer_kernel(num_heads, q_rows,
                          x_ref, mask_ref,
                          wqkv_ref, bqkv_ref, wo_ref, bo_ref,
                          ln1g_ref, ln1b_ref,
                          w1_ref, b1_ref, w2_ref, b2_ref,
                          ln2g_ref, ln2b_ref,
                          o_ref):
    Bt, S, D = x_ref.shape
    H = num_heads
    Dh = D // H
    Sq = q_rows
    R = Bt * S
    Rq = Bt * Sq
    scale = 1.0 / math.sqrt(Dh)

    x3 = x_ref[...]                                     # (Bt, S, D) bf16
    xb = x3.reshape(R, D)

    # --- fused QKV projection: one well-shaped MXU matmul, f32 accumulate ----
    qkv = jnp.dot(xb, wqkv_ref[...], preferred_element_type=jnp.float32)
    qkv = qkv + bqkv_ref[...]                           # (R, 3D) f32

    def heads_major(t2d, rows):
        # (R, D) f32 -> (H*Bt, rows, Dh) bf16, batch order (head, batch).
        # One relayout per tensor (minor dim Dh stays the lane dim).
        t = t2d.astype(jnp.bfloat16).reshape(Bt, S, H, Dh)
        if rows != S:
            t = t[:, :rows]                             # CLS query row only
        t = t.reshape(Bt * rows, H, Dh)
        t = jnp.transpose(t, (1, 0, 2))                 # (H, Bt*rows, Dh)
        return t.reshape(H * Bt, rows, Dh)

    qh = heads_major(qkv[:, 0 * D:1 * D], Sq)           # (H*Bt, Sq, Dh)
    kh = heads_major(qkv[:, 1 * D:2 * D], S)            # (H*Bt, S,  Dh)
    vh = heads_major(qkv[:, 2 * D:3 * D], S)            # (H*Bt, S,  Dh)

    # --- attention: all (head, batch) pairs in two batched MXU matmuls -------
    s = jnp.einsum('bqd,bkd->bqk', qh, kh,
                   preferred_element_type=jnp.float32) * scale  # (H*Bt, Sq, S)

    # key-padding bias, built once (1.0 = padded key)
    neg = mask_ref[...] * (-1e30)                       # (Bt, 1, S) f32
    neg = jnp.broadcast_to(neg[None], (H, Bt, 1, S)).reshape(H * Bt, 1, S)
    s = s + neg

    s = s - jnp.max(s, axis=-1, keepdims=True)
    p = jnp.exp(s)
    inv = pl.reciprocal(jnp.sum(p, axis=-1, keepdims=True), approx=True)
    p = p * inv

    ctx = jnp.einsum('bqk,bkd->bqd', p.astype(jnp.bfloat16), vh,
                     preferred_element_type=jnp.float32)        # (H*Bt, Sq, Dh)

    # back to token-major, lane-dense (Rq, D): one relayout, one matmul,
    # no per-head masked stores and no VMEM scratch round-trip.
    ctx = ctx.astype(jnp.bfloat16).reshape(H, Rq, Dh)
    ctx = jnp.transpose(ctx, (1, 0, 2)).reshape(Rq, D)          # (Rq, D) bf16

    attn = jnp.dot(ctx, wo_ref[...],
                   preferred_element_type=jnp.float32) + bo_ref[...]

    # --- residual + LayerNorm1 (f32) -----------------------------------------
    if Sq != S:
        x_res = x3[:, :Sq].reshape(Rq, D).astype(jnp.float32)
    else:
        x_res = xb.astype(jnp.float32)
    y = x_res + attn
    mu = jnp.mean(y, axis=-1, keepdims=True)
    var = jnp.mean((y - mu) ** 2, axis=-1, keepdims=True)
    y = (y - mu) * jax.lax.rsqrt(var + 1e-5) * ln1g_ref[...] + ln1b_ref[...]

    # --- feed-forward (bf16 MXU, f32 accumulate / elementwise) ----------------
    # TODO(synk): for very large D/F on v7x, additionally tile the hidden dim F
    # (stream w1 column tiles / w2 row tiles) so w1, w2 and the (Rq,F) hidden
    # never co-reside; int8 (v5e/v6e) or fp8 (v7x) weights are further options.
    hdn = jnp.dot(y.astype(jnp.bfloat16), w1_ref[...],
                  preferred_element_type=jnp.float32) + b1_ref[...]
    hdn = jnp.maximum(hdn, 0.0)
    ff = jnp.dot(hdn.astype(jnp.bfloat16), w2_ref[...],
                 preferred_element_type=jnp.float32) + b2_ref[...]

    # --- residual + LayerNorm2 (f32) ------------------------------------------
    z = y + ff
    mu2 = jnp.mean(z, axis=-1, keepdims=True)
    var2 = jnp.mean((z - mu2) ** 2, axis=-1, keepdims=True)
    z = (z - mu2) * jax.lax.rsqrt(var2 + 1e-5) * ln2g_ref[...] + ln2b_ref[...]

    o_ref[...] = z.astype(o_ref.dtype).reshape(Bt, Sq, D)


def _encoder_layer(x, mask3, p, num_heads, block_b, q_rows, vmem_limit):
    """x: (Bp, S, D) bf16, mask3: (Bp, 1, S) f32 (1.0 = padded key)."""
    Bp, S, D = x.shape
    F = p["w1"].shape[1]
    H = num_heads
    R = Bp * S
    Rq = Bp * q_rows

    # Weights / biases / LN params: constant block index -> single-buffered
    # (default double-buffering would only waste VMEM for resident operands).
    def resident(shape):
        n = len(shape)
        return pl.BlockSpec(shape, lambda b, _n=n: (0,) * _n,
                            pipeline_mode=pl.Buffered(1))

    # advisory cost estimate for XLA's scheduler (whole pallas_call)
    flops = (2 * R * D * 3 * D                 # fused QKV
             + 4 * Bp * q_rows * S * D         # scores + P@V
             + 2 * Rq * D * D                  # out projection
             + 4 * Rq * D * F)                 # FFN
    transcendentals = Bp * H * q_rows * S + Bp * H * q_rows + 2 * Rq
    weight_bytes = (3 * D * D + D * D + 2 * D * F) * 2 + (9 * D + F) * 4
    bytes_accessed = R * D * 2 + Rq * D * 2 + Bp * S * 4 + weight_bytes

    kern = functools.partial(_encoder_layer_kernel, num_heads, q_rows)
    aliases = {0: 0} if q_rows == S else {}          # in-place only when shapes match
    return pl.pallas_call(
        kern,
        out_shape=jax.ShapeDtypeStruct((Bp, q_rows, D), jnp.bfloat16),
        grid=(Bp // block_b,),
        in_specs=[
            pl.BlockSpec((block_b, S, D), lambda b: (b, 0, 0)),   # x block
            pl.BlockSpec((block_b, 1, S), lambda b: (b, 0, 0)),   # key-pad mask
            resident((D, 3 * D)), resident((1, 3 * D)),           # fused QKV w/b
            resident((D, D)), resident((1, D)),                   # out proj w/b
            resident((1, D)), resident((1, D)),                   # LN1 gamma/beta
            resident((D, F)), resident((1, F)),                   # FFN w1/b1
            resident((F, D)), resident((1, D)),                   # FFN w2/b2
            resident((1, D)), resident((1, D)),                   # LN2 gamma/beta
        ],
        out_specs=pl.BlockSpec((block_b, q_rows, D), lambda b: (b, 0, 0)),
        input_output_aliases=aliases,
        compiler_params=pltpu.CompilerParams(
            dimension_semantics=("parallel",),
            vmem_limit_bytes=vmem_limit),
        cost_estimate=pl.CostEstimate(
            flops=flops, transcendentals=transcendentals,
            bytes_accessed=bytes_accessed),
    )(x, mask3,
      p["wqkv"], p["bqkv"], p["wo"], p["bo"], p["ln1_g"], p["ln1_b"],
      p["w1"], p["b1"], p["w2"], p["b2"], p["ln2_g"], p["ln2_b"])


def _pick_block_b(B, S, D, F, H, vmem_budget):
    """Batch elements per grid step: ~256 rows/step (fills the 256-wide MXU M
    dim on v6e/v7x, fine on v5e), shrunk to fit VMEM, with >=2 grid steps
    whenever B allows so v7x's two TensorCores both get work."""
    bb = max(1, min(B, max(1, 256 // S)))

    def act_bytes(b):
        R = b * S
        return (4 * R * D * 2                 # x in + out blocks (bf16, 2-buffered)
                + R * 3 * D * 4               # fused qkv (f32)
                + 3 * R * D * 2               # head-major q/k/v (bf16)
                + 2 * b * H * S * S * 4       # scores + probs (f32)
                + 2 * R * D * 4               # attn ctx + residual y (f32)
                + R * F * 4 + R * F * 2       # ffn hidden (f32 + bf16)
                + R * D * 4)                  # ffn out / z (f32)

    while bb > 1 and act_bytes(bb) > vmem_budget:
        bb = (bb + 1) // 2
    while bb > 1 and -(-B // bb) < 2:         # guarantee a splittable grid
        bb = (bb + 1) // 2
    return bb


# ----------------------------------------------------------------------------
# Parameter init (deterministic, synthetic).  Matmul weights stored bf16
# (MXU input dtype); biases / LayerNorm params in f32.
# ----------------------------------------------------------------------------
def init_params(key, dim, num_layers, ffn_dim):
    key, k_cls = jax.random.split(key)
    params = {"cls": 0.02 * jax.random.normal(k_cls, (1, dim), jnp.float32),
              "layers": []}
    for _ in range(num_layers):
        key, k0, k1, k2, k3 = jax.random.split(key, 5)
        s_attn = 1.0 / math.sqrt(dim)
        s_ffn = 1.0 / math.sqrt(ffn_dim)
        layer = {
            # stored already transposed, i.e. x @ w with w : (in, out)
            "wqkv": (s_attn * jax.random.normal(k0, (dim, 3 * dim), jnp.float32)
                     ).astype(jnp.bfloat16),
            "bqkv": jnp.zeros((1, 3 * dim), jnp.float32),
            "wo": (s_attn * jax.random.normal(k1, (dim, dim), jnp.float32)
                   ).astype(jnp.bfloat16),
            "bo": jnp.zeros((1, dim), jnp.float32),
            "ln1_g": jnp.ones((1, dim), jnp.float32),
            "ln1_b": jnp.zeros((1, dim), jnp.float32),
            "w1": (s_attn * jax.random.normal(k2, (dim, ffn_dim), jnp.float32)
                   ).astype(jnp.bfloat16),
            "b1": jnp.zeros((1, ffn_dim), jnp.float32),
            "w2": (s_ffn * jax.random.normal(k3, (ffn_dim, dim), jnp.float32)
                   ).astype(jnp.bfloat16),
            "b2": jnp.zeros((1, dim), jnp.float32),
            "ln2_g": jnp.ones((1, dim), jnp.float32),
            "ln2_b": jnp.zeros((1, dim), jnp.float32),
        }
        params["layers"].append(layer)
    return params


# ----------------------------------------------------------------------------
# Forward = WrappedTransformerEncoderVideo.forward
# ----------------------------------------------------------------------------
@functools.partial(jax.jit, static_argnames=("num_heads", "lens", "get_cls"))
def wrapped_transformer_encoder_video(inputs, params, num_heads,
                                      lens=None, get_cls=False):
    B, S0, D = inputs.shape
    assert D % num_heads == 0
    # build key padding mask exactly like the module (True/1.0 = padded)
    if lens is not None:
        max_len = max(lens)
        rows = [[0.0] * l + [1.0] * (max_len - l) for l in lens]
        m = jnp.asarray(rows, jnp.float32)[:, :S0]
        if m.shape[1] < S0:
            # TODO(synk): PyTorch would reject a mask narrower than seq_length;
            # pad the missing tail as "valid" to stay runnable.
            m = jnp.pad(m, ((0, 0), (0, S0 - m.shape[1])))
    else:
        m = jnp.zeros((B, S0), jnp.float32)

    # activations carried in bf16 between layers (matmul inputs are bf16 anyway)
    x = inputs.astype(jnp.bfloat16)
    if get_cls:
        cls = jnp.broadcast_to(params["cls"].astype(jnp.bfloat16)[None], (B, 1, D))
        x = jnp.concatenate([cls, x], axis=1)
        m = jnp.concatenate([jnp.zeros((B, 1), jnp.float32), m], axis=1)

    S = x.shape[1]
    F = params["layers"][0]["w1"].shape[1]

    # per-generation VMEM policy: ~75% of capacity (96 MiB v5e/v6e, 48 MiB v7x)
    vmem_cap = _vmem_capacity_bytes()
    vmem_limit = max(32 * 2 ** 20, min(int(vmem_cap * 3 // 4), 100 * 2 ** 20))
    weight_bytes = (3 * D * D + D * D + 2 * D * F) * 2 + (9 * D + F) * 4
    budget = max(4 * 2 ** 20, vmem_limit - weight_bytes - 6 * 2 ** 20)
    block_b = _pick_block_b(B, S, D, F, num_heads, budget)

    Bp = -(-B // block_b) * block_b
    if Bp != B:
        x = jnp.pad(x, ((0, Bp - B), (0, 0), (0, 0)))
        m = jnp.pad(m, ((0, Bp - B), (0, 0)))
    mask3 = m[:, None, :]                               # (Bp, 1, S)

    # TODO(synk): at very small D/S the per-layer pallas_calls could be fused
    # into one call with a sequential layer grid axis to avoid the per-layer
    # HBM round-trip of x; kept separate here for clarity.
    n_layers = len(params["layers"])
    for li, lp in enumerate(params["layers"]):
        q_rows = 1 if (get_cls and li == n_layers - 1) else S
        x = _encoder_layer(x, mask3, lp, num_heads, block_b, q_rows, vmem_limit)

    if get_cls:
        return x[:B, 0, :].astype(jnp.float32)          # (B, D): CLS output
    return x[:B].astype(jnp.float32)                    # (B, S, D)


# TODO(synk): dropout layers inside TransformerEncoderLayer are treated as
# identity (inference semantics); stochastic training-mode dropout is not modeled.

if __name__ == "__main__":
    dim = 32
    num_layers = 2
    num_heads = 4
    ffn_dim = 2048        # PyTorch nn.TransformerEncoderLayer default dim_feedforward
    batch, seq = 2, 8

    key = jax.random.PRNGKey(0)
    k_param, k_in = jax.random.split(key)
    params = init_params(k_param, dim, num_layers, ffn_dim)
    x = jax.random.normal(k_in, (batch, seq, dim), jnp.float32)

    # full-sequence output path (get_cls=False, no lens)
    out_full = wrapped_transformer_encoder_video(
        x, params, num_heads=num_heads, lens=None, get_cls=False)
    # CLS path with variable-length mask (get_cls=True)
    out_cls = wrapped_transformer_encoder_video(
        x, params, num_heads=num_heads, lens=(8, 5), get_cls=True)

    jax.block_until_ready(out_full)
    jax.block_until_ready(out_cls)
    assert out_full.shape == (batch, seq, dim)
    assert out_cls.shape == (batch, dim)
    print("KERNEL_OK")
</pallas_src>

<mosaic_0001>
module attributes {stable_mosaic.version = 11 : i64} {
  func.func @_encoder_layer_kernel(%arg0: i32, %arg1: memref<1x8x32xbf16, #tpu.memory_space<vmem>>, %arg2: memref<1x1x8xf32, #tpu.memory_space<vmem>>, %arg3: memref<32x96xbf16, #tpu.memory_space<vmem>>, %arg4: memref<1x96xf32, #tpu.memory_space<vmem>>, %arg5: memref<32x32xbf16, #tpu.memory_space<vmem>>, %arg6: memref<1x32xf32, #tpu.memory_space<vmem>>, %arg7: memref<1x32xf32, #tpu.memory_space<vmem>>, %arg8: memref<1x32xf32, #tpu.memory_space<vmem>>, %arg9: memref<32x2048xbf16, #tpu.memory_space<vmem>>, %arg10: memref<1x2048xf32, #tpu.memory_space<vmem>>, %arg11: memref<2048x32xbf16, #tpu.memory_space<vmem>>, %arg12: memref<1x32xf32, #tpu.memory_space<vmem>>, %arg13: memref<1x32xf32, #tpu.memory_space<vmem>>, %arg14: memref<1x32xf32, #tpu.memory_space<vmem>>, %arg15: memref<1x8x32xbf16, #tpu.memory_space<vmem>>) attributes {dimension_semantics = [#tpu.dimension_semantics<parallel>], iteration_bounds = array<i64: 2>, scalar_prefetch = 0 : i64, scratch_operands = 0 : i64, tpu.core_type = #tpu.core_type<tc>, window_params = [{transform_indices = @transform_0, window_bounds = array<i64: 1, 8, 32>}, {transform_indices = @transform_1, window_bounds = array<i64: 1, 1, 8>}, {pipeline_mode = #tpu.pipeline_mode<synchronous>, transform_indices = @transform_2, window_bounds = array<i64: 32, 96>}, {pipeline_mode = #tpu.pipeline_mode<synchronous>, transform_indices = @transform_3, window_bounds = array<i64: 1, 96>}, {pipeline_mode = #tpu.pipeline_mode<synchronous>, transform_indices = @transform_4, window_bounds = array<i64: 32, 32>}, {pipeline_mode = #tpu.pipeline_mode<synchronous>, transform_indices = @transform_5, window_bounds = array<i64: 1, 32>}, {pipeline_mode = #tpu.pipeline_mode<synchronous>, transform_indices = @transform_6, window_bounds = array<i64: 1, 32>}, {pipeline_mode = #tpu.pipeline_mode<synchronous>, transform_indices = @transform_7, window_bounds = array<i64: 1, 32>}, {pipeline_mode = #tpu.pipeline_mode<synchronous>, transform_indices = @transform_8, window_bounds = array<i64: 32, 2048>}, {pipeline_mode = #tpu.pipeline_mode<synchronous>, transform_indices = @transform_9, window_bounds = array<i64: 1, 2048>}, {pipeline_mode = #tpu.pipeline_mode<synchronous>, transform_indices = @transform_10, window_bounds = array<i64: 2048, 32>}, {pipeline_mode = #tpu.pipeline_mode<synchronous>, transform_indices = @transform_11, window_bounds = array<i64: 1, 32>}, {pipeline_mode = #tpu.pipeline_mode<synchronous>, transform_indices = @transform_12, window_bounds = array<i64: 1, 32>}, {pipeline_mode = #tpu.pipeline_mode<synchronous>, transform_indices = @transform_13, window_bounds = array<i64: 1, 32>}, {transform_indices = @transform_14, window_bounds = array<i64: 1, 8, 32>}]} {
    %c0 = arith.constant 0 : index
    %c0_0 = arith.constant 0 : index
    %c0_1 = arith.constant 0 : index
    %0 = vector.load %arg1[%c0, %c0_0, %c0_1] : memref<1x8x32xbf16, #tpu.memory_space<vmem>>, vector<1x8x32xbf16>
    %1 = vector.shape_cast %0 : vector<1x8x32xbf16> to vector<8x32xbf16>
    %c0_2 = arith.constant 0 : index
    %c0_3 = arith.constant 0 : index
    %2 = vector.load %arg3[%c0_2, %c0_3] : memref<32x96xbf16, #tpu.memory_space<vmem>>, vector<32x96xbf16>
    %cst = arith.constant dense<0.000000e+00> : vector<8x96xf32>
    %3 = tpu.matmul %1, %2, %cst {dimension_numbers = #tpu.dot_dimension_numbers<[1], [0], [0], [1], [0, 0, 1, 1], [], []>} : vector<8x32xbf16>, vector<32x96xbf16>, vector<8x96xf32> -> vector<8x96xf32>
    %c0_4 = arith.constant 0 : index
    %c0_5 = arith.constant 0 : index
    %4 = vector.load %arg4[%c0_4, %c0_5] : memref<1x96xf32, #tpu.memory_space<vmem>>, vector<1x96xf32>
    %5 = vector.broadcast %4 : vector<1x96xf32> to vector<8x96xf32>
    %6 = arith.addf %3, %5 : vector<8x96xf32>
    %7 = vector.extract_strided_slice %6 {offsets = [0, 0], sizes = [8, 32], strides = [1, 1]} : vector<8x96xf32> to vector<8x32xf32>
    %8 = arith.truncf %7 : vector<8x32xf32> to vector<8x32xbf16>
    %9 = vector.shape_cast %8 : vector<8x32xbf16> to vector<1x8x4x8xbf16>
    %10 = vector.shape_cast %9 : vector<1x8x4x8xbf16> to vector<8x4x8xbf16>
    %11 = tpu.transpose %10, [1, 0, 2] : vector<8x4x8xbf16> -> vector<4x8x8xbf16>
    %12 = vector.extract_strided_slice %6 {offsets = [0, 32], sizes = [8, 32], strides = [1, 1]} : vector<8x96xf32> to vector<8x32xf32>
    %13 = arith.truncf %12 : vector<8x32xf32> to vector<8x32xbf16>
    %14 = vector.shape_cast %13 : vector<8x32xbf16> to vector<1x8x4x8xbf16>
    %15 = vector.shape_cast %14 : vector<1x8x4x8xbf16> to vector<8x4x8xbf16>
    %16 = tpu.transpose %15, [1, 0, 2] : vector<8x4x8xbf16> -> vector<4x8x8xbf16>
    %17 = vector.extract_strided_slice %6 {offsets = [0, 64], sizes = [8, 32], strides = [1, 1]} : vector<8x96xf32> to vector<8x32xf32>
    %18 = arith.truncf %17 : vector<8x32xf32> to vector<8x32xbf16>
    %19 = vector.shape_cast %18 : vector<8x32xbf16> to vector<1x8x4x8xbf16>
    %20 = vector.shape_cast %19 : vector<1x8x4x8xbf16> to vector<8x4x8xbf16>
    %21 = tpu.transpose %20, [1, 0, 2] : vector<8x4x8xbf16> -> vector<4x8x8xbf16>
    "tpu.trace_start"() <{level = 10 : i32, message = "bqd,bkd->bqk"}> : () -> ()
    %cst_6 = arith.constant dense<0.000000e+00> : vector<4x8x8xf32>
    %22 = tpu.matmul %11, %16, %cst_6 {dimension_numbers = #tpu.dot_dimension_numbers<[2], [2], [1], [1], [0, 0, 0, 1, 1, 1], [0], [0]>} : vector<4x8x8xbf16>, vector<4x8x8xbf16>, vector<4x8x8xf32> -> vector<4x8x8xf32>
    "tpu.trace_stop"() : () -> ()
    %cst_7 = arith.constant 0.353553385 : f32
    %23 = vector.broadcast %cst_7 : f32 to vector<4x8x8xf32>
    %24 = arith.mulf %22, %23 : vector<4x8x8xf32>
    %c0_8 = arith.constant 0 : index
    %c0_9 = arith.constant 0 : index
    %c0_10 = arith.constant 0 : index
    %25 = vector.load %arg2[%c0_8, %c0_9, %c0_10] : memref<1x1x8xf32, #tpu.memory_space<vmem>>, vector<1x1x8xf32>
    %cst_11 = arith.constant -1.000000e+30 : f32
    %26 = vector.broadcast %cst_11 : f32 to vector<1x1x8xf32>
    %27 = arith.mulf %25, %26 : vector<1x1x8xf32>
    %28 = vector.shape_cast %27 : vector<1x1x8xf32> to vector<1x1x1x8xf32>
    %29 = vector.shape_cast %28 : vector<1x1x1x8xf32> to vector<1x1x1x8xf32>
    %30 = vector.broadcast %29 : vector<1x1x1x8xf32> to vector<4x1x1x8xf32>
    %31 = vector.shape_cast %30 : vector<4x1x1x8xf32> to vector<4x1x8xf32>
    %32 = vector.broadcast %31 : vector<4x1x8xf32> to vector<4x8x8xf32>
    %33 = arith.addf %24, %32 : vector<4x8x8xf32>
    %cst_12 = arith.constant dense<0xFF800000> : vector<4x8xf32>
    %34 = vector.multi_reduction <maximumf>, %33, %cst_12 [2] : vector<4x8x8xf32> to vector<4x8xf32>
    %35 = vector.shape_cast %34 : vector<4x8xf32> to vector<4x8x1xf32>
    %36 = vector.broadcast %35 : vector<4x8x1xf32> to vector<4x8x8xf32>
    %37 = arith.subf %33, %36 : vector<4x8x8xf32>
    %38 = math.exp %37 : vector<4x8x8xf32>
    %cst_13 = arith.constant dense<0.000000e+00> : vector<4x8xf32>
    %39 = vector.multi_reduction <add>, %38, %cst_13 [2] : vector<4x8x8xf32> to vector<4x8xf32>
    %40 = vector.shape_cast %39 : vector<4x8xf32> to vector<4x8x1xf32>
    %41 = tpu.reciprocal %40 {approx = true} : vector<4x8x1xf32> -> vector<4x8x1xf32>
    %42 = vector.broadcast %41 : vector<4x8x1xf32> to vector<4x8x8xf32>
    %43 = arith.mulf %38, %42 : vector<4x8x8xf32>
    %44 = arith.truncf %43 : vector<4x8x8xf32> to vector<4x8x8xbf16>
    "tpu.trace_start"() <{level = 10 : i32, message = "bqk,bkd->bqd"}> : () -> ()
    %cst_14 = arith.constant dense<0.000000e+00> : vector<4x8x8xf32>
    %45 = tpu.matmul %44, %21, %cst_14 {dimension_numbers = #tpu.dot_dimension_numbers<[2], [1], [1], [2], [0, 0, 0, 1, 1, 2], [0], [0]>} : vector<4x8x8xbf16>, vector<4x8x8xbf16>, vector<4x8x8xf32> -> vector<4x8x8xf32>
    "tpu.trace_stop"() : () -> ()
    %46 = arith.truncf %45 : vector<4x8x8xf32> to vector<4x8x8xbf16>
    %47 = tpu.transpose %46, [1, 0, 2] : vector<4x8x8xbf16> -> vector<8x4x8xbf16>
    %48 = vector.shape_cast %47 : vector<8x4x8xbf16> to vector<8x32xbf16>
    %c0_15 = arith.constant 0 : index
    %c0_16 = arith.constant 0 : index
    %49 = vector.load %arg5[%c0_15, %c0_16] : memref<32x32xbf16, #tpu.memory_space<vmem>>, vector<32x32xbf16>
    %cst_17 = arith.constant dense<0.000000e+00> : vector<8x32xf32>
    %50 = tpu.matmul %48, %49, %cst_17 {dimension_numbers = #tpu.dot_dimension_numbers<[1], [0], [0], [1], [0, 0, 1, 1], [], []>} : vector<8x32xbf16>, vector<32x32xbf16>, vector<8x32xf32> -> vector<8x32xf32>
    %c0_18 = arith.constant 0 : index
    %c0_19 = arith.constant 0 : index
    %51 = vector.load %arg6[%c0_18, %c0_19] : memref<1x32xf32, #tpu.memory_space<vmem>>, vector<1x32xf32>
    %52 = vector.broadcast %51 : vector<1x32xf32> to vector<8x32xf32>
    %53 = arith.addf %50, %52 : vector<8x32xf32>
    %54 = arith.extf %1 : vector<8x32xbf16> to vector<8x32xf32>
    %55 = arith.addf %54, %53 : vector<8x32xf32>
    %cst_20 = arith.constant dense<0.000000e+00> : vector<8xf32>
    %56 = vector.multi_reduction <add>, %55, %cst_20 [1] : vector<8x32xf32> to vector<8xf32>
    %57 = vector.shape_cast %56 : vector<8xf32> to vector<8x1xf32>
    %cst_21 = arith.constant 3.200000e+01 : f32
    %58 = vector.broadcast %cst_21 : f32 to vector<8x1xf32>
    %59 = arith.divf %57, %58 : vector<8x1xf32>
    %60 = vector.broadcast %59 : vector<8x1xf32> to vector<8x32xf32>
    %61 = arith.subf %55, %60 : vector<8x32xf32>
    %62 = arith.mulf %61, %61 : vector<8x32xf32>
    %cst_22 = arith.constant dense<0.000000e+00> : vector<8xf32>
    %63 = vector.multi_reduction <add>, %62, %cst_22 [1] : vector<8x32xf32> to vector<8xf32>
    %64 = vector.shape_cast %63 : vector<8xf32> to vector<8x1xf32>
    %cst_23 = arith.constant 3.200000e+01 : f32
    %65 = vector.broadcast %cst_23 : f32 to vector<8x1xf32>
    %66 = arith.divf %64, %65 : vector<8x1xf32>
    %67 = vector.broadcast %59 : vector<8x1xf32> to vector<8x32xf32>
    %68 = arith.subf %55, %67 : vector<8x32xf32>
    %cst_24 = arith.constant 9.99999974E-6 : f32
    %69 = vector.broadcast %cst_24 : f32 to vector<8x1xf32>
    %70 = arith.addf %66, %69 : vector<8x1xf32>
    %71 = math.rsqrt %70 : vector<8x1xf32>
    %72 = vector.broadcast %71 : vector<8x1xf32> to vector<8x32xf32>
    %73 = arith.mulf %68, %72 : vector<8x32xf32>
    %c0_25 = arith.constant 0 : index
    %c0_26 = arith.constant 0 : index
    %74 = vector.load %arg7[%c0_25, %c0_26] : memref<1x32xf32, #tpu.memory_space<vmem>>, vector<1x32xf32>
    %75 = vector.broadcast %74 : vector<1x32xf32> to vector<8x32xf32>
    %76 = arith.mulf %73, %75 : vector<8x32xf32>
    %c0_27 = arith.constant 0 : index
    %c0_28 = arith.constant 0 : index
    %77 = vector.load %arg8[%c0_27, %c0_28] : memref<1x32xf32, #tpu.memory_space<vmem>>, vector<1x32xf32>
    %78 = vector.broadcast %77 : vector<1x32xf32> to vector<8x32xf32>
    %79 = arith.addf %76, %78 : vector<8x32xf32>
    %80 = arith.truncf %79 : vector<8x32xf32> to vector<8x32xbf16>
    %c0_29 = arith.constant 0 : index
    %c0_30 = arith.constant 0 : index
    %81 = vector.load %arg9[%c0_29, %c0_30] : memref<32x2048xbf16, #tpu.memory_space<vmem>>, vector<32x2048xbf16>
    %cst_31 = arith.constant dense<0.000000e+00> : vector<8x2048xf32>
    %82 = tpu.matmul %80, %81, %cst_31 {dimension_numbers = #tpu.dot_dimension_numbers<[1], [0], [0], [1], [0, 0, 1, 1], [], []>} : vector<8x32xbf16>, vector<32x2048xbf16>, vector<8x2048xf32> -> vector<8x2048xf32>
    %c0_32 = arith.constant 0 : index
    %c0_33 = arith.constant 0 : index
    %83 = vector.load %arg10[%c0_32, %c0_33] : memref<1x2048xf32, #tpu.memory_space<vmem>>, vector<1x2048xf32>
    %84 = vector.broadcast %83 : vector<1x2048xf32> to vector<8x2048xf32>
    %85 = arith.addf %82, %84 : vector<8x2048xf32>
    %cst_34 = arith.constant 0.000000e+00 : f32
    %86 = vector.broadcast %cst_34 : f32 to vector<8x2048xf32>
    %87 = arith.maximumf %85, %86 : vector<8x2048xf32>
    %88 = arith.truncf %87 : vector<8x2048xf32> to vector<8x2048xbf16>
    %c0_35 = arith.constant 0 : index
    %c0_36 = arith.constant 0 : index
    %89 = vector.load %arg11[%c0_35, %c0_36] : memref<2048x32xbf16, #tpu.memory_space<vmem>>, vector<2048x32xbf16>
    %cst_37 = arith.constant dense<0.000000e+00> : vector<8x32xf32>
    %90 = tpu.matmul %88, %89, %cst_37 {dimension_numbers = #tpu.dot_dimension_numbers<[1], [0], [0], [1], [0, 0, 1, 1], [], []>} : vector<8x2048xbf16>, vector<2048x32xbf16>, vector<8x32xf32> -> vector<8x32xf32>
    %c0_38 = arith.constant 0 : index
    %c0_39 = arith.constant 0 : index
    %91 = vector.load %arg12[%c0_38, %c0_39] : memref<1x32xf32, #tpu.memory_space<vmem>>, vector<1x32xf32>
    %92 = vector.broadcast %91 : vector<1x32xf32> to vector<8x32xf32>
    %93 = arith.addf %90, %92 : vector<8x32xf32>
    %94 = arith.addf %79, %93 : vector<8x32xf32>
    %cst_40 = arith.constant dense<0.000000e+00> : vector<8xf32>
    %95 = vector.multi_reduction <add>, %94, %cst_40 [1] : vector<8x32xf32> to vector<8xf32>
    %96 = vector.shape_cast %95 : vector<8xf32> to vector<8x1xf32>
    %cst_41 = arith.constant 3.200000e+01 : f32
    %97 = vector.broadcast %cst_41 : f32 to vector<8x1xf32>
    %98 = arith.divf %96, %97 : vector<8x1xf32>
    %99 = vector.broadcast %98 : vector<8x1xf32> to vector<8x32xf32>
    %100 = arith.subf %94, %99 : vector<8x32xf32>
    %101 = arith.mulf %100, %100 : vector<8x32xf32>
    %cst_42 = arith.constant dense<0.000000e+00> : vector<8xf32>
    %102 = vector.multi_reduction <add>, %101, %cst_42 [1] : vector<8x32xf32> to vector<8xf32>
    %103 = vector.shape_cast %102 : vector<8xf32> to vector<8x1xf32>
    %cst_43 = arith.constant 3.200000e+01 : f32
    %104 = vector.broadcast %cst_43 : f32 to vector<8x1xf32>
    %105 = arith.divf %103, %104 : vector<8x1xf32>
    %106 = vector.broadcast %98 : vector<8x1xf32> to vector<8x32xf32>
    %107 = arith.subf %94, %106 : vector<8x32xf32>
    %cst_44 = arith.constant 9.99999974E-6 : f32
    %108 = vector.broadcast %cst_44 : f32 to vector<8x1xf32>
    %109 = arith.addf %105, %108 : vector<8x1xf32>
    %110 = math.rsqrt %109 : vector<8x1xf32>
    %111 = vector.broadcast %110 : vector<8x1xf32> to vector<8x32xf32>
    %112 = arith.mulf %107, %111 : vector<8x32xf32>
    %c0_45 = arith.constant 0 : index
    %c0_46 = arith.constant 0 : index
    %113 = vector.load %arg13[%c0_45, %c0_46] : memref<1x32xf32, #tpu.memory_space<vmem>>, vector<1x32xf32>
    %114 = vector.broadcast %113 : vector<1x32xf32> to vector<8x32xf32>
    %115 = arith.mulf %112, %114 : vector<8x32xf32>
    %c0_47 = arith.constant 0 : index
    %c0_48 = arith.constant 0 : index
    %116 = vector.load %arg14[%c0_47, %c0_48] : memref<1x32xf32, #tpu.memory_space<vmem>>, vector<1x32xf32>
    %117 = vector.broadcast %116 : vector<1x32xf32> to vector<8x32xf32>
    %118 = arith.addf %115, %117 : vector<8x32xf32>
    %119 = arith.truncf %118 : vector<8x32xf32> to vector<8x32xbf16>
    %120 = vector.shape_cast %119 : vector<8x32xbf16> to vector<1x8x32xbf16>
    %c0_49 = arith.constant 0 : index
    %c0_50 = arith.constant 0 : index
    %c0_51 = arith.constant 0 : index
    %121 = vector.load %arg15[%c0_49, %c0_50, %c0_51] : memref<1x8x32xbf16, #tpu.memory_space<vmem>>, vector<1x8x32xbf16>
    tpu.vector_store %arg15[%c0_49, %c0_50, %c0_51], %120 {strides = array<i32>} : memref<1x8x32xbf16, #tpu.memory_space<vmem>>, vector<1x8x32xbf16>,
    return
  }
  func.func @transform_0(%arg0: i32) -> (i32, i32, i32) {
    %c0_i32 = arith.constant 0 : i32
    %c0_i32_0 = arith.constant 0 : i32
    %c0_i32_1 = arith.constant 0 : i32
    return %arg0, %c0_i32, %c0_i32_0 : i32, i32, i32
  }
  func.func @transform_1(%arg0: i32) -> (i32, i32, i32) {
    %c0_i32 = arith.constant 0 : i32
    %c0_i32_0 = arith.constant 0 : i32
    %c0_i32_1 = arith.constant 0 : i32
    return %arg0, %c0_i32, %c0_i32_0 : i32, i32, i32
  }
  func.func @transform_2(%arg0: i32) -> (i32, i32) {
    %c0_i32 = arith.constant 0 : i32
    %c0_i32_0 = arith.constant 0 : i32
    %c0_i32_1 = arith.constant 0 : i32
    return %c0_i32, %c0_i32_0 : i32, i32
  }
  func.func @transform_3(%arg0: i32) -> (i32, i32) {
    %c0_i32 = arith.constant 0 : i32
    %c0_i32_0 = arith.constant 0 : i32
    %c0_i32_1 = arith.constant 0 : i32
    return %c0_i32, %c0_i32_0 : i32, i32
  }
  func.func @transform_4(%arg0: i32) -> (i32, i32) {
    %c0_i32 = arith.constant 0 : i32
    %c0_i32_0 = arith.constant 0 : i32
    %c0_i32_1 = arith.constant 0 : i32
    return %c0_i32, %c0_i32_0 : i32, i32
  }
  func.func @transform_5(%arg0: i32) -> (i32, i32) {
    %c0_i32 = arith.constant 0 : i32
    %c0_i32_0 = arith.constant 0 : i32
    %c0_i32_1 = arith.constant 0 : i32
    return %c0_i32, %c0_i32_0 : i32, i32
  }
  func.func @transform_6(%arg0: i32) -> (i32, i32) {
    %c0_i32 = arith.constant 0 : i32
    %c0_i32_0 = arith.constant 0 : i32
    %c0_i32_1 = arith.constant 0 : i32
    return %c0_i32, %c0_i32_0 : i32, i32
  }
  func.func @transform_7(%arg0: i32) -> (i32, i32) {
    %c0_i32 = arith.constant 0 : i32
    %c0_i32_0 = arith.constant 0 : i32
    %c0_i32_1 = arith.constant 0 : i32
    return %c0_i32, %c0_i32_0 : i32, i32
  }
  func.func @transform_8(%arg0: i32) -> (i32, i32) {
    %c0_i32 = arith.constant 0 : i32
    %c0_i32_0 = arith.constant 0 : i32
    %c0_i32_1 = arith.constant 0 : i32
    return %c0_i32, %c0_i32_0 : i32, i32
  }
  func.func @transform_9(%arg0: i32) -> (i32, i32) {
    %c0_i32 = arith.constant 0 : i32
    %c0_i32_0 = arith.constant 0 : i32
    %c0_i32_1 = arith.constant 0 : i32
    return %c0_i32, %c0_i32_0 : i32, i32
  }
  func.func @transform_10(%arg0: i32) -> (i32, i32) {
    %c0_i32 = arith.constant 0 : i32
    %c0_i32_0 = arith.constant 0 : i32
    %c0_i32_1 = arith.constant 0 : i32
    return %c0_i32, %c0_i32_0 : i32, i32
  }
  func.func @transform_11(%arg0: i32) -> (i32, i32) {
    %c0_i32 = arith.constant 0 : i32
    %c0_i32_0 = arith.constant 0 : i32
    %c0_i32_1 = arith.constant 0 : i32
    return %c0_i32, %c0_i32_0 : i32, i32
  }
  func.func @transform_12(%arg0: i32) -> (i32, i32) {
    %c0_i32 = arith.constant 0 : i32
    %c0_i32_0 = arith.constant 0 : i32
    %c0_i32_1 = arith.constant 0 : i32
    return %c0_i32, %c0_i32_0 : i32, i32
  }
  func.func @transform_13(%arg0: i32) -> (i32, i32) {
    %c0_i32 = arith.constant 0 : i32
    %c0_i32_0 = arith.constant 0 : i32
    %c0_i32_1 = arith.constant 0 : i32
    return %c0_i32, %c0_i32_0 : i32, i32
  }
  func.func @transform_14(%arg0: i32) -> (i32, i32, i32) {
    %c0_i32 = arith.constant 0 : i32
    %c0_i32_0 = arith.constant 0 : i32
    %c0_i32_1 = arith.constant 0 : i32
    return %arg0, %c0_i32, %c0_i32_0 : i32, i32, i32
  }
}

</mosaic_0001>

<llo_original>
// kernel: wrapped_transformer_encoder_video.2
$region0: #{wrapped_transformer_encoder_video.2}
  #allocation0 [shape = 'u32[]', space=smem, size = 0x4, offset = 0x4, fixed_abs, tag = 'smem constant byte address 0x4 - core index']
  #allocation1 [shape = 'u32[144,128]{1,0:T(1,128)}', space=vmem, size = 0x12000, scoped, tag = 'internal scratch']
  %s0 = inlined_call_operand.vmem [shape: bf16[2,8,32], index: 0, kind: input, shape index: {}, may-alias: {0,14}]
  %s1 = inlined_call_operand.vmem [shape: f32[2,1,8], index: 1, kind: input, shape index: {}]
  %s2 = inlined_call_operand.vmem [shape: bf16[32,96], index: 2, kind: input, shape index: {}]
  %s3 = inlined_call_operand.vmem [shape: f32[1,96], index: 3, kind: input, shape index: {}]
  %s4 = inlined_call_operand.vmem [shape: bf16[32,32], index: 4, kind: input, shape index: {}]
  %s5 = inlined_call_operand.vmem [shape: f32[1,32], index: 5, kind: input, shape index: {}]
  %s6 = inlined_call_operand.vmem [shape: f32[1,32], index: 6, kind: input, shape index: {}]
  %s7 = inlined_call_operand.vmem [shape: f32[1,32], index: 7, kind: input, shape index: {}]
  %s8 = inlined_call_operand.vmem [shape: bf16[32,2048], index: 8, kind: input, shape index: {}]
  %s9 = inlined_call_operand.vmem [shape: f32[1,2048], index: 9, kind: input, shape index: {}]
  %s10 = inlined_call_operand.vmem [shape: bf16[2048,32], index: 10, kind: input, shape index: {}]
  %s11 = inlined_call_operand.vmem [shape: f32[1,32], index: 11, kind: input, shape index: {}]
  %s12 = inlined_call_operand.vmem [shape: f32[1,32], index: 12, kind: input, shape index: {}]
  %s13 = inlined_call_operand.vmem [shape: f32[1,32], index: 13, kind: input, shape index: {}]
  %s14 = inlined_call_operand.vmem [shape: bf16[2,8,32], index: 14, kind: output, shape index: {}, may-alias: {0,14}]
  %s15 = sld [smem:[#allocation0]]
  $region89: #{wrapped_transformer_encoder_video.2} parent=0
    _
  %s17 = ssub.s32 1, %s15
  %s18 = scalar_select 0, %s17, %s15
  loop: start=0, step=1, limit=4
  $region2: #{wrapped_transformer_encoder_video.2} parent=0 // loop_pre_header
    _
  $region3: #{wrapped_transformer_encoder_video.2} parent=0 // loop_header
    %s20 = sphi 0, %s24
    %p21 = scmp.ge.s32.totalorder %s20, 4
    %s30 = sphi 0, %s32
    %s33 = sphi 0, %s30
    %s34 = sphi 0, %s33
    %s50 = sphi 0, %s34
    %s56 = sphi 0, %s58
    %s59 = sphi 0, %s56
    %s60 = sphi 0, %s59
    %s76 = sphi 0, %s60
    %s80 = sphi 0, %s80
    %s82 = sphi 0, %s80
    %s83 = sphi 0, %s82
    %s97 = sphi 0, %s83
    %s101 = sphi 0, %s101
    %s103 = sphi 0, %s101
    %s104 = sphi 0, %s103
    %s118 = sphi 0, %s104
    %s122 = sphi 0, %s122
    %s124 = sphi 0, %s122
    %s125 = sphi 0, %s124
    %s139 = sphi 0, %s125
    %s143 = sphi 0, %s143
    %s145 = sphi 0, %s143
    %s146 = sphi 0, %s145
    %s160 = sphi 0, %s146
    %s164 = sphi 0, %s164
    %s166 = sphi 0, %s164
    %s167 = sphi 0, %s166
    %s181 = sphi 0, %s167
    %s185 = sphi 0, %s185
    %s187 = sphi 0, %s185
    %s188 = sphi 0, %s187
    %s202 = sphi 0, %s188
    %s206 = sphi 0, %s206
    %s208 = sphi 0, %s206
    %s209 = sphi 0, %s208
    %s223 = sphi 0, %s209
    %s227 = sphi 0, %s227
    %s229 = sphi 0, %s227
    %s230 = sphi 0, %s229
    %s244 = sphi 0, %s230
    %s248 = sphi 0, %s248
    %s250 = sphi 0, %s248
    %s251 = sphi 0, %s250
    %s265 = sphi 0, %s251
    %s269 = sphi 0, %s269
    %s271 = sphi 0, %s269
    %s272 = sphi 0, %s271
    %s286 = sphi 0, %s272
    %s290 = sphi 0, %s290
    %s292 = sphi 0, %s290
    %s293 = sphi 0, %s292
    %s307 = sphi 0, %s293
    %s311 = sphi 0, %s311
    %s313 = sphi 0, %s311
    %s314 = sphi 0, %s313
    %s328 = sphi 0, %s314
    %s334 = sphi 0, %s336
    %s337 = sphi 0, %s334
    %s338 = sphi 0, %s337
    %s354 = sphi 0, %s338
  $region4: #{wrapped_transformer_encoder_video.2} parent=0 // loop_header_branch
    %23 = sbr.rel (%p21) target = $region8
  $region5: #{wrapped_transformer_encoder_video.2} parent=0 // loop_body
    %s25 = ssub.s32 %s20, 1
    %s26 = ssub.s32 %s20, 2
    %s27 = sadd.s32 %s20, 1
    %s28 = ssub.s32 %s20, %s27
    %p29 = scmp.eq.s32.totalorder %s28, 0
    %s31 = sadd.s32 %s30, 1
    %s32 = scalar_select %p29, %s30, %s31
    %p35 = pneg %p29
    %p36 = scmp.eq.s32.totalorder %s20, 1
    %p37 = por %p35, %p36
    %p38 = scmp.ne.s32.totalorder %s30, %s33
    %p39 = scmp.eq.s32.totalorder %s20, 0
    %p40 = por %p38, %p39
    %p41 = scmp.ne.s32.totalorder %s30, %s33
    %p42 = scmp.eq.s32.totalorder %s25, 1
    %p43 = por %p41, %p42
    %p44 = scmp.ne.s32.totalorder %s33, %s34
    %p45 = scmp.eq.s32.totalorder %s25, 0
    %p46 = por %p44, %p45
    %p47 = scmp.ne.s32.totalorder %s33, %s34
    %p48 = scmp.eq.s32.totalorder %s26, 1
    %p49 = por %p47, %p48
    %p51 = scmp.ne.s32.totalorder %s34, %s50
    %p52 = scmp.eq.s32.totalorder %s26, 0
    %p53 = por %p51, %p52
    %s54 = ssub.s32 %s20, %s27
    %p55 = scmp.eq.s32.totalorder %s54, 0
    %s57 = sadd.s32 %s56, 1
    %s58 = scalar_select %p55, %s56, %s57
    %p61 = pneg %p55
    %p62 = scmp.eq.s32.totalorder %s20, 1
    %p63 = por %p61, %p62
    %p64 = scmp.ne.s32.totalorder %s56, %s59
    %p65 = scmp.eq.s32.totalorder %s20, 0
    %p66 = por %p64, %p65
    %p67 = scmp.ne.s32.totalorder %s56, %s59
    %p68 = scmp.eq.s32.totalorder %s25, 1
    %p69 = por %p67, %p68
    %p70 = scmp.ne.s32.totalorder %s59, %s60
    %p71 = scmp.eq.s32.totalorder %s25, 0
    %p72 = por %p70, %p71
    %p73 = scmp.ne.s32.totalorder %s59, %s60
    %p74 = scmp.eq.s32.totalorder %s26, 1
    %p75 = por %p73, %p74
    %p77 = scmp.ne.s32.totalorder %s60, %s76
    %p78 = scmp.eq.s32.totalorder %s26, 0
    %p79 = por %p77, %p78
    %s81 = sadd.s32 %s80, 1
    %p84 = scmp.eq.s32.totalorder %s20, 1
    %p85 = scmp.ne.s32.totalorder %s80, %s82
    %p86 = scmp.eq.s32.totalorder %s20, 0
    %p87 = por %p85, %p86
    %p88 = scmp.ne.s32.totalorder %s80, %s82
    %p89 = scmp.eq.s32.totalorder %s25, 1
    %p90 = por %p88, %p89
    %p91 = scmp.ne.s32.totalorder %s82, %s83
    %p92 = scmp.eq.s32.totalorder %s25, 0
    %p93 = por %p91, %p92
    %p94 = scmp.ne.s32.totalorder %s82, %s83
    %p95 = scmp.eq.s32.totalorder %s26, 1
    %p96 = por %p94, %p95
    %p98 = scmp.ne.s32.totalorder %s83, %s97
    %p99 = scmp.eq.s32.totalorder %s26, 0
    %p100 = por %p98, %p99
    %s102 = sadd.s32 %s101, 1
    %p105 = scmp.eq.s32.totalorder %s20, 1
    %p106 = scmp.ne.s32.totalorder %s101, %s103
    %p107 = scmp.eq.s32.totalorder %s20, 0
    %p108 = por %p106, %p107
    %p109 = scmp.ne.s32.totalorder %s101, %s103
    %p110 = scmp.eq.s32.totalorder %s25, 1
    %p111 = por %p109, %p110
    %p112 = scmp.ne.s32.totalorder %s103, %s104
    %p113 = scmp.eq.s32.totalorder %s25, 0
    %p114 = por %p112, %p113
    %p115 = scmp.ne.s32.totalorder %s103, %s104
    %p116 = scmp.eq.s32.totalorder %s26, 1
    %p117 = por %p115, %p116
    %p119 = scmp.ne.s32.totalorder %s104, %s118
    %p120 = scmp.eq.s32.totalorder %s26, 0
    %p121 = por %p119, %p120
    %s123 = sadd.s32 %s122, 1
    %p126 = scmp.eq.s32.totalorder %s20, 1
    %p127 = scmp.ne.s32.totalorder %s122, %s124
    %p128 = scmp.eq.s32.totalorder %s20, 0
    %p129 = por %p127, %p128
    %p130 = scmp.ne.s32.totalorder %s122, %s124
    %p131 = scmp.eq.s32.totalorder %s25, 1
    %p132 = por %p130, %p131
    %p133 = scmp.ne.s32.totalorder %s124, %s125
    %p134 = scmp.eq.s32.totalorder %s25, 0
    %p135 = por %p133, %p134
    %p136 = scmp.ne.s32.totalorder %s124, %s125
    %p137 = scmp.eq.s32.totalorder %s26, 1
    %p138 = por %p136, %p137
    %p140 = scmp.ne.s32.totalorder %s125, %s139
    %p141 = scmp.eq.s32.totalorder %s26, 0
    %p142 = por %p140, %p141
    %s144 = sadd.s32 %s143, 1
    %p147 = scmp.eq.s32.totalorder %s20, 1
    %p148 = scmp.ne.s32.totalorder %s143, %s145
    %p149 = scmp.eq.s32.totalorder %s20, 0
    %p150 = por %p148, %p149
    %p151 = scmp.ne.s32.totalorder %s143, %s145
    %p152 = scmp.eq.s32.totalorder %s25, 1
    %p153 = por %p151, %p152
    %p154 = scmp.ne.s32.totalorder %s145, %s146
    %p155 = scmp.eq.s32.totalorder %s25, 0
    %p156 = por %p154, %p155
    %p157 = scmp.ne.s32.totalorder %s145, %s146
    %p158 = scmp.eq.s32.totalorder %s26, 1
    %p159 = por %p157, %p158
    %p161 = scmp.ne.s32.totalorder %s146, %s160
    %p162 = scmp.eq.s32.totalorder %s26, 0
    %p163 = por %p161, %p162
    %s165 = sadd.s32 %s164, 1
    %p168 = scmp.eq.s32.totalorder %s20, 1
    %p169 = scmp.ne.s32.totalorder %s164, %s166
    %p170 = scmp.eq.s32.totalorder %s20, 0
    %p171 = por %p169, %p170
    %p172 = scmp.ne.s32.totalorder %s164, %s166
    %p173 = scmp.eq.s32.totalorder %s25, 1
    %p174 = por %p172, %p173
    %p175 = scmp.ne.s32.totalorder %s166, %s167
    %p176 = scmp.eq.s32.totalorder %s25, 0
    %p177 = por %p175, %p176
    %p178 = scmp.ne.s32.totalorder %s166, %s167
    %p179 = scmp.eq.s32.totalorder %s26, 1
    %p180 = por %p178, %p179
    %p182 = scmp.ne.s32.totalorder %s167, %s181
    %p183 = scmp.eq.s32.totalorder %s26, 0
    %p184 = por %p182, %p183
    %s186 = sadd.s32 %s185, 1
    %p189 = scmp.eq.s32.totalorder %s20, 1
    %p190 = scmp.ne.s32.totalorder %s185, %s187
    %p191 = scmp.eq.s32.totalorder %s20, 0
    %p192 = por %p190, %p191
    %p193 = scmp.ne.s32.totalorder %s185, %s187
    %p194 = scmp.eq.s32.totalorder %s25, 1
    %p195 = por %p193, %p194
    %p196 = scmp.ne.s32.totalorder %s187, %s188
    %p197 = scmp.eq.s32.totalorder %s25, 0
    %p198 = por %p196, %p197
    %p199 = scmp.ne.s32.totalorder %s187, %s188
    %p200 = scmp.eq.s32.totalorder %s26, 1
    %p201 = por %p199, %p200
    %p203 = scmp.ne.s32.totalorder %s188, %s202
    %p204 = scmp.eq.s32.totalorder %s26, 0
    %p205 = por %p203, %p204
    %s207 = sadd.s32 %s206, 1
    %p210 = scmp.eq.s32.totalorder %s20, 1
    %p211 = scmp.ne.s32.totalorder %s206, %s208
    %p212 = scmp.eq.s32.totalorder %s20, 0
    %p213 = por %p211, %p212
    %p214 = scmp.ne.s32.totalorder %s206, %s208
    %p215 = scmp.eq.s32.totalorder %s25, 1
    %p216 = por %p214, %p215
    %p217 = scmp.ne.s32.totalorder %s208, %s209
    %p218 = scmp.eq.s32.totalorder %s25, 0
    %p219 = por %p217, %p218
    %p220 = scmp.ne.s32.totalorder %s208, %s209
    %p221 = scmp.eq.s32.totalorder %s26, 1
    %p222 = por %p220, %p221
    %p224 = scmp.ne.s32.totalorder %s209, %s223
    %p225 = scmp.eq.s32.totalorder %s26, 0
    %p226 = por %p224, %p225
    %s228 = sadd.s32 %s227, 1
    %p231 = scmp.eq.s32.totalorder %s20, 1
    %p232 = scmp.ne.s32.totalorder %s227, %s229
    %p233 = scmp.eq.s32.totalorder %s20, 0
    %p234 = por %p232, %p233
    %p235 = scmp.ne.s32.totalorder %s227, %s229
    %p236 = scmp.eq.s32.totalorder %s25, 1
    %p237 = por %p235, %p236
    %p238 = scmp.ne.s32.totalorder %s229, %s230
    %p239 = scmp.eq.s32.totalorder %s25, 0
    %p240 = por %p238, %p239
    %p241 = scmp.ne.s32.totalorder %s229, %s230
    %p242 = scmp.eq.s32.totalorder %s26, 1
    %p243 = por %p241, %p242
    %p245 = scmp.ne.s32.totalorder %s230, %s244
    %p246 = scmp.eq.s32.totalorder %s26, 0
    %p247 = por %p245, %p246
    %s249 = sadd.s32 %s248, 1
    %p252 = scmp.eq.s32.totalorder %s20, 1
    %p253 = scmp.ne.s32.totalorder %s248, %s250
    %p254 = scmp.eq.s32.totalorder %s20, 0
    %p255 = por %p253, %p254
    %p256 = scmp.ne.s32.totalorder %s248, %s250
    %p257 = scmp.eq.s32.totalorder %s25, 1
    %p258 = por %p256, %p257
    %p259 = scmp.ne.s32.totalorder %s250, %s251
    %p260 = scmp.eq.s32.totalorder %s25, 0
    %p261 = por %p259, %p260
    %p262 = scmp.ne.s32.totalorder %s250, %s251
    %p263 = scmp.eq.s32.totalorder %s26, 1
    %p264 = por %p262, %p263
    %p266 = scmp.ne.s32.totalorder %s251, %s265
    %p267 = scmp.eq.s32.totalorder %s26, 0
    %p268 = por %p266, %p267
    %s270 = sadd.s32 %s269, 1
    %p273 = scmp.eq.s32.totalorder %s20, 1
    %p274 = scmp.ne.s32.totalorder %s269, %s271
    %p275 = scmp.eq.s32.totalorder %s20, 0
    %p276 = por %p274, %p275
    %p277 = scmp.ne.s32.totalorder %s269, %s271
    %p278 = scmp.eq.s32.totalorder %s25, 1
    %p279 = por %p277, %p278
    %p280 = scmp.ne.s32.totalorder %s271, %s272
    %p281 = scmp.eq.s32.totalorder %s25, 0
    %p282 = por %p280, %p281
    %p283 = scmp.ne.s32.totalorder %s271, %s272
    %p284 = scmp.eq.s32.totalorder %s26, 1
    %p285 = por %p283, %p284
    %p287 = scmp.ne.s32.totalorder %s272, %s286
    %p288 = scmp.eq.s32.totalorder %s26, 0
    %p289 = por %p287, %p288
    %s291 = sadd.s32 %s290, 1
    %p294 = scmp.eq.s32.totalorder %s20, 1
    %p295 = scmp.ne.s32.totalorder %s290, %s292
    %p296 = scmp.eq.s32.totalorder %s20, 0
    %p297 = por %p295, %p296
    %p298 = scmp.ne.s32.totalorder %s290, %s292
    %p299 = scmp.eq.s32.totalorder %s25, 1
    %p300 = por %p298, %p299
    %p301 = scmp.ne.s32.totalorder %s292, %s293
    %p302 = scmp.eq.s32.totalorder %s25, 0
    %p303 = por %p301, %p302
    %p304 = scmp.ne.s32.totalorder %s292, %s293
    %p305 = scmp.eq.s32.totalorder %s26, 1
    %p306 = por %p304, %p305
    %p308 = scmp.ne.s32.totalorder %s293, %s307
    %p309 = scmp.eq.s32.totalorder %s26, 0
    %p310 = por %p308, %p309
    %s312 = sadd.s32 %s311, 1
    %p315 = scmp.eq.s32.totalorder %s20, 1
    %p316 = scmp.ne.s32.totalorder %s311, %s313
    %p317 = scmp.eq.s32.totalorder %s20, 0
    %p318 = por %p316, %p317
    %p319 = scmp.ne.s32.totalorder %s311, %s313
    %p320 = scmp.eq.s32.totalorder %s25, 1
    %p321 = por %p319, %p320
    %p322 = scmp.ne.s32.totalorder %s313, %s314
    %p323 = scmp.eq.s32.totalorder %s25, 0
    %p324 = por %p322, %p323
    %p325 = scmp.ne.s32.totalorder %s313, %s314
    %p326 = scmp.eq.s32.totalorder %s26, 1
    %p327 = por %p325, %p326
    %p329 = scmp.ne.s32.totalorder %s314, %s328
    %p330 = scmp.eq.s32.totalorder %s26, 0
    %p331 = por %p329, %p330
    %s332 = ssub.s32 %s20, %s27
    %p333 = scmp.eq.s32.totalorder %s332, 0
    %s335 = sadd.s32 %s334, 1
    %s336 = scalar_select %p333, %s334, %s335
    %p339 = pneg %p333
    %p340 = scmp.eq.s32.totalorder %s20, 1
    %p341 = por %p339, %p340
    %p342 = scmp.ne.s32.totalorder %s334, %s337
    %p343 = scmp.eq.s32.totalorder %s20, 0
    %p344 = por %p342, %p343
    %p345 = scmp.ne.s32.totalorder %s334, %s337
    %p346 = scmp.eq.s32.totalorder %s25, 1
    %p347 = por %p345, %p346
    %p348 = scmp.ne.s32.totalorder %s337, %s338
    %p349 = scmp.eq.s32.totalorder %s25, 0
    %p350 = por %p348, %p349
    %p351 = scmp.ne.s32.totalorder %s337, %s338
    %p352 = scmp.eq.s32.totalorder %s26, 1
    %p353 = por %p351, %p352
    %p355 = scmp.ne.s32.totalorder %s338, %s354
    %p356 = scmp.eq.s32.totalorder %s26, 0
    %p357 = por %p355, %p356
    %p358 = scmp.le.s32.totalorder 1, %s20
    %p359 = scmp.lt.s32.totalorder %s20, 3
    %p360 = pnand %p358, %p359
    %p361 = pneg %p360
    // Predicated region
    $region9: #{wrapped_transformer_encoder_video.2} parent=5 // pred_check
      _
    $region10: #{wrapped_transformer_encoder_video.2} parent=5 // pred_check_branch
      %363 = sbr.rel (%p360) target = $region12
    $region11: #{wrapped_transformer_encoder_video.2} parent=5 // pred_region
      %s364 = ssub.s32 %s20, 1
      // Predicated region
      $region13: #{wrapped_transformer_encoder_video.2} parent=11 // pred_check
        %p365 = pneg %p93
      $region14: #{wrapped_transformer_encoder_video.2} parent=11 // pred_check_branch
        %367 = sbr.rel (%p365) target = $region16
      $region15: #{wrapped_transformer_encoder_video.2} parent=11 // pred_region
        _
      $region16: #{wrapped_transformer_encoder_video.2} parent=11 // pred_fallthru
        _
      // Predicated region
      $region17: #{wrapped_transformer_encoder_video.2} parent=11 // pred_check
        %p368 = pneg %p114
      $region18: #{wrapped_transformer_encoder_video.2} parent=11 // pred_check_branch
        %370 = sbr.rel (%p368) target = $region20
      $region19: #{wrapped_transformer_encoder_video.2} parent=11 // pred_region
        _
      $region20: #{wrapped_transformer_encoder_video.2} parent=11 // pred_fallthru
        _
      // Predicated region
      $region21: #{wrapped_transformer_encoder_video.2} parent=11 // pred_check
        %p371 = pneg %p135
      $region22: #{wrapped_transformer_encoder_video.2} parent=11 // pred_check_branch
        %373 = sbr.rel (%p371) target = $region24
      $region23: #{wrapped_transformer_encoder_video.2} parent=11 // pred_region
        _
      $region24: #{wrapped_transformer_encoder_video.2} parent=11 // pred_fallthru
        _
      // Predicated region
      $region25: #{wrapped_transformer_encoder_video.2} parent=11 // pred_check
        %p374 = pneg %p156
      $region26: #{wrapped_transformer_encoder_video.2} parent=11 // pred_check_branch
        %376 = sbr.rel (%p374) target = $region28
      $region27: #{wrapped_transformer_encoder_video.2} parent=11 // pred_region
        _
      $region28: #{wrapped_transformer_encoder_video.2} parent=11 // pred_fallthru
        _
      // Predicated region
      $region29: #{wrapped_transformer_encoder_video.2} parent=11 // pred_check
        %p377 = pneg %p177
      $region30: #{wrapped_transformer_encoder_video.2} parent=11 // pred_check_branch
        %379 = sbr.rel (%p377) target = $region32
      $region31: #{wrapped_transformer_encoder_video.2} parent=11 // pred_region
        _
      $region32: #{wrapped_transformer_encoder_video.2} parent=11 // pred_fallthru
        _
      // Predicated region
      $region33: #{wrapped_transformer_encoder_video.2} parent=11 // pred_check
        %p380 = pneg %p198
      $region34: #{wrapped_transformer_encoder_video.2} parent=11 // pred_check_branch
        %382 = sbr.rel (%p380) target = $region36
      $region35: #{wrapped_transformer_encoder_video.2} parent=11 // pred_region
        _
      $region36: #{wrapped_transformer_encoder_video.2} parent=11 // pred_fallthru
        _
      // Predicated region
      $region37: #{wrapped_transformer_encoder_video.2} parent=11 // pred_check
        %p383 = pneg %p219
      $region38: #{wrapped_transformer_encoder_video.2} parent=11 // pred_check_branch
        %385 = sbr.rel (%p383) target = $region40
      $region39: #{wrapped_transformer_encoder_video.2} parent=11 // pred_region
        _
      $region40: #{wrapped_transformer_encoder_video.2} parent=11 // pred_fallthru
        _
      // Predicated region
      $region41: #{wrapped_transformer_encoder_video.2} parent=11 // pred_check
        %p386 = pneg %p240
      $region42: #{wrapped_transformer_encoder_video.2} parent=11 // pred_check_branch
        %388 = sbr.rel (%p386) target = $region44
      $region43: #{wrapped_transformer_encoder_video.2} parent=11 // pred_region
        _
      $region44: #{wrapped_transformer_encoder_video.2} parent=11 // pred_fallthru
        _
      // Predicated region
      $region45: #{wrapped_transformer_encoder_video.2} parent=11 // pred_check
        %p389 = pneg %p261
      $region46: #{wrapped_transformer_encoder_video.2} parent=11 // pred_check_branch
        %391 = sbr.rel (%p389) target = $region48
      $region47: #{wrapped_transformer_encoder_video.2} parent=11 // pred_region
        _
      $region48: #{wrapped_transformer_encoder_video.2} parent=11 // pred_fallthru
        _
      // Predicated region
      $region49: #{wrapped_transformer_encoder_video.2} parent=11 // pred_check
        %p392 = pneg %p282
      $region50: #{wrapped_transformer_encoder_video.2} parent=11 // pred_check_branch
        %394 = sbr.rel (%p392) target = $region52
      $region51: #{wrapped_transformer_encoder_video.2} parent=11 // pred_region
        _
      $region52: #{wrapped_transformer_encoder_video.2} parent=11 // pred_fallthru
        _
      // Predicated region
      $region53: #{wrapped_transformer_encoder_video.2} parent=11 // pred_check
        %p395 = pneg %p303
      $region54: #{wrapped_transformer_encoder_video.2} parent=11 // pred_check_branch
        %397 = sbr.rel (%p395) target = $region56
      $region55: #{wrapped_transformer_encoder_video.2} parent=11 // pred_region
        _
      $region56: #{wrapped_transformer_encoder_video.2} parent=11 // pred_fallthru
        _
      // Predicated region
      $region57: #{wrapped_transformer_encoder_video.2} parent=11 // pred_check
        %p398 = pneg %p324
      $region58: #{wrapped_transformer_encoder_video.2} parent=11 // pred_check_branch
        %400 = sbr.rel (%p398) target = $region60
      $region59: #{wrapped_transformer_encoder_video.2} parent=11 // pred_region
        _
      $region60: #{wrapped_transformer_encoder_video.2} parent=11 // pred_fallthru
        _
    $region12: #{wrapped_transformer_encoder_video.2} parent=5 // pred_fallthru
      _
    %p401 = scmp.lt.s32.totalorder %s20, 2
    // Predicated region
    $region61: #{wrapped_transformer_encoder_video.2} parent=5 // pred_check
      %p402 = pneg %p401
    $region62: #{wrapped_transformer_encoder_video.2} parent=5 // pred_check_branch
      %404 = sbr.rel (%p402) target = $region64
    $region63: #{wrapped_transformer_encoder_video.2} parent=5 // pred_region
      // Predicated region
      $region65: #{wrapped_transformer_encoder_video.2} parent=63 // pred_check
        %p405 = pneg %p40
      $region66: #{wrapped_transformer_encoder_video.2} parent=63 // pred_check_branch
        %407 = sbr.rel (%p405) target = $region68
      $region67: #{wrapped_transformer_encoder_video.2} parent=63 // pred_region
        %p408 = scmp.lt.s32.totalorder %s20, 1
        %s409 = scalar_select %p408, %s20, 1
        %s410 = smul.addr %s409, 4
        %s411 = scalar_lea.vmem %s0, %s410
      $region68: #{wrapped_transformer_encoder_video.2} parent=63 // pred_fallthru
        _
      // Predicated region
      $region69: #{wrapped_transformer_encoder_video.2} parent=63 // pred_check
        %p412 = pneg %p66
      $region70: #{wrapped_transformer_encoder_video.2} parent=63 // pred_check_branch
        %414 = sbr.rel (%p412) target = $region72
      $region71: #{wrapped_transformer_encoder_video.2} parent=63 // pred_region
        %p415 = scmp.lt.s32.totalorder %s20, 1
        %s416 = scalar_select %p415, %s20, 1
        %s417 = scalar_lea.vmem %s1, %s416
      $region72: #{wrapped_transformer_encoder_video.2} parent=63 // pred_fallthru
        _
    $region64: #{wrapped_transformer_encoder_video.2} parent=5 // pred_fallthru
      _
    %p418 = scmp.le.s32.totalorder 1, %s20
    %p419 = scmp.lt.s32.totalorder %s20, 3
    %p420 = pnand %p418, %p419
    %p421 = pneg %p420
    // Predicated region
    $region73: #{wrapped_transformer_encoder_video.2} parent=5 // pred_check
      _
    $region74: #{wrapped_transformer_encoder_video.2} parent=5 // pred_check_branch
      %423 = sbr.rel (%p420) target = $region76
    $region75: #{wrapped_transformer_encoder_video.2} parent=5 // pred_region
      %s424 = ssub.s32 %s20, 1
      %p425 = scmp.lt.s32.totalorder %s25, 1
      %s426 = scalar_select %p425, %s25, 1
      %s427 = smul.addr %s426, 4
      %s428 = scalar_lea.vmem %s0, %s427
      %p429 = pneg %p46
      %p430 = pneg %p43
      %p431 = scmp.lt.s32.totalorder %s25, 1
      %s432 = scalar_select %p431, %s25, 1
      %s433 = scalar_lea.vmem %s1, %s432
      %p434 = pneg %p72
      %p435 = pneg %p69
      %p436 = pneg %p93
      %p437 = pneg %p90
      %p438 = pneg %p114
      %p439 = pneg %p111
      %p440 = pneg %p135
      %p441 = pneg %p132
      %p442 = pneg %p156
      %p443 = pneg %p153
      %p444 = pneg %p177
      %p445 = pneg %p174
      %p446 = pneg %p198
      %p447 = pneg %p195
      %p448 = pneg %p219
      %p449 = pneg %p216
      %p450 = pneg %p240
      %p451 = pneg %p237
      %p452 = pneg %p261
      %p453 = pneg %p258
      %p454 = pneg %p282
      %p455 = pneg %p279
      %p456 = pneg %p303
      %p457 = pneg %p300
      %p458 = pneg %p324
      %p459 = pneg %p321
      %p460 = pneg %p350
      %p461 = pneg %p347
      %p462 = scmp.lt.s32.totalorder %s25, 1
      %s463 = scalar_select %p462, %s25, 1
      %s464 = smul.addr %s463, 4
      %s465 = scalar_lea.vmem %s14, %s464
      %p466 = scmp.lt.s32.totalorder %s25, 1
      %s467 = scalar_select %p466, %s25, 1
      %s468 = smul.addr %s467, 4
      %s469 = scalar_lea.vmem %s0, %s468
      %p470 = scmp.lt.s32.totalorder %s25, 1
      %s471 = scalar_select %p470, %s25, 1
      %s472 = scalar_lea.vmem %s1, %s471
      %p473 = scmp.lt.s32.totalorder %s25, 1
      %s474 = scalar_select %p473, %s25, 1
      %s475 = smul.addr %s474, 4
      %s476 = scalar_lea.vmem %s14, %s475
      %v478 = vld [vmem:[%s469] sm:$0xf]
      %v479 = vld [vmem:[%s2] sm:$0xf]
      %v480 = vld [vmem:[%s2 + $0x4] sm:$0xf]
      %v481 = vld [vmem:[%s2 + $0x8] sm:$0xf]
      %v482 = vld [vmem:[%s2 + $0xc] sm:$0xf]
      %v483 = vld [vmem:[%s3] sm:$0x1]
      %v485 = vlaneseq
      %v486 = vshrl.u32 %v485, 7
      %v487 = vsub.s32 0, %v486
      %v488 = vrot.slane %v483, %v487
      %v494 = vunpack.c.l.b16 %v479
      %v495 = vunpack.c.l.b16 %v480
      %v496 = vunpack.c.l.b16 %v481
      %v497 = vunpack.c.l.b16 %v482
      %v498 = vpack.c.b16 %v495, %v494
      %v499 = vpack.c.b16 %v497, %v496
      %vm502 = vcmask 261120
      %v504 = vsel %vm502, %v478, 0
      %506 = vmatprep.subr.bf16.mxu0 0
      %507 = vmatpush1.bf16.msra.mxu0 0
      %508 = vmatprep.subr.bf16.mxu0 0
      %509 = vmatpush1.bf16.msra.mxu0 0
      %510 = vmatprep.subr.bf16.mxu0 0
      %511 = vmatpush1.bf16.msra.mxu0 0
      %512 = vmatprep.subr.bf16.mxu0 0
      %513 = vmatpush1.bf16.msra.mxu0 0
      %514 = vmatprep.subr.bf16.mxu0 0
      %515 = vmatpush1.bf16.msra.mxu0 0
      %516 = vmatprep.subr.bf16.mxu0 0
      %517 = vmatpush1.bf16.msra.mxu0 0
      %518 = vmatprep.subr.bf16.mxu0 0
      %519 = vmatpush1.bf16.msra.mxu0 %v499
      %520 = vmatprep.subr.bf16.mxu0 0
      %521 = vmatpush1.bf16.msra.mxu0 %v498
      %522 = vmatprep.subr.bf16.mxu0 0
      %523 = vmatpush2.bf16.msra.mxu0 0
      %524 = vmatprep.subr.bf16.mxu0 0
      %525 = vmatpush2.bf16.msra.mxu0 0
      %526 = vmatprep.subr.bf16.mxu0 0
      %527 = vmatpush2.bf16.msra.mxu0 0
      %528 = vmatprep.subr.bf16.mxu0 0
      %529 = vmatpush2.bf16.msra.mxu0 0
      %530 = vmatprep.subr.bf16.mxu0 0
      %531 = vmatpush2.bf16.msra.mxu0 0
      %532 = vmatprep.subr.bf16.mxu0 0
      %533 = vmatpush2.bf16.msra.mxu0 0
      %534 = vmatprep.subr.bf16.mxu0 0
      %535 = vmatpush2.bf16.msra.mxu0 0
      %536 = vmatprep.subr.bf16.mxu0 0
      %537 = vmatpush2.bf16.msra.mxu0 0
      %538 = vmatprep.mubr.bf16.mxu0 0
      %539 = vmatmul.mubr.bf16.gmra.mxu0 %v504
      %v540 = vpop.f32.mrf.mxu0
      %v541 = vadd.f32 %v488, %v540
      %v542 = vpop.f32.mrf.mxu0
      %v543 = vpop.f32.mrf.mxu0
      %v544 = vpop.f32.mrf.mxu0
      %545 = vdwg.mxu0
      %v546 = vpack.c.bf16 %v541, %v541
      %548 = vrot.lane.b32.xlu0 %v546, 120
      %v549 = vpop.permute.xlu0 %548
      %550 = vrot.lane.b32.xlu0 %v546, 112
      %v551 = vpop.permute.xlu0 %550
      %552 = vrot.lane.b32.xlu0 %v546, 104
      %v553 = vpop.permute.xlu0 %552
      %v555 = vunpack.c.l.s4 1983009808
      %v556 = vunpack.c.0.s8 %v555
      %v557 = vlaneseq
      %v558 = vshrl.u32 %v557, 7
      %v559 = vsub.s32 %v556, %v558
      %v560 = vrot.slane %v546, %v559
      %v563 = vunpack.c.l.s4 1983009808
      %v564 = vunpack.c.0.s8 %v563
      %v565 = vlaneseq
      %v566 = vshrl.u32 %v565, 7
      %v567 = vsub.s32 %v564, %v566
      %v568 = vrot.slane %v551, %v567
      %v569 = vcombine.low %v560, %v568
      %v570 = vcombine.high %v560, %v568
      %v572 = vunpack.c.l.s4 1934713408
      %v573 = vunpack.c.0.s8 %v572
      %v574 = vlaneseq
      %v575 = vshrl.u32 %v574, 7
      %v576 = vsub.s32 %v573, %v575
      %v577 = vrot.slane %v569, %v576
      %v579 = vunpack.c.l.s4 1934713408
      %v580 = vunpack.c.0.s8 %v579
      %v581 = vlaneseq
      %v582 = vshrl.u32 %v581, 7
      %v583 = vsub.s32 %v580, %v582
      %v584 = vrot.slane %v570, %v583
      %v585 = vcombine.high %v577, 0
      %v586 = vcombine.high %v584, 0
      %v589 = vunpack.c.l.s4 1983009808
      %v590 = vunpack.c.0.s8 %v589
      %v591 = vlaneseq
      %v592 = vshrl.u32 %v591, 7
      %v593 = vsub.s32 %v590, %v592
      %v594 = vrot.slane %v549, %v593
      %v597 = vunpack.c.l.s4 1983009808
      %v598 = vunpack.c.0.s8 %v597
      %v599 = vlaneseq
      %v600 = vshrl.u32 %v599, 7
      %v601 = vsub.s32 %v598, %v600
      %v602 = vrot.slane %v553, %v601
      %v603 = vcombine.low %v594, %v602
      %v604 = vcombine.high %v594, %v602
      %v606 = vunpack.c.l.s4 1934713408
      %v607 = vunpack.c.0.s8 %v606
      %v608 = vlaneseq
      %v609 = vshrl.u32 %v608, 7
      %v610 = vsub.s32 %v607, %v609
      %v611 = vrot.slane %v603, %v610
      %v613 = vunpack.c.l.s4 1934713408
      %v614 = vunpack.c.0.s8 %v613
      %v615 = vlaneseq
      %v616 = vshrl.u32 %v615, 7
      %v617 = vsub.s32 %v614, %v616
      %v618 = vrot.slane %v604, %v617
      %v619 = vcombine.high %v611, 0
      %v620 = vcombine.high %v618, 0
      %v623 = vpack.i.b16 %v611, %v577
      %v625 = vshrl.u32 %v577, 16
      %v626 = vshrl.u32 %v611, 16
      %v627 = vpack.i.b16 %v626, %v625
      %v631 = vpack.i.b16 %v619, %v585
      %v633 = vshrl.u32 %v585, 16
      %v634 = vshrl.u32 %v619, 16
      %v635 = vpack.i.b16 %v634, %v633
      %v639 = vpack.i.b16 %v618, %v584
      %v641 = vshrl.u32 %v584, 16
      %v642 = vshrl.u32 %v618, 16
      %v643 = vpack.i.b16 %v642, %v641
      %v647 = vpack.i.b16 %v620, %v586
      %v649 = vshrl.u32 %v586, 16
      %v650 = vshrl.u32 %v620, 16
      %v651 = vpack.i.b16 %v650, %v649
      %v653 = vcombine.low %v623, %v639
      %v655 = vunpack.c.l.s4 1983009808
      %v656 = vunpack.c.0.s8 %v655
      %v657 = vlaneseq
      %v658 = vshrl.u32 %v657, 7
      %v659 = vsub.s32 %v656, %v658
      %v660 = vrot.slane %v653, %v659
      %v661 = vcombine.low %v631, %v647
      %v663 = vunpack.c.l.s4 1983009808
      %v664 = vunpack.c.0.s8 %v663
      %v665 = vlaneseq
      %v666 = vshrl.u32 %v665, 7
      %v667 = vsub.s32 %v664, %v666
      %v668 = vrot.slane %v661, %v667
      %v669 = vcombine.low %v660, %v668
      %v671 = vunpack.c.l.s4 1934713408
      %v672 = vunpack.c.0.s8 %v671
      %v673 = vlaneseq
      %v674 = vshrl.u32 %v673, 7
      %v675 = vsub.s32 %v672, %v674
      %v676 = vrot.slane %v669, %v675
      %v677 = vcombine.high %v676, 0
      %v678 = vcombine.low %v627, %v643
      %v680 = vunpack.c.l.s4 1983009808
      %v681 = vunpack.c.0.s8 %v680
      %v682 = vlaneseq
      %v683 = vshrl.u32 %v682, 7
      %v684 = vsub.s32 %v681, %v683
      %v685 = vrot.slane %v678, %v684
      %v686 = vcombine.low %v635, %v651
      %v688 = vunpack.c.l.s4 1983009808
      %v689 = vunpack.c.0.s8 %v688
      %v690 = vlaneseq
      %v691 = vshrl.u32 %v690, 7
      %v692 = vsub.s32 %v689, %v691
      %v693 = vrot.slane %v686, %v692
      %v694 = vcombine.low %v685, %v693
      %v696 = vunpack.c.l.s4 1934713408
      %v697 = vunpack.c.0.s8 %v696
      %v698 = vlaneseq
      %v699 = vshrl.u32 %v698, 7
      %v700 = vsub.s32 %v697, %v699
      %v701 = vrot.slane %v694, %v700
      %v702 = vcombine.high %v701, 0
      %v705 = vpack.i.b16 %v701, %v676
      %v706 = vshrl.u32 %v676, 16
      %v707 = vshrl.u32 %v701, 16
      %v708 = vpack.i.b16 %v707, %v706
      %v711 = vpack.i.b16 %v702, %v677
      %v712 = vshrl.u32 %v677, 16
      %v713 = vshrl.u32 %v702, 16
      %v714 = vpack.i.b16 %v713, %v712
      %715 = vrot.lane.b32.xlu0 %v546, 96
      %v716 = vpop.permute.xlu0 %715
      %717 = vrot.lane.b32.xlu0 %v549, 96
      %v718 = vpop.permute.xlu0 %717
      %719 = vrot.lane.b32.xlu0 %v551, 96
      %v720 = vpop.permute.xlu0 %719
      %721 = vrot.lane.b32.xlu0 %v553, 96
      %v722 = vpop.permute.xlu0 %721
      %v725 = vunpack.c.l.s4 1983009808
      %v726 = vunpack.c.0.s8 %v725
      %v727 = vlaneseq
      %v728 = vshrl.u32 %v727, 7
      %v729 = vsub.s32 %v726, %v728
      %v730 = vrot.slane %v716, %v729
      %v733 = vunpack.c.l.s4 1983009808
      %v734 = vunpack.c.0.s8 %v733
      %v735 = vlaneseq
      %v736 = vshrl.u32 %v735, 7
      %v737 = vsub.s32 %v734, %v736
      %v738 = vrot.slane %v720, %v737
      %v739 = vcombine.low %v730, %v738
      %v740 = vcombine.high %v730, %v738
      %v742 = vunpack.c.l.s4 1934713408
      %v743 = vunpack.c.0.s8 %v742
      %v744 = vlaneseq
      %v745 = vshrl.u32 %v744, 7
      %v746 = vsub.s32 %v743, %v745
      %v747 = vrot.slane %v739, %v746
      %v749 = vunpack.c.l.s4 1934713408
      %v750 = vunpack.c.0.s8 %v749
      %v751 = vlaneseq
      %v752 = vshrl.u32 %v751, 7
      %v753 = vsub.s32 %v750, %v752
      %v754 = vrot.slane %v740, %v753
      %v755 = vcombine.high %v747, 0
      %v756 = vcombine.high %v754, 0
      %v759 = vunpack.c.l.s4 1983009808
      %v760 = vunpack.c.0.s8 %v759
      %v761 = vlaneseq
      %v762 = vshrl.u32 %v761, 7
      %v763 = vsub.s32 %v760, %v762
      %v764 = vrot.slane %v718, %v763
      %v767 = vunpack.c.l.s4 1983009808
      %v768 = vunpack.c.0.s8 %v767
      %v769 = vlaneseq
      %v770 = vshrl.u32 %v769, 7
      %v771 = vsub.s32 %v768, %v770
      %v772 = vrot.slane %v722, %v771
      %v773 = vcombine.low %v764, %v772
      %v774 = vcombine.high %v764, %v772
      %v776 = vunpack.c.l.s4 1934713408
      %v777 = vunpack.c.0.s8 %v776
      %v778 = vlaneseq
      %v779 = vshrl.u32 %v778, 7
      %v780 = vsub.s32 %v777, %v779
      %v781 = vrot.slane %v773, %v780
      %v783 = vunpack.c.l.s4 1934713408
      %v784 = vunpack.c.0.s8 %v783
      %v785 = vlaneseq
      %v786 = vshrl.u32 %v785, 7
      %v787 = vsub.s32 %v784, %v786
      %v788 = vrot.slane %v774, %v787
      %v789 = vcombine.high %v781, 0
      %v790 = vcombine.high %v788, 0
      %v793 = vpack.i.b16 %v781, %v747
      %v795 = vshrl.u32 %v747, 16
      %v796 = vshrl.u32 %v781, 16
      %v797 = vpack.i.b16 %v796, %v795
      %v801 = vpack.i.b16 %v789, %v755
      %v803 = vshrl.u32 %v755, 16
      %v804 = vshrl.u32 %v789, 16
      %v805 = vpack.i.b16 %v804, %v803
      %v809 = vpack.i.b16 %v788, %v754
      %v811 = vshrl.u32 %v754, 16
      %v812 = vshrl.u32 %v788, 16
      %v813 = vpack.i.b16 %v812, %v811
      %v817 = vpack.i.b16 %v790, %v756
      %v819 = vshrl.u32 %v756, 16
      %v820 = vshrl.u32 %v790, 16
      %v821 = vpack.i.b16 %v820, %v819
      %v823 = vcombine.low %v793, %v809
      %v825 = vunpack.c.l.s4 1983009808
      %v826 = vunpack.c.0.s8 %v825
      %v827 = vlaneseq
      %v828 = vshrl.u32 %v827, 7
      %v829 = vsub.s32 %v826, %v828
      %v830 = vrot.slane %v823, %v829
      %v831 = vcombine.low %v801, %v817
      %v833 = vunpack.c.l.s4 1983009808
      %v834 = vunpack.c.0.s8 %v833
      %v835 = vlaneseq
      %v836 = vshrl.u32 %v835, 7
      %v837 = vsub.s32 %v834, %v836
      %v838 = vrot.slane %v831, %v837
      %v839 = vcombine.low %v830, %v838
      %v841 = vunpack.c.l.s4 1934713408
      %v842 = vunpack.c.0.s8 %v841
      %v843 = vlaneseq
      %v844 = vshrl.u32 %v843, 7
      %v845 = vsub.s32 %v842, %v844
      %v846 = vrot.slane %v839, %v845
      %v847 = vcombine.high %v846, 0
      %v848 = vcombine.low %v797, %v813
      %v850 = vunpack.c.l.s4 1983009808
      %v851 = vunpack.c.0.s8 %v850
      %v852 = vlaneseq
      %v853 = vshrl.u32 %v852, 7
      %v854 = vsub.s32 %v851, %v853
      %v855 = vrot.slane %v848, %v854
      %v856 = vcombine.low %v805, %v821
      %v858 = vunpack.c.l.s4 1983009808
      %v859 = vunpack.c.0.s8 %v858
      %v860 = vlaneseq
      %v861 = vshrl.u32 %v860, 7
      %v862 = vsub.s32 %v859, %v861
      %v863 = vrot.slane %v856, %v862
      %v864 = vcombine.low %v855, %v863
      %v866 = vunpack.c.l.s4 1934713408
      %v867 = vunpack.c.0.s8 %v866
      %v868 = vlaneseq
      %v869 = vshrl.u32 %v868, 7
      %v870 = vsub.s32 %v867, %v869
      %v871 = vrot.slane %v864, %v870
      %v872 = vcombine.high %v871, 0
      %v875 = vpack.i.b16 %v871, %v846
      %v876 = vshrl.u32 %v846, 16
      %v877 = vshrl.u32 %v871, 16
      %v878 = vpack.i.b16 %v877, %v876
      %v881 = vpack.i.b16 %v872, %v847
      %v882 = vshrl.u32 %v847, 16
      %v883 = vshrl.u32 %v872, 16
      %v884 = vpack.i.b16 %v883, %v882
      %885 = vrot.lane.b32.xlu0 %v546, 64
      %v886 = vpop.permute.xlu0 %885
      %887 = vrot.lane.b32.xlu0 %v549, 64
      %v888 = vpop.permute.xlu0 %887
      %889 = vrot.lane.b32.xlu0 %v551, 64
      %v890 = vpop.permute.xlu0 %889
      %891 = vrot.lane.b32.xlu0 %v553, 64
      %v892 = vpop.permute.xlu0 %891
      %v895 = vunpack.c.l.s4 1983009808
      %v896 = vunpack.c.0.s8 %v895
      %v897 = vlaneseq
      %v898 = vshrl.u32 %v897, 7
      %v899 = vsub.s32 %v896, %v898
      %v900 = vrot.slane %v886, %v899
      %v903 = vunpack.c.l.s4 1983009808
      %v904 = vunpack.c.0.s8 %v903
      %v905 = vlaneseq
      %v906 = vshrl.u32 %v905, 7
      %v907 = vsub.s32 %v904, %v906
      %v908 = vrot.slane %v890, %v907
      %v909 = vcombine.low %v900, %v908
      %v910 = vcombine.high %v900, %v908
      %v912 = vunpack.c.l.s4 1934713408
      %v913 = vunpack.c.0.s8 %v912
      %v914 = vlaneseq
      %v915 = vshrl.u32 %v914, 7
      %v916 = vsub.s32 %v913, %v915
      %v917 = vrot.slane %v909, %v916
      %v919 = vunpack.c.l.s4 1934713408
      %v920 = vunpack.c.0.s8 %v919
      %v921 = vlaneseq
      %v922 = vshrl.u32 %v921, 7
      %v923 = vsub.s32 %v920, %v922
      %v924 = vrot.slane %v910, %v923
      %v925 = vcombine.high %v917, 0
      %v926 = vcombine.high %v924, 0
      %v929 = vunpack.c.l.s4 1983009808
      %v930 = vunpack.c.0.s8 %v929
      %v931 = vlaneseq
      %v932 = vshrl.u32 %v931, 7
      %v933 = vsub.s32 %v930, %v932
      %v934 = vrot.slane %v888, %v933
      %v937 = vunpack.c.l.s4 1983009808
      %v938 = vunpack.c.0.s8 %v937
      %v939 = vlaneseq
      %v940 = vshrl.u32 %v939, 7
      %v941 = vsub.s32 %v938, %v940
      %v942 = vrot.slane %v892, %v941
      %v943 = vcombine.low %v934, %v942
      %v944 = vcombine.high %v934, %v942
      %v946 = vunpack.c.l.s4 1934713408
      %v947 = vunpack.c.0.s8 %v946
      %v948 = vlaneseq
      %v949 = vshrl.u32 %v948, 7
      %v950 = vsub.s32 %v947, %v949
      %v951 = vrot.slane %v943, %v950
      %v953 = vunpack.c.l.s4 1934713408
      %v954 = vunpack.c.0.s8 %v953
      %v955 = vlaneseq
      %v956 = vshrl.u32 %v955, 7
      %v957 = vsub.s32 %v954, %v956
      %v958 = vrot.slane %v944, %v957
      %v959 = vcombine.high %v951, 0
      %v960 = vcombine.high %v958, 0
      %v963 = vpack.i.b16 %v951, %v917
      %v965 = vshrl.u32 %v917, 16
      %v966 = vshrl.u32 %v951, 16
      %v967 = vpack.i.b16 %v966, %v965
      %v971 = vpack.i.b16 %v959, %v925
      %v973 = vshrl.u32 %v925, 16
      %v974 = vshrl.u32 %v959, 16
      %v975 = vpack.i.b16 %v974, %v973
      %v979 = vpack.i.b16 %v958, %v924
      %v981 = vshrl.u32 %v924, 16
      %v982 = vshrl.u32 %v958, 16
      %v983 = vpack.i.b16 %v982, %v981
      %v987 = vpack.i.b16 %v960, %v926
      %v989 = vshrl.u32 %v926, 16
      %v990 = vshrl.u32 %v960, 16
      %v991 = vpack.i.b16 %v990, %v989
      %v993 = vcombine.low %v963, %v979
      %v995 = vunpack.c.l.s4 1983009808
      %v996 = vunpack.c.0.s8 %v995
      %v997 = vlaneseq
      %v998 = vshrl.u32 %v997, 7
      %v999 = vsub.s32 %v996, %v998
      %v1000 = vrot.slane %v993, %v999
      %v1001 = vcombine.low %v971, %v987
      %v1003 = vunpack.c.l.s4 1983009808
      %v1004 = vunpack.c.0.s8 %v1003
      %v1005 = vlaneseq
      %v1006 = vshrl.u32 %v1005, 7
      %v1007 = vsub.s32 %v1004, %v1006
      %v1008 = vrot.slane %v1001, %v1007
      %v1009 = vcombine.low %v1000, %v1008
      %v1011 = vunpack.c.l.s4 1934713408
      %v1012 = vunpack.c.0.s8 %v1011
      %v1013 = vlaneseq
      %v1014 = vshrl.u32 %v1013, 7
      %v1015 = vsub.s32 %v1012, %v1014
      %v1016 = vrot.slane %v1009, %v1015
      %v1017 = vcombine.high %v1016, 0
      %v1018 = vcombine.low %v967, %v983
      %v1020 = vunpack.c.l.s4 1983009808
      %v1021 = vunpack.c.0.s8 %v1020
      %v1022 = vlaneseq
      %v1023 = vshrl.u32 %v1022, 7
      %v1024 = vsub.s32 %v1021, %v1023
      %v1025 = vrot.slane %v1018, %v1024
      %v1026 = vcombine.low %v975, %v991
      %v1028 = vunpack.c.l.s4 1983009808
      %v1029 = vunpack.c.0.s8 %v1028
      %v1030 = vlaneseq
      %v1031 = vshrl.u32 %v1030, 7
      %v1032 = vsub.s32 %v1029, %v1031
      %v1033 = vrot.slane %v1026, %v1032
      %v1034 = vcombine.low %v1025, %v1033
      %v1036 = vunpack.c.l.s4 1934713408
      %v1037 = vunpack.c.0.s8 %v1036
      %v1038 = vlaneseq
      %v1039 = vshrl.u32 %v1038, 7
      %v1040 = vsub.s32 %v1037, %v1039
      %v1041 = vrot.slane %v1034, %v1040
      %v1042 = vcombine.high %v1041, 0
      %v1045 = vpack.i.b16 %v1041, %v1016
      %v1046 = vshrl.u32 %v1016, 16
      %v1047 = vshrl.u32 %v1041, 16
      %v1048 = vpack.i.b16 %v1047, %v1046
      %v1051 = vpack.i.b16 %v1042, %v1017
      %v1052 = vshrl.u32 %v1017, 16
      %v1053 = vshrl.u32 %v1042, 16
      %v1054 = vpack.i.b16 %v1053, %v1052
      %vm1055 = vcmask 64512
      %v1057 = vsel %vm1055, %v705, 0
      %v1060 = vsel %vm1055, %v875, 0
      %1062 = vmatprep.subr.bf16.mxu0 0
      %1063 = vmatpush1.bf16.xpose.msra.mxu0 0
      %1064 = vmatprep.subr.bf16.mxu0 0
      %1065 = vmatpush1.bf16.xpose.msra.mxu0 0
      %1066 = vmatprep.subr.bf16.mxu0 0
      %1067 = vmatpush1.bf16.xpose.msra.mxu0 0
      %1068 = vmatprep.subr.bf16.mxu0 0
      %1069 = vmatpush1.bf16.xpose.msra.mxu0 0
      %1070 = vmatprep.subr.bf16.mxu0 0
      %1071 = vmatpush1.bf16.xpose.msra.mxu0 0
      %1072 = vmatprep.subr.bf16.mxu0 0
      %1073 = vmatpush1.bf16.xpose.msra.mxu0 0
      %1074 = vmatprep.subr.bf16.mxu0 0
      %1075 = vmatpush1.bf16.xpose.msra.mxu0 0
      %1076 = vmatprep.subr.bf16.mxu0 0
      %1077 = vmatpush1.bf16.xpose.msra.mxu0 %v1060
      %1078 = vmatprep.subr.bf16.mxu0 0
      %1079 = vmatpush2.bf16.xpose.msra.mxu0 0
      %1080 = vmatprep.subr.bf16.mxu0 0
      %1081 = vmatpush2.bf16.xpose.msra.mxu0 0
      %1082 = vmatprep.subr.bf16.mxu0 0
      %1083 = vmatpush2.bf16.xpose.msra.mxu0 0
      %1084 = vmatprep.subr.bf16.mxu0 0
      %1085 = vmatpush2.bf16.xpose.msra.mxu0 0
      %1086 = vmatprep.subr.bf16.mxu0 0
      %1087 = vmatpush2.bf16.xpose.msra.mxu0 0
      %1088 = vmatprep.subr.bf16.mxu0 0
      %1089 = vmatpush2.bf16.xpose.msra.mxu0 0
      %1090 = vmatprep.subr.bf16.mxu0 0
      %1091 = vmatpush2.bf16.xpose.msra.mxu0 0
      %1092 = vmatprep.subr.bf16.mxu0 0
      %1093 = vmatpush2.bf16.xpose.msra.mxu0 0
      %1094 = vmatprep.mubr.bf16.mxu0 0
      %1095 = vmatmul.mubr.bf16.gmra.mxu0 %v1057
      %v1096 = vpop.f32.mrf.mxu0
      %v1097 = vadd.f32 0.0, %v1096
      %v1098 = vpop.f32.mrf.mxu0
      %v1099 = vpop.f32.mrf.mxu0
      %v1100 = vpop.f32.mrf.mxu0
      %1101 = vdwg.mxu0
      %v1103 = vsel %vm1055, %v708, 0
      %v1106 = vsel %vm1055, %v878, 0
      %1108 = vmatprep.subr.bf16.mxu0 0
      %1109 = vmatpush1.bf16.xpose.msra.mxu0 0
      %1110 = vmatprep.subr.bf16.mxu0 0
      %1111 = vmatpush1.bf16.xpose.msra.mxu0 0
      %1112 = vmatprep.subr.bf16.mxu0 0
      %1113 = vmatpush1.bf16.xpose.msra.mxu0 0
      %1114 = vmatprep.subr.bf16.mxu0 0
      %1115 = vmatpush1.bf16.xpose.msra.mxu0 0
      %1116 = vmatprep.subr.bf16.mxu0 0
      %1117 = vmatpush1.bf16.xpose.msra.mxu0 0
      %1118 = vmatprep.subr.bf16.mxu0 0
      %1119 = vmatpush1.bf16.xpose.msra.mxu0 0
      %1120 = vmatprep.subr.bf16.mxu0 0
      %1121 = vmatpush1.bf16.xpose.msra.mxu0 0
      %1122 = vmatprep.subr.bf16.mxu0 0
      %1123 = vmatpush1.bf16.xpose.msra.mxu0 %v1106
      %1124 = vmatprep.subr.bf16.mxu0 0
      %1125 = vmatpush2.bf16.xpose.msra.mxu0 0
      %1126 = vmatprep.subr.bf16.mxu0 0
      %1127 = vmatpush2.bf16.xpose.msra.mxu0 0
      %1128 = vmatprep.subr.bf16.mxu0 0
      %1129 = vmatpush2.bf16.xpose.msra.mxu0 0
      %1130 = vmatprep.subr.bf16.mxu0 0
      %1131 = vmatpush2.bf16.xpose.msra.mxu0 0
      %1132 = vmatprep.subr.bf16.mxu0 0
      %1133 = vmatpush2.bf16.xpose.msra.mxu0 0
      %1134 = vmatprep.subr.bf16.mxu0 0
      %1135 = vmatpush2.bf16.xpose.msra.mxu0 0
      %1136 = vmatprep.subr.bf16.mxu0 0
      %1137 = vmatpush2.bf16.xpose.msra.mxu0 0
      %1138 = vmatprep.subr.bf16.mxu0 0
      %1139 = vmatpush2.bf16.xpose.msra.mxu0 0
      %1140 = vmatprep.mubr.bf16.mxu0 0
      %1141 = vmatmul.mubr.bf16.gmra.mxu0 %v1103
      %v1142 = vpop.f32.mrf.mxu0
      %v1143 = vadd.f32 0.0, %v1142
      %v1144 = vpop.f32.mrf.mxu0
      %v1145 = vpop.f32.mrf.mxu0
      %v1146 = vpop.f32.mrf.mxu0
      %1147 = vdwg.mxu0
      %v1149 = vsel %vm1055, %v711, 0
      %v1152 = vsel %vm1055, %v881, 0
      %1154 = vmatprep.subr.bf16.mxu0 0
      %1155 = vmatpush1.bf16.xpose.msra.mxu0 0
      %1156 = vmatprep.subr.bf16.mxu0 0
      %1157 = vmatpush1.bf16.xpose.msra.mxu0 0
      %1158 = vmatprep.subr.bf16.mxu0 0
      %1159 = vmatpush1.bf16.xpose.msra.mxu0 0
      %1160 = vmatprep.subr.bf16.mxu0 0
      %1161 = vmatpush1.bf16.xpose.msra.mxu0 0
      %1162 = vmatprep.subr.bf16.mxu0 0
      %1163 = vmatpush1.bf16.xpose.msra.mxu0 0
      %1164 = vmatprep.subr.bf16.mxu0 0
      %1165 = vmatpush1.bf16.xpose.msra.mxu0 0
      %1166 = vmatprep.subr.bf16.mxu0 0
      %1167 = vmatpush1.bf16.xpose.msra.mxu0 0
      %1168 = vmatprep.subr.bf16.mxu0 0
      %1169 = vmatpush1.bf16.xpose.msra.mxu0 %v1152
      %1170 = vmatprep.subr.bf16.mxu0 0
      %1171 = vmatpush2.bf16.xpose.msra.mxu0 0
      %1172 = vmatprep.subr.bf16.mxu0 0
      %1173 = vmatpush2.bf16.xpose.msra.mxu0 0
      %1174 = vmatprep.subr.bf16.mxu0 0
      %1175 = vmatpush2.bf16.xpose.msra.mxu0 0
      %1176 = vmatprep.subr.bf16.mxu0 0
      %1177 = vmatpush2.bf16.xpose.msra.mxu0 0
      %1178 = vmatprep.subr.bf16.mxu0 0
      %1179 = vmatpush2.bf16.xpose.msra.mxu0 0
      %1180 = vmatprep.subr.bf16.mxu0 0
      %1181 = vmatpush2.bf16.xpose.msra.mxu0 0
      %1182 = vmatprep.subr.bf16.mxu0 0
      %1183 = vmatpush2.bf16.xpose.msra.mxu0 0
      %1184 = vmatprep.subr.bf16.mxu0 0
      %1185 = vmatpush2.bf16.xpose.msra.mxu0 0
      %1186 = vmatprep.mubr.bf16.mxu0 0
      %1187 = vmatmul.mubr.bf16.gmra.mxu0 %v1149
      %v1188 = vpop.f32.mrf.mxu0
      %v1189 = vadd.f32 0.0, %v1188
      %v1190 = vpop.f32.mrf.mxu0
      %v1191 = vpop.f32.mrf.mxu0
      %v1192 = vpop.f32.mrf.mxu0
      %1193 = vdwg.mxu0
      %v1195 = vsel %vm1055, %v714, 0
      %v1198 = vsel %vm1055, %v884, 0
      %1200 = vmatprep.subr.bf16.mxu0 0
      %1201 = vmatpush1.bf16.xpose.msra.mxu0 0
      %1202 = vmatprep.subr.bf16.mxu0 0
      %1203 = vmatpush1.bf16.xpose.msra.mxu0 0
      %1204 = vmatprep.subr.bf16.mxu0 0
      %1205 = vmatpush1.bf16.xpose.msra.mxu0 0
      %1206 = vmatprep.subr.bf16.mxu0 0
      %1207 = vmatpush1.bf16.xpose.msra.mxu0 0
      %1208 = vmatprep.subr.bf16.mxu0 0
      %1209 = vmatpush1.bf16.xpose.msra.mxu0 0
      %1210 = vmatprep.subr.bf16.mxu0 0
      %1211 = vmatpush1.bf16.xpose.msra.mxu0 0
      %1212 = vmatprep.subr.bf16.mxu0 0
      %1213 = vmatpush1.bf16.xpose.msra.mxu0 0
      %1214 = vmatprep.subr.bf16.mxu0 0
      %1215 = vmatpush1.bf16.xpose.msra.mxu0 %v1198
      %1216 = vmatprep.subr.bf16.mxu0 0
      %1217 = vmatpush2.bf16.xpose.msra.mxu0 0
      %1218 = vmatprep.subr.bf16.mxu0 0
      %1219 = vmatpush2.bf16.xpose.msra.mxu0 0
      %1220 = vmatprep.subr.bf16.mxu0 0
      %1221 = vmatpush2.bf16.xpose.msra.mxu0 0
      %1222 = vmatprep.subr.bf16.mxu0 0
      %1223 = vmatpush2.bf16.xpose.msra.mxu0 0
      %1224 = vmatprep.subr.bf16.mxu0 0
      %1225 = vmatpush2.bf16.xpose.msra.mxu0 0
      %1226 = vmatprep.subr.bf16.mxu0 0
      %1227 = vmatpush2.bf16.xpose.msra.mxu0 0
      %1228 = vmatprep.subr.bf16.mxu0 0
      %1229 = vmatpush2.bf16.xpose.msra.mxu0 0
      %1230 = vmatprep.subr.bf16.mxu0 0
      %1231 = vmatpush2.bf16.xpose.msra.mxu0 0
      %1232 = vmatprep.mubr.bf16.mxu0 0
      %1233 = vmatmul.mubr.bf16.gmra.mxu0 %v1195
      %v1234 = vpop.f32.mrf.mxu0
      %v1235 = vadd.f32 0.0, %v1234
      %v1236 = vpop.f32.mrf.mxu0
      %v1237 = vpop.f32.mrf.mxu0
      %v1238 = vpop.f32.mrf.mxu0
      %1239 = vdwg.mxu0
      %v1240 = vmul.f32 %v1097, 0.35355338
      %v1241 = vmul.f32 %v1143, 0.35355338
      %v1242 = vmul.f32 %v1189, 0.35355338
      %v1243 = vmul.f32 %v1235, 0.35355338
      %v1244 = vld [vmem:[%s472] sm:$0x1]
      %v1245 = vmul.f32 %v1244, -1e+30
      %v1247 = vlaneseq
      %v1248 = vshrl.u32 %v1247, 7
      %v1249 = vsub.s32 0, %v1248
      %v1250 = vrot.slane %v1245, %v1249
      %v1252 = vadd.f32 %v1240, %v1250
      %v1253 = vadd.f32 %v1241, %v1250
      %v1254 = vadd.f32 %v1242, %v1250
      %v1255 = vadd.f32 %v1243, %v1250
      %v1256 = vsel %vm1055, %v1252, -inf
      %1257 = vmax.xlane.f32.xlu0 %v1256
      %v1258 = vpop.xlane.xlu0 %1257
      %v1259 = vsel %vm1055, %v1253, -inf
      %1260 = vmax.xlane.f32.xlu0 %v1259
      %v1261 = vpop.xlane.xlu0 %1260
      %v1262 = vsel %vm1055, %v1254, -inf
      %1263 = vmax.xlane.f32.xlu0 %v1262
      %v1264 = vpop.xlane.xlu0 %1263
      %v1265 = vsel %vm1055, %v1255, -inf
      %1266 = vmax.xlane.f32.xlu0 %v1265
      %v1267 = vpop.xlane.xlu0 %1266
      %v1268 = vsub.f32 %v1252, %v1258
      %v1269 = vsub.f32 %v1253, %v1261
      %v1270 = vsub.f32 %v1254, %v1264
      %v1271 = vsub.f32 %v1255, %v1267
      %v1272 = vmul.f32 %v1268, 1.442695
      %v1273 = vpow.pop %v1272
      %v1274 = vmul.f32 %v1269, 1.442695
      %v1275 = vpow.pop %v1274
      %v1276 = vmul.f32 %v1270, 1.442695
      %v1277 = vpow.pop %v1276
      %v1278 = vmul.f32 %v1271, 1.442695
      %v1279 = vpow.pop %v1278
      %v1280 = vsel %vm1055, %v1273, 0.0
      %1281 = vadd.xlane.f32.xlu0 %v1280
      %v1282 = vpop.xlane.xlu0 %1281
      %v1283 = vsel %vm1055, %v1275, 0.0
      %1284 = vadd.xlane.f32.xlu0 %v1283
      %v1285 = vpop.xlane.xlu0 %1284
      %v1286 = vsel %vm1055, %v1277, 0.0
      %1287 = vadd.xlane.f32.xlu0 %v1286
      %v1288 = vpop.xlane.xlu0 %1287
      %v1289 = vsel %vm1055, %v1279, 0.0
      %1290 = vadd.xlane.f32.xlu0 %v1289
      %v1291 = vpop.xlane.xlu0 %1290
      %v1292 = vrcp.pop %v1282
      %v1293 = vrcp.pop %v1285
      %v1294 = vrcp.pop %v1288
      %v1295 = vrcp.pop %v1291
      %v1296 = vmul.f32 %v1273, %v1292
      %v1297 = vmul.f32 %v1275, %v1293
      %v1298 = vmul.f32 %v1277, %v1294
      %v1299 = vmul.f32 %v1279, %v1295
      %v1300 = vpack.c.bf16 %v1296, %v1296
      %v1301 = vpack.c.bf16 %v1297, %v1297
      %v1302 = vpack.c.bf16 %v1298, %v1298
      %v1303 = vpack.c.bf16 %v1299, %v1299
      %v1305 = vsel %vm1055, %v1300, 0
      %vm1307 = vcmask 1043456
      %v1309 = vsel %vm1307, %v1045, 0
      %1311 = vmatprep.subr.bf16.mxu0 0
      %1312 = vmatpush1.bf16.msra.mxu0 0
      %1313 = vmatprep.subr.bf16.mxu0 0
      %1314 = vmatpush1.bf16.msra.mxu0 0
      %1315 = vmatprep.subr.bf16.mxu0 0
      %1316 = vmatpush1.bf16.msra.mxu0 0
      %1317 = vmatprep.subr.bf16.mxu0 0
      %1318 = vmatpush1.bf16.msra.mxu0 0
      %1319 = vmatprep.subr.bf16.mxu0 0
      %1320 = vmatpush1.bf16.msra.mxu0 0
      %1321 = vmatprep.subr.bf16.mxu0 0
      %1322 = vmatpush1.bf16.msra.mxu0 0
      %1323 = vmatprep.subr.bf16.mxu0 0
      %1324 = vmatpush1.bf16.msra.mxu0 0
      %1325 = vmatprep.subr.bf16.mxu0 0
      %1326 = vmatpush1.bf16.msra.mxu0 %v1309
      %1327 = vmatprep.subr.bf16.mxu0 0
      %1328 = vmatpush2.bf16.msra.mxu0 0
      %1329 = vmatprep.subr.bf16.mxu0 0
      %1330 = vmatpush2.bf16.msra.mxu0 0
      %1331 = vmatprep.subr.bf16.mxu0 0
      %1332 = vmatpush2.bf16.msra.mxu0 0
      %1333 = vmatprep.subr.bf16.mxu0 0
      %1334 = vmatpush2.bf16.msra.mxu0 0
      %1335 = vmatprep.subr.bf16.mxu0 0
      %1336 = vmatpush2.bf16.msra.mxu0 0
      %1337 = vmatprep.subr.bf16.mxu0 0
      %1338 = vmatpush2.bf16.msra.mxu0 0
      %1339 = vmatprep.subr.bf16.mxu0 0
      %1340 = vmatpush2.bf16.msra.mxu0 0
      %1341 = vmatprep.subr.bf16.mxu0 0
      %1342 = vmatpush2.bf16.msra.mxu0 0
      %1343 = vmatprep.mubr.bf16.mxu0 0
      %1344 = vmatmul.mubr.bf16.gmra.mxu0 %v1305
      %v1345 = vpop.f32.mrf.mxu0
      %v1346 = vadd.f32 0.0, %v1345
      %v1347 = vpop.f32.mrf.mxu0
      %v1348 = vpop.f32.mrf.mxu0
      %v1349 = vpop.f32.mrf.mxu0
      %1350 = vdwg.mxu0
      %v1352 = vsel %vm1055, %v1301, 0
      %v1355 = vsel %vm1307, %v1048, 0
      %1357 = vmatprep.subr.bf16.mxu0 0
      %1358 = vmatpush1.bf16.msra.mxu0 0
      %1359 = vmatprep.subr.bf16.mxu0 0
      %1360 = vmatpush1.bf16.msra.mxu0 0
      %1361 = vmatprep.subr.bf16.mxu0 0
      %1362 = vmatpush1.bf16.msra.mxu0 0
      %1363 = vmatprep.subr.bf16.mxu0 0
      %1364 = vmatpush1.bf16.msra.mxu0 0
      %1365 = vmatprep.subr.bf16.mxu0 0
      %1366 = vmatpush1.bf16.msra.mxu0 0
      %1367 = vmatprep.subr.bf16.mxu0 0
      %1368 = vmatpush1.bf16.msra.mxu0 0
      %1369 = vmatprep.subr.bf16.mxu0 0
      %1370 = vmatpush1.bf16.msra.mxu0 0
      %1371 = vmatprep.subr.bf16.mxu0 0
      %1372 = vmatpush1.bf16.msra.mxu0 %v1355
      %1373 = vmatprep.subr.bf16.mxu0 0
      %1374 = vmatpush2.bf16.msra.mxu0 0
      %1375 = vmatprep.subr.bf16.mxu0 0
      %1376 = vmatpush2.bf16.msra.mxu0 0
      %1377 = vmatprep.subr.bf16.mxu0 0
      %1378 = vmatpush2.bf16.msra.mxu0 0
      %1379 = vmatprep.subr.bf16.mxu0 0
      %1380 = vmatpush2.bf16.msra.mxu0 0
      %1381 = vmatprep.subr.bf16.mxu0 0
      %1382 = vmatpush2.bf16.msra.mxu0 0
      %1383 = vmatprep.subr.bf16.mxu0 0
      %1384 = vmatpush2.bf16.msra.mxu0 0
      %1385 = vmatprep.subr.bf16.mxu0 0
      %1386 = vmatpush2.bf16.msra.mxu0 0
      %1387 = vmatprep.subr.bf16.mxu0 0
      %1388 = vmatpush2.bf16.msra.mxu0 0
      %1389 = vmatprep.mubr.bf16.mxu0 0
      %1390 = vmatmul.mubr.bf16.gmra.mxu0 %v1352
      %v1391 = vpop.f32.mrf.mxu0
      %v1392 = vadd.f32 0.0, %v1391
      %v1393 = vpop.f32.mrf.mxu0
      %v1394 = vpop.f32.mrf.mxu0
      %v1395 = vpop.f32.mrf.mxu0
      %1396 = vdwg.mxu0
      %v1398 = vsel %vm1055, %v1302, 0
      %v1401 = vsel %vm1307, %v1051, 0
      %1403 = vmatprep.subr.bf16.mxu0 0
      %1404 = vmatpush1.bf16.msra.mxu0 0
      %1405 = vmatprep.subr.bf16.mxu0 0
      %1406 = vmatpush1.bf16.msra.mxu0 0
      %1407 = vmatprep.subr.bf16.mxu0 0
      %1408 = vmatpush1.bf16.msra.mxu0 0
      %1409 = vmatprep.subr.bf16.mxu0 0
      %1410 = vmatpush1.bf16.msra.mxu0 0
      %1411 = vmatprep.subr.bf16.mxu0 0
      %1412 = vmatpush1.bf16.msra.mxu0 0
      %1413 = vmatprep.subr.bf16.mxu0 0
      %1414 = vmatpush1.bf16.msra.mxu0 0
      %1415 = vmatprep.subr.bf16.mxu0 0
      %1416 = vmatpush1.bf16.msra.mxu0 0
      %1417 = vmatprep.subr.bf16.mxu0 0
      %1418 = vmatpush1.bf16.msra.mxu0 %v1401
      %1419 = vmatprep.subr.bf16.mxu0 0
      %1420 = vmatpush2.bf16.msra.mxu0 0
      %1421 = vmatprep.subr.bf16.mxu0 0
      %1422 = vmatpush2.bf16.msra.mxu0 0
      %1423 = vmatprep.subr.bf16.mxu0 0
      %1424 = vmatpush2.bf16.msra.mxu0 0
      %1425 = vmatprep.subr.bf16.mxu0 0
      %1426 = vmatpush2.bf16.msra.mxu0 0
      %1427 = vmatprep.subr.bf16.mxu0 0
      %1428 = vmatpush2.bf16.msra.mxu0 0
      %1429 = vmatprep.subr.bf16.mxu0 0
      %1430 = vmatpush2.bf16.msra.mxu0 0
      %1431 = vmatprep.subr.bf16.mxu0 0
      %1432 = vmatpush2.bf16.msra.mxu0 0
      %1433 = vmatprep.subr.bf16.mxu0 0
      %1434 = vmatpush2.bf16.msra.mxu0 0
      %1435 = vmatprep.mubr.bf16.mxu0 0
      %1436 = vmatmul.mubr.bf16.gmra.mxu0 %v1398
      %v1437 = vpop.f32.mrf.mxu0
      %v1438 = vadd.f32 0.0, %v1437
      %v1439 = vpop.f32.mrf.mxu0
      %v1440 = vpop.f32.mrf.mxu0
      %v1441 = vpop.f32.mrf.mxu0
      %1442 = vdwg.mxu0
      %v1444 = vsel %vm1055, %v1303, 0
      %v1447 = vsel %vm1307, %v1054, 0
      %1449 = vmatprep.subr.bf16.mxu0 0
      %1450 = vmatpush1.bf16.msra.mxu0 0
      %1451 = vmatprep.subr.bf16.mxu0 0
      %1452 = vmatpush1.bf16.msra.mxu0 0
      %1453 = vmatprep.subr.bf16.mxu0 0
      %1454 = vmatpush1.bf16.msra.mxu0 0
      %1455 = vmatprep.subr.bf16.mxu0 0
      %1456 = vmatpush1.bf16.msra.mxu0 0
      %1457 = vmatprep.subr.bf16.mxu0 0
      %1458 = vmatpush1.bf16.msra.mxu0 0
      %1459 = vmatprep.subr.bf16.mxu0 0
      %1460 = vmatpush1.bf16.msra.mxu0 0
      %1461 = vmatprep.subr.bf16.mxu0 0
      %1462 = vmatpush1.bf16.msra.mxu0 0
      %1463 = vmatprep.subr.bf16.mxu0 0
      %1464 = vmatpush1.bf16.msra.mxu0 %v1447
      %1465 = vmatprep.subr.bf16.mxu0 0
      %1466 = vmatpush2.bf16.msra.mxu0 0
      %1467 = vmatprep.subr.bf16.mxu0 0
      %1468 = vmatpush2.bf16.msra.mxu0 0
      %1469 = vmatprep.subr.bf16.mxu0 0
      %1470 = vmatpush2.bf16.msra.mxu0 0
      %1471 = vmatprep.subr.bf16.mxu0 0
      %1472 = vmatpush2.bf16.msra.mxu0 0
      %1473 = vmatprep.subr.bf16.mxu0 0
      %1474 = vmatpush2.bf16.msra.mxu0 0
      %1475 = vmatprep.subr.bf16.mxu0 0
      %1476 = vmatpush2.bf16.msra.mxu0 0
      %1477 = vmatprep.subr.bf16.mxu0 0
      %1478 = vmatpush2.bf16.msra.mxu0 0
      %1479 = vmatprep.subr.bf16.mxu0 0
      %1480 = vmatpush2.bf16.msra.mxu0 0
      %1481 = vmatprep.mubr.bf16.mxu0 0
      %1482 = vmatmul.mubr.bf16.gmra.mxu0 %v1444
      %v1483 = vpop.f32.mrf.mxu0
      %v1484 = vadd.f32 0.0, %v1483
      %v1485 = vpop.f32.mrf.mxu0
      %v1486 = vpop.f32.mrf.mxu0
      %v1487 = vpop.f32.mrf.mxu0
      %1488 = vdwg.mxu0
      %v1489 = vpack.c.bf16 %v1346, %v1346
      %v1491 = vunpack.c.l.s4 1983009808
      %v1492 = vunpack.c.0.s8 %v1491
      %v1493 = vlaneseq
      %v1494 = vshrl.u32 %v1493, 7
      %v1495 = vsub.s32 %v1492, %v1494
      %v1496 = vrot.slane %v1489, %v1495
      %v1497 = vpack.c.bf16 %v1438, %v1438
      %v1499 = vunpack.c.l.s4 1983009808
      %v1500 = vunpack.c.0.s8 %v1499
      %v1501 = vlaneseq
      %v1502 = vshrl.u32 %v1501, 7
      %v1503 = vsub.s32 %v1500, %v1502
      %v1504 = vrot.slane %v1497, %v1503
      %v1505 = vcombine.low %v1496, %v1504
      %v1506 = vcombine.high %v1496, %v1504
      %v1508 = vunpack.c.l.s4 1934713408
      %v1509 = vunpack.c.0.s8 %v1508
      %v1510 = vlaneseq
      %v1511 = vshrl.u32 %v1510, 7
      %v1512 = vsub.s32 %v1509, %v1511
      %v1513 = vrot.slane %v1505, %v1512
      %v1515 = vunpack.c.l.s4 1934713408
      %v1516 = vunpack.c.0.s8 %v1515
      %v1517 = vlaneseq
      %v1518 = vshrl.u32 %v1517, 7
      %v1519 = vsub.s32 %v1516, %v1518
      %v1520 = vrot.slane %v1506, %v1519
      %v1521 = vcombine.high %v1513, 0
      %v1522 = vcombine.high %v1520, 0
      %v1523 = vpack.c.bf16 %v1392, %v1392
      %v1525 = vunpack.c.l.s4 1983009808
      %v1526 = vunpack.c.0.s8 %v1525
      %v1527 = vlaneseq
      %v1528 = vshrl.u32 %v1527, 7
      %v1529 = vsub.s32 %v1526, %v1528
      %v1530 = vrot.slane %v1523, %v1529
      %v1531 = vpack.c.bf16 %v1484, %v1484
      %v1533 = vunpack.c.l.s4 1983009808
      %v1534 = vunpack.c.0.s8 %v1533
      %v1535 = vlaneseq
      %v1536 = vshrl.u32 %v1535, 7
      %v1537 = vsub.s32 %v1534, %v1536
      %v1538 = vrot.slane %v1531, %v1537
      %v1539 = vcombine.low %v1530, %v1538
      %v1540 = vcombine.high %v1530, %v1538
      %v1542 = vunpack.c.l.s4 1934713408
      %v1543 = vunpack.c.0.s8 %v1542
      %v1544 = vlaneseq
      %v1545 = vshrl.u32 %v1544, 7
      %v1546 = vsub.s32 %v1543, %v1545
      %v1547 = vrot.slane %v1539, %v1546
      %v1549 = vunpack.c.l.s4 1934713408
      %v1550 = vunpack.c.0.s8 %v1549
      %v1551 = vlaneseq
      %v1552 = vshrl.u32 %v1551, 7
      %v1553 = vsub.s32 %v1550, %v1552
      %v1554 = vrot.slane %v1540, %v1553
      %v1555 = vcombine.high %v1547, 0
      %v1556 = vcombine.high %v1554, 0
      %v1559 = vpack.i.b16 %v1547, %v1513
      %v1561 = vshrl.u32 %v1513, 16
      %v1562 = vshrl.u32 %v1547, 16
      %v1563 = vpack.i.b16 %v1562, %v1561
      %v1567 = vpack.i.b16 %v1555, %v1521
      %v1569 = vshrl.u32 %v1521, 16
      %v1570 = vshrl.u32 %v1555, 16
      %v1571 = vpack.i.b16 %v1570, %v1569
      %v1575 = vpack.i.b16 %v1554, %v1520
      %v1577 = vshrl.u32 %v1520, 16
      %v1578 = vshrl.u32 %v1554, 16
      %v1579 = vpack.i.b16 %v1578, %v1577
      %v1583 = vpack.i.b16 %v1556, %v1522
      %v1585 = vshrl.u32 %v1522, 16
      %v1586 = vshrl.u32 %v1556, 16
      %v1587 = vpack.i.b16 %v1586, %v1585
      %v1589 = vcombine.low %v1559, %v1575
      %v1591 = vunpack.c.l.s4 1983009808
      %v1592 = vunpack.c.0.s8 %v1591
      %v1593 = vlaneseq
      %v1594 = vshrl.u32 %v1593, 7
      %v1595 = vsub.s32 %v1592, %v1594
      %v1596 = vrot.slane %v1589, %v1595
      %v1597 = vcombine.low %v1567, %v1583
      %v1599 = vunpack.c.l.s4 1983009808
      %v1600 = vunpack.c.0.s8 %v1599
      %v1601 = vlaneseq
      %v1602 = vshrl.u32 %v1601, 7
      %v1603 = vsub.s32 %v1600, %v1602
      %v1604 = vrot.slane %v1597, %v1603
      %v1605 = vcombine.low %v1596, %v1604
      %v1607 = vunpack.c.l.s4 1934713408
      %v1608 = vunpack.c.0.s8 %v1607
      %v1609 = vlaneseq
      %v1610 = vshrl.u32 %v1609, 7
      %v1611 = vsub.s32 %v1608, %v1610
      %v1612 = vrot.slane %v1605, %v1611
      %v1613 = vcombine.high %v1612, 0
      %v1614 = vcombine.low %v1563, %v1579
      %v1616 = vunpack.c.l.s4 1983009808
      %v1617 = vunpack.c.0.s8 %v1616
      %v1618 = vlaneseq
      %v1619 = vshrl.u32 %v1618, 7
      %v1620 = vsub.s32 %v1617, %v1619
      %v1621 = vrot.slane %v1614, %v1620
      %v1622 = vcombine.low %v1571, %v1587
      %v1624 = vunpack.c.l.s4 1983009808
      %v1625 = vunpack.c.0.s8 %v1624
      %v1626 = vlaneseq
      %v1627 = vshrl.u32 %v1626, 7
      %v1628 = vsub.s32 %v1625, %v1627
      %v1629 = vrot.slane %v1622, %v1628
      %v1630 = vcombine.low %v1621, %v1629
      %v1632 = vunpack.c.l.s4 1934713408
      %v1633 = vunpack.c.0.s8 %v1632
      %v1634 = vlaneseq
      %v1635 = vshrl.u32 %v1634, 7
      %v1636 = vsub.s32 %v1633, %v1635
      %v1637 = vrot.slane %v1630, %v1636
      %v1638 = vcombine.high %v1637, 0
      %v1641 = vpack.i.b16 %v1637, %v1612
      %v1642 = vshrl.u32 %v1612, 16
      %v1643 = vshrl.u32 %v1637, 16
      %v1644 = vpack.i.b16 %v1643, %v1642
      %v1647 = vpack.i.b16 %v1638, %v1613
      %v1648 = vshrl.u32 %v1613, 16
      %v1649 = vshrl.u32 %v1638, 16
      %v1650 = vpack.i.b16 %v1649, %v1648
      %1651 = vrot.lane.b32.xlu0 %v1644, 8
      %v1652 = vpop.permute.xlu0 %1651
      %1653 = vrot.lane.b32.xlu0 %v1647, 16
      %v1654 = vpop.permute.xlu0 %1653
      %1655 = vrot.lane.b32.xlu0 %v1650, 24
      %v1656 = vpop.permute.xlu0 %1655
      %v1659 = vsel %vm1055, %v1641, %v1652
      %vm1660 = vcmask 130048
      %v1662 = vsel %vm1660, %v1659, %v1654
      %vm1663 = vcmask 195584
      %v1665 = vsel %vm1663, %v1662, %v1656
      %v1666 = vld [vmem:[%s4] sm:$0xf]
      %v1667 = vld [vmem:[%s4 + $0x4] sm:$0xf]
      %v1668 = vld [vmem:[%s4 + $0x8] sm:$0xf]
      %v1669 = vld [vmem:[%s4 + $0xc] sm:$0xf]
      %v1670 = vld [vmem:[%s5] sm:$0x1]
      %v1672 = vlaneseq
      %v1673 = vshrl.u32 %v1672, 7
      %v1674 = vsub.s32 0, %v1673
      %v1675 = vrot.slane %v1670, %v1674
      %v1681 = vunpack.c.l.b16 %v1666
      %v1682 = vunpack.c.l.b16 %v1667
      %v1683 = vunpack.c.l.b16 %v1668
      %v1684 = vunpack.c.l.b16 %v1669
      %v1685 = vpack.c.b16 %v1682, %v1681
      %v1686 = vpack.c.b16 %v1684, %v1683
      %v1689 = vsel %vm502, %v1665, 0
      %1691 = vmatprep.subr.bf16.mxu0 0
      %1692 = vmatpush1.bf16.msra.mxu0 0
      %1693 = vmatprep.subr.bf16.mxu0 0
      %1694 = vmatpush1.bf16.msra.mxu0 0
      %1695 = vmatprep.subr.bf16.mxu0 0
      %1696 = vmatpush1.bf16.msra.mxu0 0
      %1697 = vmatprep.subr.bf16.mxu0 0
      %1698 = vmatpush1.bf16.msra.mxu0 0
      %1699 = vmatprep.subr.bf16.mxu0 0
      %1700 = vmatpush1.bf16.msra.mxu0 0
      %1701 = vmatprep.subr.bf16.mxu0 0
      %1702 = vmatpush1.bf16.msra.mxu0 0
      %1703 = vmatprep.subr.bf16.mxu0 0
      %1704 = vmatpush1.bf16.msra.mxu0 %v1686
      %1705 = vmatprep.subr.bf16.mxu0 0
      %1706 = vmatpush1.bf16.msra.mxu0 %v1685
      %1707 = vmatprep.subr.bf16.mxu0 0
      %1708 = vmatpush2.bf16.msra.mxu0 0
      %1709 = vmatprep.subr.bf16.mxu0 0
      %1710 = vmatpush2.bf16.msra.mxu0 0
      %1711 = vmatprep.subr.bf16.mxu0 0
      %1712 = vmatpush2.bf16.msra.mxu0 0
      %1713 = vmatprep.subr.bf16.mxu0 0
      %1714 = vmatpush2.bf16.msra.mxu0 0
      %1715 = vmatprep.subr.bf16.mxu0 0
      %1716 = vmatpush2.bf16.msra.mxu0 0
      %1717 = vmatprep.subr.bf16.mxu0 0
      %1718 = vmatpush2.bf16.msra.mxu0 0
      %1719 = vmatprep.subr.bf16.mxu0 0
      %1720 = vmatpush2.bf16.msra.mxu0 0
      %1721 = vmatprep.subr.bf16.mxu0 0
      %1722 = vmatpush2.bf16.msra.mxu0 0
      %1723 = vmatprep.mubr.bf16.mxu0 0
      %1724 = vmatmul.mubr.bf16.gmra.mxu0 %v1689
      %v1725 = vpop.f32.mrf.mxu0
      %v1726 = vadd.f32 %v1675, %v1725
      %v1727 = vpop.f32.mrf.mxu0
      %v1728 = vpop.f32.mrf.mxu0
      %v1729 = vpop.f32.mrf.mxu0
      %1730 = vdwg.mxu0
      %v1731 = vunpack.c.l.bf16 %v478
      %v1732 = vadd.f32 %v1731, %v1726
      %v1733 = vsel %vm502, %v1732, 0.0
      %1734 = vadd.xlane.f32.xlu0 %v1733
      %v1735 = vpop.xlane.xlu0 %1734
      %v1736 = vrcp.pop 32.0
      %v1737 = vmul.f32 %v1735, %v1736
      %v1738 = vsub.f32 %v1732, %v1737
      %v1739 = vmul.f32 %v1738, %v1738
      %v1740 = vsel %vm502, %v1739, 0.0
      %1741 = vadd.xlane.f32.xlu0 %v1740
      %v1742 = vpop.xlane.xlu0 %1741
      %v1743 = vmul.f32 %v1742, %v1736
      %v1744 = vadd.f32 %v1743, 1e-05
      %v1745 = vrsqrt.pop %v1744
      %v1746 = vmul.f32 %v1738, %v1745
      %v1747 = vld [vmem:[%s6] sm:$0x1]
      %v1749 = vlaneseq
      %v1750 = vshrl.u32 %v1749, 7
      %v1751 = vsub.s32 0, %v1750
      %v1752 = vrot.slane %v1747, %v1751
      %v1754 = vmul.f32 %v1746, %v1752
      %v1755 = vld [vmem:[%s7] sm:$0x1]
      %v1757 = vlaneseq
      %v1758 = vshrl.u32 %v1757, 7
      %v1759 = vsub.s32 0, %v1758
      %v1760 = vrot.slane %v1755, %v1759
      %v1762 = vadd.f32 %v1754, %v1760
      %v1763 = vpack.c.bf16 %v1762, %v1762
      %v1764 = vld [vmem:[%s8] sm:$0xff]
      %v1765 = vld [vmem:[%s8 + $0x8] sm:$0xff]
      %v1766 = vld [vmem:[%s8 + $0x10] sm:$0xff]
      %v1767 = vld [vmem:[%s8 + $0x18] sm:$0xff]
      %v1768 = vld [vmem:[%s8 + $0x20] sm:$0xff]
      %v1769 = vld [vmem:[%s8 + $0x28] sm:$0xff]
      %v1770 = vld [vmem:[%s8 + $0x30] sm:$0xff]
      %v1771 = vld [vmem:[%s8 + $0x38] sm:$0xff]
      %v1772 = vld [vmem:[%s8 + $0x40] sm:$0xff]
      %v1773 = vld [vmem:[%s8 + $0x48] sm:$0xff]
      %v1774 = vld [vmem:[%s8 + $0x50] sm:$0xff]
      %v1775 = vld [vmem:[%s8 + $0x58] sm:$0xff]
      %v1776 = vld [vmem:[%s8 + $0x60] sm:$0xff]
      %v1777 = vld [vmem:[%s8 + $0x68] sm:$0xff]
      %v1778 = vld [vmem:[%s8 + $0x70] sm:$0xff]
      %v1779 = vld [vmem:[%s8 + $0x78] sm:$0xff]
      %v1780 = vld [vmem:[%s8 + $0x80] sm:$0xff]
      %v1781 = vld [vmem:[%s8 + $0x88] sm:$0xff]
      %v1782 = vld [vmem:[%s8 + $0x90] sm:$0xff]
      %v1783 = vld [vmem:[%s8 + $0x98] sm:$0xff]
      %v1784 = vld [vmem:[%s8 + $0xa0] sm:$0xff]
      %v1785 = vld [vmem:[%s8 + $0xa8] sm:$0xff]
      %v1786 = vld [vmem:[%s8 + $0xb0] sm:$0xff]
      %v1787 = vld [vmem:[%s8 + $0xb8] sm:$0xff]
      %v1788 = vld [vmem:[%s8 + $0xc0] sm:$0xff]
      %v1789 = vld [vmem:[%s8 + $0xc8] sm:$0xff]
      %v1790 = vld [vmem:[%s8 + $0xd0] sm:$0xff]
      %v1791 = vld [vmem:[%s8 + $0xd8] sm:$0xff]
      %v1792 = vld [vmem:[%s8 + $0xe0] sm:$0xff]
      %v1793 = vld [vmem:[%s8 + $0xe8] sm:$0xff]
      %v1794 = vld [vmem:[%s8 + $0xf0] sm:$0xff]
      %v1795 = vld [vmem:[%s8 + $0xf8] sm:$0xff]
      %v1796 = vld [vmem:[%s9] sm:$0xff]
      %v1797 = vld [vmem:[%s9 + $0x8] sm:$0xff]
      %v1800 = vlaneseq
      %v1801 = vshrl.u32 %v1800, 7
      %v1802 = vsub.s32 0, %v1801
      %v1803 = vrot.slane %v1796, %v1802
      %v1804 = vlaneseq
      %v1805 = vshrl.u32 %v1804, 7
      %v1806 = vsub.s32 1, %v1805
      %v1807 = vrot.slane %v1796, %v1806
      %v1808 = vlaneseq
      %v1809 = vshrl.u32 %v1808, 7
      %v1810 = vsub.s32 2, %v1809
      %v1811 = vrot.slane %v1796, %v1810
      %v1812 = vlaneseq
      %v1813 = vshrl.u32 %v1812, 7
      %v1814 = vsub.s32 3, %v1813
      %v1815 = vrot.slane %v1796, %v1814
      %v1816 = vlaneseq
      %v1817 = vshrl.u32 %v1816, 7
      %v1818 = vsub.s32 4, %v1817
      %v1819 = vrot.slane %v1796, %v1818
      %v1820 = vlaneseq
      %v1821 = vshrl.u32 %v1820, 7
      %v1822 = vsub.s32 5, %v1821
      %v1823 = vrot.slane %v1796, %v1822
      %v1824 = vlaneseq
      %v1825 = vshrl.u32 %v1824, 7
      %v1826 = vsub.s32 6, %v1825
      %v1827 = vrot.slane %v1796, %v1826
      %v1828 = vlaneseq
      %v1829 = vshrl.u32 %v1828, 7
      %v1830 = vsub.s32 7, %v1829
      %v1831 = vrot.slane %v1796, %v1830
      %v1832 = vlaneseq
      %v1833 = vshrl.u32 %v1832, 7
      %v1834 = vsub.s32 0, %v1833
      %v1835 = vrot.slane %v1797, %v1834
      %v1836 = vlaneseq
      %v1837 = vshrl.u32 %v1836, 7
      %v1838 = vsub.s32 1, %v1837
      %v1839 = vrot.slane %v1797, %v1838
      %v1840 = vlaneseq
      %v1841 = vshrl.u32 %v1840, 7
      %v1842 = vsub.s32 2, %v1841
      %v1843 = vrot.slane %v1797, %v1842
      %v1844 = vlaneseq
      %v1845 = vshrl.u32 %v1844, 7
      %v1846 = vsub.s32 3, %v1845
      %v1847 = vrot.slane %v1797, %v1846
      %v1848 = vlaneseq
      %v1849 = vshrl.u32 %v1848, 7
      %v1850 = vsub.s32 4, %v1849
      %v1851 = vrot.slane %v1797, %v1850
      %v1852 = vlaneseq
      %v1853 = vshrl.u32 %v1852, 7
      %v1854 = vsub.s32 5, %v1853
      %v1855 = vrot.slane %v1797, %v1854
      %v1856 = vlaneseq
      %v1857 = vshrl.u32 %v1856, 7
      %v1858 = vsub.s32 6, %v1857
      %v1859 = vrot.slane %v1797, %v1858
      %v1860 = vlaneseq
      %v1861 = vshrl.u32 %v1860, 7
      %v1862 = vsub.s32 7, %v1861
      %v1863 = vrot.slane %v1797, %v1862
      %v1912 = vunpack.c.l.b16 %v1764
      %v1913 = vunpack.c.h.b16 %v1764
      %v1914 = vunpack.c.l.b16 %v1765
      %v1915 = vunpack.c.h.b16 %v1765
      %v1916 = vunpack.c.l.b16 %v1766
      %v1917 = vunpack.c.h.b16 %v1766
      %v1918 = vunpack.c.l.b16 %v1767
      %v1919 = vunpack.c.h.b16 %v1767
      %v1920 = vunpack.c.l.b16 %v1768
      %v1921 = vunpack.c.h.b16 %v1768
      %v1922 = vunpack.c.l.b16 %v1769
      %v1923 = vunpack.c.h.b16 %v1769
      %v1924 = vunpack.c.l.b16 %v1770
      %v1925 = vunpack.c.h.b16 %v1770
      %v1926 = vunpack.c.l.b16 %v1771
      %v1927 = vunpack.c.h.b16 %v1771
      %v1928 = vunpack.c.l.b16 %v1772
      %v1929 = vunpack.c.h.b16 %v1772
      %v1930 = vunpack.c.l.b16 %v1773
      %v1931 = vunpack.c.h.b16 %v1773
      %v1932 = vunpack.c.l.b16 %v1774
      %v1933 = vunpack.c.h.b16 %v1774
      %v1934 = vunpack.c.l.b16 %v1775
      %v1935 = vunpack.c.h.b16 %v1775
      %v1936 = vunpack.c.l.b16 %v1776
      %v1937 = vunpack.c.h.b16 %v1776
      %v1938 = vunpack.c.l.b16 %v1777
      %v1939 = vunpack.c.h.b16 %v1777
      %v1940 = vunpack.c.l.b16 %v1778
      %v1941 = vunpack.c.h.b16 %v1778
      %v1942 = vunpack.c.l.b16 %v1779
      %v1943 = vunpack.c.h.b16 %v1779
      %v1944 = vunpack.c.l.b16 %v1780
      %v1945 = vunpack.c.h.b16 %v1780
      %v1946 = vunpack.c.l.b16 %v1781
      %v1947 = vunpack.c.h.b16 %v1781
      %v1948 = vunpack.c.l.b16 %v1782
      %v1949 = vunpack.c.h.b16 %v1782
      %v1950 = vunpack.c.l.b16 %v1783
      %v1951 = vunpack.c.h.b16 %v1783
      %v1952 = vunpack.c.l.b16 %v1784
      %v1953 = vunpack.c.h.b16 %v1784
      %v1954 = vunpack.c.l.b16 %v1785
      %v1955 = vunpack.c.h.b16 %v1785
      %v1956 = vunpack.c.l.b16 %v1786
      %v1957 = vunpack.c.h.b16 %v1786
      %v1958 = vunpack.c.l.b16 %v1787
      %v1959 = vunpack.c.h.b16 %v1787
      %v1960 = vunpack.c.l.b16 %v1788
      %v1961 = vunpack.c.h.b16 %v1788
      %v1962 = vunpack.c.l.b16 %v1789
      %v1963 = vunpack.c.h.b16 %v1789
      %v1964 = vunpack.c.l.b16 %v1790
      %v1965 = vunpack.c.h.b16 %v1790
      %v1966 = vunpack.c.l.b16 %v1791
      %v1967 = vunpack.c.h.b16 %v1791
      %v1968 = vunpack.c.l.b16 %v1792
      %v1969 = vunpack.c.h.b16 %v1792
      %v1970 = vunpack.c.l.b16 %v1793
      %v1971 = vunpack.c.h.b16 %v1793
      %v1972 = vunpack.c.l.b16 %v1794
      %v1973 = vunpack.c.h.b16 %v1794
      %v1974 = vunpack.c.l.b16 %v1795
      %v1975 = vunpack.c.h.b16 %v1795
      %v1976 = vpack.c.b16 %v1928, %v1912
      %v1977 = vpack.c.b16 %v1929, %v1913
      %v1978 = vpack.c.b16 %v1930, %v1914
      %v1979 = vpack.c.b16 %v1931, %v1915
      %v1980 = vpack.c.b16 %v1932, %v1916
      %v1981 = vpack.c.b16 %v1933, %v1917
      %v1982 = vpack.c.b16 %v1934, %v1918
      %v1983 = vpack.c.b16 %v1935, %v1919
      %v1984 = vpack.c.b16 %v1936, %v1920
      %v1985 = vpack.c.b16 %v1937, %v1921
      %v1986 = vpack.c.b16 %v1938, %v1922
      %v1987 = vpack.c.b16 %v1939, %v1923
      %v1988 = vpack.c.b16 %v1940, %v1924
      %v1989 = vpack.c.b16 %v1941, %v1925
      %v1990 = vpack.c.b16 %v1942, %v1926
      %v1991 = vpack.c.b16 %v1943, %v1927
      %v1992 = vpack.c.b16 %v1960, %v1944
      %v1993 = vpack.c.b16 %v1961, %v1945
      %v1994 = vpack.c.b16 %v1962, %v1946
      %v1995 = vpack.c.b16 %v1963, %v1947
      %v1996 = vpack.c.b16 %v1964, %v1948
      %v1997 = vpack.c.b16 %v1965, %v1949
      %v1998 = vpack.c.b16 %v1966, %v1950
      %v1999 = vpack.c.b16 %v1967, %v1951
      %v2000 = vpack.c.b16 %v1968, %v1952
      %v2001 = vpack.c.b16 %v1969, %v1953
      %v2002 = vpack.c.b16 %v1970, %v1954
      %v2003 = vpack.c.b16 %v1971, %v1955
      %v2004 = vpack.c.b16 %v1972, %v1956
      %v2005 = vpack.c.b16 %v1973, %v1957
      %v2006 = vpack.c.b16 %v1974, %v1958
      %v2007 = vpack.c.b16 %v1975, %v1959
      %v2041 = vsel %vm502, %v1763, 0
      %2043 = vmatprep.subr.bf16.mxu0 0
      %2044 = vmatpush1.bf16.msra.mxu0 0
      %2045 = vmatprep.subr.bf16.mxu0 0
      %2046 = vmatpush1.bf16.msra.mxu0 0
      %2047 = vmatprep.subr.bf16.mxu0 0
      %2048 = vmatpush1.bf16.msra.mxu0 0
      %2049 = vmatprep.subr.bf16.mxu0 0
      %2050 = vmatpush1.bf16.msra.mxu0 0
      %2051 = vmatprep.subr.bf16.mxu0 0
      %2052 = vmatpush1.bf16.msra.mxu0 0
      %2053 = vmatprep.subr.bf16.mxu0 0
      %2054 = vmatpush1.bf16.msra.mxu0 0
      %2055 = vmatprep.subr.bf16.mxu0 %v1993
      %2056 = vmatpush1.bf16.msra.mxu0 %v1992
      %2057 = vmatprep.subr.bf16.mxu0 %v1977
      %2058 = vmatpush1.bf16.msra.mxu0 %v1976
      %2059 = vmatprep.subr.bf16.mxu0 0
      %2060 = vmatpush2.bf16.msra.mxu0 0
      %2061 = vmatprep.subr.bf16.mxu0 0
      %2062 = vmatpush2.bf16.msra.mxu0 0
      %2063 = vmatprep.subr.bf16.mxu0 0
      %2064 = vmatpush2.bf16.msra.mxu0 0
      %2065 = vmatprep.subr.bf16.mxu0 0
      %2066 = vmatpush2.bf16.msra.mxu0 0
      %2067 = vmatprep.subr.bf16.mxu0 0
      %2068 = vmatpush2.bf16.msra.mxu0 0
      %2069 = vmatprep.subr.bf16.mxu0 0
      %2070 = vmatpush2.bf16.msra.mxu0 0
      %2071 = vmatprep.subr.bf16.mxu0 0
      %2072 = vmatpush2.bf16.msra.mxu0 0
      %2073 = vmatprep.subr.bf16.mxu0 0
      %2074 = vmatpush2.bf16.msra.mxu0 0
      %2075 = vmatprep.mubr.bf16.mxu0 0
      %2076 = vmatmul.mubr.bf16.gmra.mxu0 %v2041
      %v2077 = vpop.f32.mrf.mxu0
      %v2078 = vadd.f32 %v1803, %v2077
      %v2079 = vpop.f32.mrf.mxu0
      %v2080 = vadd.f32 %v1807, %v2079
      %v2081 = vpop.f32.mrf.mxu0
      %v2082 = vpop.f32.mrf.mxu0
      %2083 = vdwg.mxu0
      %2084 = vmatprep.subr.bf16.mxu0 0
      %2085 = vmatpush1.bf16.msra.mxu0 0
      %2086 = vmatprep.subr.bf16.mxu0 0
      %2087 = vmatpush1.bf16.msra.mxu0 0
      %2088 = vmatprep.subr.bf16.mxu0 0
      %2089 = vmatpush1.bf16.msra.mxu0 0
      %2090 = vmatprep.subr.bf16.mxu0 0
      %2091 = vmatpush1.bf16.msra.mxu0 0
      %2092 = vmatprep.subr.bf16.mxu0 0
      %2093 = vmatpush1.bf16.msra.mxu0 0
      %2094 = vmatprep.subr.bf16.mxu0 0
      %2095 = vmatpush1.bf16.msra.mxu0 0
      %2096 = vmatprep.subr.bf16.mxu0 %v1995
      %2097 = vmatpush1.bf16.msra.mxu0 %v1994
      %2098 = vmatprep.subr.bf16.mxu0 %v1979
      %2099 = vmatpush1.bf16.msra.mxu0 %v1978
      %2100 = vmatprep.subr.bf16.mxu0 0
      %2101 = vmatpush2.bf16.msra.mxu0 0
      %2102 = vmatprep.subr.bf16.mxu0 0
      %2103 = vmatpush2.bf16.msra.mxu0 0
      %2104 = vmatprep.subr.bf16.mxu0 0
      %2105 = vmatpush2.bf16.msra.mxu0 0
      %2106 = vmatprep.subr.bf16.mxu0 0
      %2107 = vmatpush2.bf16.msra.mxu0 0
      %2108 = vmatprep.subr.bf16.mxu0 0
      %2109 = vmatpush2.bf16.msra.mxu0 0
      %2110 = vmatprep.subr.bf16.mxu0 0
      %2111 = vmatpush2.bf16.msra.mxu0 0
      %2112 = vmatprep.subr.bf16.mxu0 0
      %2113 = vmatpush2.bf16.msra.mxu0 0
      %2114 = vmatprep.subr.bf16.mxu0 0
      %2115 = vmatpush2.bf16.msra.mxu0 0
      %2116 = vmatprep.mubr.bf16.mxu0 0
      %2117 = vmatmul.mubr.bf16.gmra.mxu0 %v2041
      %v2118 = vpop.f32.mrf.mxu0
      %v2119 = vadd.f32 %v1811, %v2118
      %v2120 = vpop.f32.mrf.mxu0
      %v2121 = vadd.f32 %v1815, %v2120
      %v2122 = vpop.f32.mrf.mxu0
      %v2123 = vpop.f32.mrf.mxu0
      %2124 = vdwg.mxu0
      %2125 = vmatprep.subr.bf16.mxu0 0
      %2126 = vmatpush1.bf16.msra.mxu0 0
      %2127 = vmatprep.subr.bf16.mxu0 0
      %2128 = vmatpush1.bf16.msra.mxu0 0
      %2129 = vmatprep.subr.bf16.mxu0 0
      %2130 = vmatpush1.bf16.msra.mxu0 0
      %2131 = vmatprep.subr.bf16.mxu0 0
      %2132 = vmatpush1.bf16.msra.mxu0 0
      %2133 = vmatprep.subr.bf16.mxu0 0
      %2134 = vmatpush1.bf16.msra.mxu0 0
      %2135 = vmatprep.subr.bf16.mxu0 0
      %2136 = vmatpush1.bf16.msra.mxu0 0
      %2137 = vmatprep.subr.bf16.mxu0 %v1997
      %2138 = vmatpush1.bf16.msra.mxu0 %v1996
      %2139 = vmatprep.subr.bf16.mxu0 %v1981
      %2140 = vmatpush1.bf16.msra.mxu0 %v1980
      %2141 = vmatprep.subr.bf16.mxu0 0
      %2142 = vmatpush2.bf16.msra.mxu0 0
      %2143 = vmatprep.subr.bf16.mxu0 0
      %2144 = vmatpush2.bf16.msra.mxu0 0
      %2145 = vmatprep.subr.bf16.mxu0 0
      %2146 = vmatpush2.bf16.msra.mxu0 0
      %2147 = vmatprep.subr.bf16.mxu0 0
      %2148 = vmatpush2.bf16.msra.mxu0 0
      %2149 = vmatprep.subr.bf16.mxu0 0
      %2150 = vmatpush2.bf16.msra.mxu0 0
      %2151 = vmatprep.subr.bf16.mxu0 0
      %2152 = vmatpush2.bf16.msra.mxu0 0
      %2153 = vmatprep.subr.bf16.mxu0 0
      %2154 = vmatpush2.bf16.msra.mxu0 0
      %2155 = vmatprep.subr.bf16.mxu0 0
      %2156 = vmatpush2.bf16.msra.mxu0 0
      %2157 = vmatprep.mubr.bf16.mxu0 0
      %2158 = vmatmul.mubr.bf16.gmra.mxu0 %v2041
      %v2159 = vpop.f32.mrf.mxu0
      %v2160 = vadd.f32 %v1819, %v2159
      %v2161 = vpop.f32.mrf.mxu0
      %v2162 = vadd.f32 %v1823, %v2161
      %v2163 = vpop.f32.mrf.mxu0
      %v2164 = vpop.f32.mrf.mxu0
      %2165 = vdwg.mxu0
      %2166 = vmatprep.subr.bf16.mxu0 0
      %2167 = vmatpush1.bf16.msra.mxu0 0
      %2168 = vmatprep.subr.bf16.mxu0 0
      %2169 = vmatpush1.bf16.msra.mxu0 0
      %2170 = vmatprep.subr.bf16.mxu0 0
      %2171 = vmatpush1.bf16.msra.mxu0 0
      %2172 = vmatprep.subr.bf16.mxu0 0
      %2173 = vmatpush1.bf16.msra.mxu0 0
      %2174 = vmatprep.subr.bf16.mxu0 0
      %2175 = vmatpush1.bf16.msra.mxu0 0
      %2176 = vmatprep.subr.bf16.mxu0 0
      %2177 = vmatpush1.bf16.msra.mxu0 0
      %2178 = vmatprep.subr.bf16.mxu0 %v1999
      %2179 = vmatpush1.bf16.msra.mxu0 %v1998
      %2180 = vmatprep.subr.bf16.mxu0 %v1983
      %2181 = vmatpush1.bf16.msra.mxu0 %v1982
      %2182 = vmatprep.subr.bf16.mxu0 0
      %2183 = vmatpush2.bf16.msra.mxu0 0
      %2184 = vmatprep.subr.bf16.mxu0 0
      %2185 = vmatpush2.bf16.msra.mxu0 0
      %2186 = vmatprep.subr.bf16.mxu0 0
      %2187 = vmatpush2.bf16.msra.mxu0 0
      %2188 = vmatprep.subr.bf16.mxu0 0
      %2189 = vmatpush2.bf16.msra.mxu0 0
      %2190 = vmatprep.subr.bf16.mxu0 0
      %2191 = vmatpush2.bf16.msra.mxu0 0
      %2192 = vmatprep.subr.bf16.mxu0 0
      %2193 = vmatpush2.bf16.msra.mxu0 0
      %2194 = vmatprep.subr.bf16.mxu0 0
      %2195 = vmatpush2.bf16.msra.mxu0 0
      %2196 = vmatprep.subr.bf16.mxu0 0
      %2197 = vmatpush2.bf16.msra.mxu0 0
      %2198 = vmatprep.mubr.bf16.mxu0 0
      %2199 = vmatmul.mubr.bf16.gmra.mxu0 %v2041
      %v2200 = vpop.f32.mrf.mxu0
      %v2201 = vadd.f32 %v1827, %v2200
      %v2202 = vpop.f32.mrf.mxu0
      %v2203 = vadd.f32 %v1831, %v2202
      %v2204 = vpop.f32.mrf.mxu0
      %v2205 = vpop.f32.mrf.mxu0
      %2206 = vdwg.mxu0
      %2207 = vmatprep.subr.bf16.mxu0 0
      %2208 = vmatpush1.bf16.msra.mxu0 0
      %2209 = vmatprep.subr.bf16.mxu0 0
      %2210 = vmatpush1.bf16.msra.mxu0 0
      %2211 = vmatprep.subr.bf16.mxu0 0
      %2212 = vmatpush1.bf16.msra.mxu0 0
      %2213 = vmatprep.subr.bf16.mxu0 0
      %2214 = vmatpush1.bf16.msra.mxu0 0
      %2215 = vmatprep.subr.bf16.mxu0 0
      %2216 = vmatpush1.bf16.msra.mxu0 0
      %2217 = vmatprep.subr.bf16.mxu0 0
      %2218 = vmatpush1.bf16.msra.mxu0 0
      %2219 = vmatprep.subr.bf16.mxu0 %v2001
      %2220 = vmatpush1.bf16.msra.mxu0 %v2000
      %2221 = vmatprep.subr.bf16.mxu0 %v1985
      %2222 = vmatpush1.bf16.msra.mxu0 %v1984
      %2223 = vmatprep.subr.bf16.mxu0 0
      %2224 = vmatpush2.bf16.msra.mxu0 0
      %2225 = vmatprep.subr.bf16.mxu0 0
      %2226 = vmatpush2.bf16.msra.mxu0 0
      %2227 = vmatprep.subr.bf16.mxu0 0
      %2228 = vmatpush2.bf16.msra.mxu0 0
      %2229 = vmatprep.subr.bf16.mxu0 0
      %2230 = vmatpush2.bf16.msra.mxu0 0
      %2231 = vmatprep.subr.bf16.mxu0 0
      %2232 = vmatpush2.bf16.msra.mxu0 0
      %2233 = vmatprep.subr.bf16.mxu0 0
      %2234 = vmatpush2.bf16.msra.mxu0 0
      %2235 = vmatprep.subr.bf16.mxu0 0
      %2236 = vmatpush2.bf16.msra.mxu0 0
      %2237 = vmatprep.subr.bf16.mxu0 0
      %2238 = vmatpush2.bf16.msra.mxu0 0
      %2239 = vmatprep.mubr.bf16.mxu0 0
      %2240 = vmatmul.mubr.bf16.gmra.mxu0 %v2041
      %v2241 = vpop.f32.mrf.mxu0
      %v2242 = vadd.f32 %v1835, %v2241
      %v2243 = vpop.f32.mrf.mxu0
      %v2244 = vadd.f32 %v1839, %v2243
      %v2245 = vpop.f32.mrf.mxu0
      %v2246 = vpop.f32.mrf.mxu0
      %2247 = vdwg.mxu0
      %2248 = vmatprep.subr.bf16.mxu0 0
      %2249 = vmatpush1.bf16.msra.mxu0 0
      %2250 = vmatprep.subr.bf16.mxu0 0
      %2251 = vmatpush1.bf16.msra.mxu0 0
      %2252 = vmatprep.subr.bf16.mxu0 0
      %2253 = vmatpush1.bf16.msra.mxu0 0
      %2254 = vmatprep.subr.bf16.mxu0 0
      %2255 = vmatpush1.bf16.msra.mxu0 0
      %2256 = vmatprep.subr.bf16.mxu0 0
      %2257 = vmatpush1.bf16.msra.mxu0 0
      %2258 = vmatprep.subr.bf16.mxu0 0
      %2259 = vmatpush1.bf16.msra.mxu0 0
      %2260 = vmatprep.subr.bf16.mxu0 %v2003
      %2261 = vmatpush1.bf16.msra.mxu0 %v2002
      %2262 = vmatprep.subr.bf16.mxu0 %v1987
      %2263 = vmatpush1.bf16.msra.mxu0 %v1986
      %2264 = vmatprep.subr.bf16.mxu0 0
      %2265 = vmatpush2.bf16.msra.mxu0 0
      %2266 = vmatprep.subr.bf16.mxu0 0
      %2267 = vmatpush2.bf16.msra.mxu0 0
      %2268 = vmatprep.subr.bf16.mxu0 0
      %2269 = vmatpush2.bf16.msra.mxu0 0
      %2270 = vmatprep.subr.bf16.mxu0 0
      %2271 = vmatpush2.bf16.msra.mxu0 0
      %2272 = vmatprep.subr.bf16.mxu0 0
      %2273 = vmatpush2.bf16.msra.mxu0 0
      %2274 = vmatprep.subr.bf16.mxu0 0
      %2275 = vmatpush2.bf16.msra.mxu0 0
      %2276 = vmatprep.subr.bf16.mxu0 0
      %2277 = vmatpush2.bf16.msra.mxu0 0
      %2278 = vmatprep.subr.bf16.mxu0 0
      %2279 = vmatpush2.bf16.msra.mxu0 0
      %2280 = vmatprep.mubr.bf16.mxu0 0
      %2281 = vmatmul.mubr.bf16.gmra.mxu0 %v2041
      %v2282 = vpop.f32.mrf.mxu0
      %v2283 = vadd.f32 %v1843, %v2282
      %v2284 = vpop.f32.mrf.mxu0
      %v2285 = vadd.f32 %v1847, %v2284
      %v2286 = vpop.f32.mrf.mxu0
      %v2287 = vpop.f32.mrf.mxu0
      %2288 = vdwg.mxu0
      %2289 = vmatprep.subr.bf16.mxu0 0
      %2290 = vmatpush1.bf16.msra.mxu0 0
      %2291 = vmatprep.subr.bf16.mxu0 0
      %2292 = vmatpush1.bf16.msra.mxu0 0
      %2293 = vmatprep.subr.bf16.mxu0 0
      %2294 = vmatpush1.bf16.msra.mxu0 0
      %2295 = vmatprep.subr.bf16.mxu0 0
      %2296 = vmatpush1.bf16.msra.mxu0 0
      %2297 = vmatprep.subr.bf16.mxu0 0
      %2298 = vmatpush1.bf16.msra.mxu0 0
      %2299 = vmatprep.subr.bf16.mxu0 0
      %2300 = vmatpush1.bf16.msra.mxu0 0
      %2301 = vmatprep.subr.bf16.mxu0 %v2005
      %2302 = vmatpush1.bf16.msra.mxu0 %v2004
      %2303 = vmatprep.subr.bf16.mxu0 %v1989
      %2304 = vmatpush1.bf16.msra.mxu0 %v1988
      %2305 = vmatprep.subr.bf16.mxu0 0
      %2306 = vmatpush2.bf16.msra.mxu0 0
      %2307 = vmatprep.subr.bf16.mxu0 0
      %2308 = vmatpush2.bf16.msra.mxu0 0
      %2309 = vmatprep.subr.bf16.mxu0 0
      %2310 = vmatpush2.bf16.msra.mxu0 0
      %2311 = vmatprep.subr.bf16.mxu0 0
      %2312 = vmatpush2.bf16.msra.mxu0 0
      %2313 = vmatprep.subr.bf16.mxu0 0
      %2314 = vmatpush2.bf16.msra.mxu0 0
      %2315 = vmatprep.subr.bf16.mxu0 0
      %2316 = vmatpush2.bf16.msra.mxu0 0
      %2317 = vmatprep.subr.bf16.mxu0 0
      %2318 = vmatpush2.bf16.msra.mxu0 0
      %2319 = vmatprep.subr.bf16.mxu0 0
      %2320 = vmatpush2.bf16.msra.mxu0 0
      %2321 = vmatprep.mubr.bf16.mxu0 0
      %2322 = vmatmul.mubr.bf16.gmra.mxu0 %v2041
      %v2323 = vpop.f32.mrf.mxu0
      %v2324 = vadd.f32 %v1851, %v2323
      %v2325 = vpop.f32.mrf.mxu0
      %v2326 = vadd.f32 %v1855, %v2325
      %v2327 = vpop.f32.mrf.mxu0
      %v2328 = vpop.f32.mrf.mxu0
      %2329 = vdwg.mxu0
      %2330 = vmatprep.subr.bf16.mxu0 0
      %2331 = vmatpush1.bf16.msra.mxu0 0
      %2332 = vmatprep.subr.bf16.mxu0 0
      %2333 = vmatpush1.bf16.msra.mxu0 0
      %2334 = vmatprep.subr.bf16.mxu0 0
      %2335 = vmatpush1.bf16.msra.mxu0 0
      %2336 = vmatprep.subr.bf16.mxu0 0
      %2337 = vmatpush1.bf16.msra.mxu0 0
      %2338 = vmatprep.subr.bf16.mxu0 0
      %2339 = vmatpush1.bf16.msra.mxu0 0
      %2340 = vmatprep.subr.bf16.mxu0 0
      %2341 = vmatpush1.bf16.msra.mxu0 0
      %2342 = vmatprep.subr.bf16.mxu0 %v2007
      %2343 = vmatpush1.bf16.msra.mxu0 %v2006
      %2344 = vmatprep.subr.bf16.mxu0 %v1991
      %2345 = vmatpush1.bf16.msra.mxu0 %v1990
      %2346 = vmatprep.subr.bf16.mxu0 0
      %2347 = vmatpush2.bf16.msra.mxu0 0
      %2348 = vmatprep.subr.bf16.mxu0 0
      %2349 = vmatpush2.bf16.msra.mxu0 0
      %2350 = vmatprep.subr.bf16.mxu0 0
      %2351 = vmatpush2.bf16.msra.mxu0 0
      %2352 = vmatprep.subr.bf16.mxu0 0
      %2353 = vmatpush2.bf16.msra.mxu0 0
      %2354 = vmatprep.subr.bf16.mxu0 0
      %2355 = vmatpush2.bf16.msra.mxu0 0
      %2356 = vmatprep.subr.bf16.mxu0 0
      %2357 = vmatpush2.bf16.msra.mxu0 0
      %2358 = vmatprep.subr.bf16.mxu0 0
      %2359 = vmatpush2.bf16.msra.mxu0 0
      %2360 = vmatprep.subr.bf16.mxu0 0
      %2361 = vmatpush2.bf16.msra.mxu0 0
      %2362 = vmatprep.mubr.bf16.mxu0 0
      %2363 = vmatmul.mubr.bf16.gmra.mxu0 %v2041
      %v2364 = vpop.f32.mrf.mxu0
      %v2365 = vadd.f32 %v1859, %v2364
      %v2366 = vpop.f32.mrf.mxu0
      %v2367 = vadd.f32 %v1863, %v2366
      %v2368 = vpop.f32.mrf.mxu0
      %v2369 = vpop.f32.mrf.mxu0
      %2370 = vdwg.mxu0
      %v2371 = vmax.f32 %v2078, 0.0
      %v2372 = vmax.f32 %v2080, 0.0
      %v2373 = vmax.f32 %v2119, 0.0
      %v2374 = vmax.f32 %v2121, 0.0
      %v2375 = vmax.f32 %v2160, 0.0
      %v2376 = vmax.f32 %v2162, 0.0
      %v2377 = vmax.f32 %v2201, 0.0
      %v2378 = vmax.f32 %v2203, 0.0
      %v2379 = vmax.f32 %v2242, 0.0
      %v2380 = vmax.f32 %v2244, 0.0
      %v2381 = vmax.f32 %v2283, 0.0
      %v2382 = vmax.f32 %v2285, 0.0
      %v2383 = vmax.f32 %v2324, 0.0
      %v2384 = vmax.f32 %v2326, 0.0
      %v2385 = vmax.f32 %v2365, 0.0
      %v2386 = vmax.f32 %v2367, 0.0
      %v2387 = vpack.c.bf16 %v2371, %v2371
      %v2388 = vpack.c.bf16 %v2372, %v2372
      %v2389 = vpack.c.bf16 %v2373, %v2373
      %v2390 = vpack.c.bf16 %v2374, %v2374
      %v2391 = vpack.c.bf16 %v2375, %v2375
      %v2392 = vpack.c.bf16 %v2376, %v2376
      %v2393 = vpack.c.bf16 %v2377, %v2377
      %v2394 = vpack.c.bf16 %v2378, %v2378
      %v2395 = vpack.c.bf16 %v2379, %v2379
      %v2396 = vpack.c.bf16 %v2380, %v2380
      %v2397 = vpack.c.bf16 %v2381, %v2381
      %v2398 = vpack.c.bf16 %v2382, %v2382
      %v2399 = vpack.c.bf16 %v2383, %v2383
      %v2400 = vpack.c.bf16 %v2384, %v2384
      %v2401 = vpack.c.bf16 %v2385, %v2385
      %v2402 = vpack.c.bf16 %v2386, %v2386
      %v2403 = vld [vmem:[%s10] sm:$0xf]
      %v2404 = vld [vmem:[%s10 + $0x4] sm:$0xf]
      %v2405 = vld [vmem:[%s10 + $0x8] sm:$0xf]
      %v2406 = vld [vmem:[%s10 + $0xc] sm:$0xf]
      %v2407 = vld [vmem:[%s10 + $0x10] sm:$0xf]
      %v2408 = vld [vmem:[%s10 + $0x14] sm:$0xf]
      %v2409 = vld [vmem:[%s10 + $0x18] sm:$0xf]
      %v2410 = vld [vmem:[%s10 + $0x1c] sm:$0xf]
      %v2411 = vld [vmem:[%s10 + $0x20] sm:$0xf]
      %v2412 = vld [vmem:[%s10 + $0x24] sm:$0xf]
      %v2413 = vld [vmem:[%s10 + $0x28] sm:$0xf]
      %v2414 = vld [vmem:[%s10 + $0x2c] sm:$0xf]
      %v2415 = vld [vmem:[%s10 + $0x30] sm:$0xf]
      %v2416 = vld [vmem:[%s10 + $0x34] sm:$0xf]
      %v2417 = vld [vmem:[%s10 + $0x38] sm:$0xf]
      %v2418 = vld [vmem:[%s10 + $0x3c] sm:$0xf]
      %v2419 = vld [vmem:[%s10 + $0x40] sm:$0xf]
      %v2420 = vld [vmem:[%s10 + $0x44] sm:$0xf]
      %v2421 = vld [vmem:[%s10 + $0x48] sm:$0xf]
      %v2422 = vld [vmem:[%s10 + $0x4c] sm:$0xf]
      %v2423 = vld [vmem:[%s10 + $0x50] sm:$0xf]
      %v2424 = vld [vmem:[%s10 + $0x54] sm:$0xf]
      %v2425 = vld [vmem:[%s10 + $0x58] sm:$0xf]
      %v2426 = vld [vmem:[%s10 + $0x5c] sm:$0xf]
      %v2427 = vld [vmem:[%s10 + $0x60] sm:$0xf]
      %v2428 = vld [vmem:[%s10 + $0x64] sm:$0xf]
      %v2429 = vld [vmem:[%s10 + $0x68] sm:$0xf]
      %v2430 = vld [vmem:[%s10 + $0x6c] sm:$0xf]
      %v2431 = vld [vmem:[%s10 + $0x70] sm:$0xf]
      %v2432 = vld [vmem:[%s10 + $0x74] sm:$0xf]
      %v2433 = vld [vmem:[%s10 + $0x78] sm:$0xf]
      %v2434 = vld [vmem:[%s10 + $0x7c] sm:$0xf]
      %v2435 = vld [vmem:[%s10 + $0x80] sm:$0xf]
      %v2436 = vld [vmem:[%s10 + $0x84] sm:$0xf]
      %v2437 = vld [vmem:[%s10 + $0x88] sm:$0xf]
      %v2438 = vld [vmem:[%s10 + $0x8c] sm:$0xf]
      %v2439 = vld [vmem:[%s10 + $0x90] sm:$0xf]
      %v2440 = vld [vmem:[%s10 + $0x94] sm:$0xf]
      %v2441 = vld [vmem:[%s10 + $0x98] sm:$0xf]
      %v2442 = vld [vmem:[%s10 + $0x9c] sm:$0xf]
      %v2443 = vld [vmem:[%s10 + $0xa0] sm:$0xf]
      %v2444 = vld [vmem:[%s10 + $0xa4] sm:$0xf]
      %v2445 = vld [vmem:[%s10 + $0xa8] sm:$0xf]
      %v2446 = vld [vmem:[%s10 + $0xac] sm:$0xf]
      %v2447 = vld [vmem:[%s10 + $0xb0] sm:$0xf]
      %v2448 = vld [vmem:[%s10 + $0xb4] sm:$0xf]
      %v2449 = vld [vmem:[%s10 + $0xb8] sm:$0xf]
      %v2450 = vld [vmem:[%s10 + $0xbc] sm:$0xf]
      %v2451 = vld [vmem:[%s10 + $0xc0] sm:$0xf]
      %v2452 = vld [vmem:[%s10 + $0xc4] sm:$0xf]
      %v2453 = vld [vmem:[%s10 + $0xc8] sm:$0xf]
      %v2454 = vld [vmem:[%s10 + $0xcc] sm:$0xf]
      %v2455 = vld [vmem:[%s10 + $0xd0] sm:$0xf]
      %v2456 = vld [vmem:[%s10 + $0xd4] sm:$0xf]
      %v2457 = vld [vmem:[%s10 + $0xd8] sm:$0xf]
      %v2458 = vld [vmem:[%s10 + $0xdc] sm:$0xf]
      %v2459 = vld [vmem:[%s10 + $0xe0] sm:$0xf]
      %v2460 = vld [vmem:[%s10 + $0xe4] sm:$0xf]
      %v2461 = vld [vmem:[%s10 + $0xe8] sm:$0xf]
      %v2462 = vld [vmem:[%s10 + $0xec] sm:$0xf]
      %v2463 = vld [vmem:[%s10 + $0xf0] sm:$0xf]
      %v2464 = vld [vmem:[%s10 + $0xf4] sm:$0xf]
      %v2465 = vld [vmem:[%s10 + $0xf8] sm:$0xf]
      %v2466 = vld [vmem:[%s10 + $0xfc] sm:$0xf]
      %v2467 = vld [vmem:[%s10 + $0x100] sm:$0xf]
      %v2468 = vld [vmem:[%s10 + $0x104] sm:$0xf]
      %v2469 = vld [vmem:[%s10 + $0x108] sm:$0xf]
      %v2470 = vld [vmem:[%s10 + $0x10c] sm:$0xf]
      %v2471 = vld [vmem:[%s10 + $0x110] sm:$0xf]
      %v2472 = vld [vmem:[%s10 + $0x114] sm:$0xf]
      %v2473 = vld [vmem:[%s10 + $0x118] sm:$0xf]
      %v2474 = vld [vmem:[%s10 + $0x11c] sm:$0xf]
      %v2475 = vld [vmem:[%s10 + $0x120] sm:$0xf]
      %v2476 = vld [vmem:[%s10 + $0x124] sm:$0xf]
      %v2477 = vld [vmem:[%s10 + $0x128] sm:$0xf]
      %v2478 = vld [vmem:[%s10 + $0x12c] sm:$0xf]
      %v2479 = vld [vmem:[%s10 + $0x130] sm:$0xf]
      %v2480 = vld [vmem:[%s10 + $0x134] sm:$0xf]
      %v2481 = vld [vmem:[%s10 + $0x138] sm:$0xf]
      %v2482 = vld [vmem:[%s10 + $0x13c] sm:$0xf]
      %v2483 = vld [vmem:[%s10 + $0x140] sm:$0xf]
      %v2484 = vld [vmem:[%s10 + $0x144] sm:$0xf]
      %v2485 = vld [vmem:[%s10 + $0x148] sm:$0xf]
      %v2486 = vld [vmem:[%s10 + $0x14c] sm:$0xf]
      %v2487 = vld [vmem:[%s10 + $0x150] sm:$0xf]
      %v2488 = vld [vmem:[%s10 + $0x154] sm:$0xf]
      %v2489 = vld [vmem:[%s10 + $0x158] sm:$0xf]
      %v2490 = vld [vmem:[%s10 + $0x15c] sm:$0xf]
      %v2491 = vld [vmem:[%s10 + $0x160] sm:$0xf]
      %v2492 = vld [vmem:[%s10 + $0x164] sm:$0xf]
      %v2493 = vld [vmem:[%s10 + $0x168] sm:$0xf]
      %v2494 = vld [vmem:[%s10 + $0x16c] sm:$0xf]
      %v2495 = vld [vmem:[%s10 + $0x170] sm:$0xf]
      %v2496 = vld [vmem:[%s10 + $0x174] sm:$0xf]
      %v2497 = vld [vmem:[%s10 + $0x178] sm:$0xf]
      %v2498 = vld [vmem:[%s10 + $0x17c] sm:$0xf]
      %v2499 = vld [vmem:[%s10 + $0x180] sm:$0xf]
      %v2500 = vld [vmem:[%s10 + $0x184] sm:$0xf]
      %v2501 = vld [vmem:[%s10 + $0x188] sm:$0xf]
      %v2502 = vld [vmem:[%s10 + $0x18c] sm:$0xf]
      %v2503 = vld [vmem:[%s10 + $0x190] sm:$0xf]
      %v2504 = vld [vmem:[%s10 + $0x194] sm:$0xf]
      %v2505 = vld [vmem:[%s10 + $0x198] sm:$0xf]
      %v2506 = vld [vmem:[%s10 + $0x19c] sm:$0xf]
      %v2507 = vld [vmem:[%s10 + $0x1a0] sm:$0xf]
      %v2508 = vld [vmem:[%s10 + $0x1a4] sm:$0xf]
      %v2509 = vld [vmem:[%s10 + $0x1a8] sm:$0xf]
      %v2510 = vld [vmem:[%s10 + $0x1ac] sm:$0xf]
      %v2511 = vld [vmem:[%s10 + $0x1b0] sm:$0xf]
      %v2512 = vld [vmem:[%s10 + $0x1b4] sm:$0xf]
      %v2513 = vld [vmem:[%s10 + $0x1b8] sm:$0xf]
      %v2514 = vld [vmem:[%s10 + $0x1bc] sm:$0xf]
      %v2515 = vld [vmem:[%s10 + $0x1c0] sm:$0xf]
      %v2516 = vld [vmem:[%s10 + $0x1c4] sm:$0xf]
      %v2517 = vld [vmem:[%s10 + $0x1c8] sm:$0xf]
      %v2518 = vld [vmem:[%s10 + $0x1cc] sm:$0xf]
      %v2519 = vld [vmem:[%s10 + $0x1d0] sm:$0xf]
      %v2520 = vld [vmem:[%s10 + $0x1d4] sm:$0xf]
      %v2521 = vld [vmem:[%s10 + $0x1d8] sm:$0xf]
      %v2522 = vld [vmem:[%s10 + $0x1dc] sm:$0xf]
      %v2523 = vld [vmem:[%s10 + $0x1e0] sm:$0xf]
      %v2524 = vld [vmem:[%s10 + $0x1e4] sm:$0xf]
      %v2525 = vld [vmem:[%s10 + $0x1e8] sm:$0xf]
      %v2526 = vld [vmem:[%s10 + $0x1ec] sm:$0xf]
      %v2527 = vld [vmem:[%s10 + $0x1f0] sm:$0xf]
      %v2528 = vld [vmem:[%s10 + $0x1f4] sm:$0xf]
      %v2529 = vld [vmem:[%s10 + $0x1f8] sm:$0xf]
      %v2530 = vld [vmem:[%s10 + $0x1fc] sm:$0xf]
      %v2531 = vld [vmem:[%s10 + $0x200] sm:$0xf]
      %v2532 = vld [vmem:[%s10 + $0x204] sm:$0xf]
      %v2533 = vld [vmem:[%s10 + $0x208] sm:$0xf]
      %v2534 = vld [vmem:[%s10 + $0x20c] sm:$0xf]
      %v2535 = vld [vmem:[%s10 + $0x210] sm:$0xf]
      %v2536 = vld [vmem:[%s10 + $0x214] sm:$0xf]
      %v2537 = vld [vmem:[%s10 + $0x218] sm:$0xf]
      %v2538 = vld [vmem:[%s10 + $0x21c] sm:$0xf]
      %v2539 = vld [vmem:[%s10 + $0x220] sm:$0xf]
      %v2540 = vld [vmem:[%s10 + $0x224] sm:$0xf]
      %v2541 = vld [vmem:[%s10 + $0x228] sm:$0xf]
      %v2542 = vld [vmem:[%s10 + $0x22c] sm:$0xf]
      %v2543 = vld [vmem:[%s10 + $0x230] sm:$0xf]
      %v2544 = vld [vmem:[%s10 + $0x234] sm:$0xf]
      %v2545 = vld [vmem:[%s10 + $0x238] sm:$0xf]
      %v2546 = vld [vmem:[%s10 + $0x23c] sm:$0xf]
      %v2547 = vld [vmem:[%s10 + $0x240] sm:$0xf]
      %v2548 = vld [vmem:[%s10 + $0x244] sm:$0xf]
      %v2549 = vld [vmem:[%s10 + $0x248] sm:$0xf]
      %v2550 = vld [vmem:[%s10 + $0x24c] sm:$0xf]
      %v2551 = vld [vmem:[%s10 + $0x250] sm:$0xf]
      %v2552 = vld [vmem:[%s10 + $0x254] sm:$0xf]
      %v2553 = vld [vmem:[%s10 + $0x258] sm:$0xf]
      %v2554 = vld [vmem:[%s10 + $0x25c] sm:$0xf]
      %v2555 = vld [vmem:[%s10 + $0x260] sm:$0xf]
      %v2556 = vld [vmem:[%s10 + $0x264] sm:$0xf]
      %v2557 = vld [vmem:[%s10 + $0x268] sm:$0xf]
      %v2558 = vld [vmem:[%s10 + $0x26c] sm:$0xf]
      %v2559 = vld [vmem:[%s10 + $0x270] sm:$0xf]
      %v2560 = vld [vmem:[%s10 + $0x274] sm:$0xf]
      %v2561 = vld [vmem:[%s10 + $0x278] sm:$0xf]
      %v2562 = vld [vmem:[%s10 + $0x27c] sm:$0xf]
      %v2563 = vld [vmem:[%s10 + $0x280] sm:$0xf]
      %v2564 = vld [vmem:[%s10 + $0x284] sm:$0xf]
      %v2565 = vld [vmem:[%s10 + $0x288] sm:$0xf]
      %v2566 = vld [vmem:[%s10 + $0x28c] sm:$0xf]
      %v2567 = vld [vmem:[%s10 + $0x290] sm:$0xf]
      %v2568 = vld [vmem:[%s10 + $0x294] sm:$0xf]
      %v2569 = vld [vmem:[%s10 + $0x298] sm:$0xf]
      %v2570 = vld [vmem:[%s10 + $0x29c] sm:$0xf]
      %v2571 = vld [vmem:[%s10 + $0x2a0] sm:$0xf]
      %v2572 = vld [vmem:[%s10 + $0x2a4] sm:$0xf]
      %v2573 = vld [vmem:[%s10 + $0x2a8] sm:$0xf]
      %v2574 = vld [vmem:[%s10 + $0x2ac] sm:$0xf]
      %v2575 = vld [vmem:[%s10 + $0x2b0] sm:$0xf]
      %v2576 = vld [vmem:[%s10 + $0x2b4] sm:$0xf]
      %v2577 = vld [vmem:[%s10 + $0x2b8] sm:$0xf]
      %v2578 = vld [vmem:[%s10 + $0x2bc] sm:$0xf]
      %v2579 = vld [vmem:[%s10 + $0x2c0] sm:$0xf]
      %v2580 = vld [vmem:[%s10 + $0x2c4] sm:$0xf]
      %v2581 = vld [vmem:[%s10 + $0x2c8] sm:$0xf]
      %v2582 = vld [vmem:[%s10 + $0x2cc] sm:$0xf]
      %v2583 = vld [vmem:[%s10 + $0x2d0] sm:$0xf]
      %v2584 = vld [vmem:[%s10 + $0x2d4] sm:$0xf]
      %v2585 = vld [vmem:[%s10 + $0x2d8] sm:$0xf]
      %v2586 = vld [vmem:[%s10 + $0x2dc] sm:$0xf]
      %v2587 = vld [vmem:[%s10 + $0x2e0] sm:$0xf]
      %v2588 = vld [vmem:[%s10 + $0x2e4] sm:$0xf]
      %v2589 = vld [vmem:[%s10 + $0x2e8] sm:$0xf]
      %v2590 = vld [vmem:[%s10 + $0x2ec] sm:$0xf]
      %v2591 = vld [vmem:[%s10 + $0x2f0] sm:$0xf]
      %v2592 = vld [vmem:[%s10 + $0x2f4] sm:$0xf]
      %v2593 = vld [vmem:[%s10 + $0x2f8] sm:$0xf]
      %v2594 = vld [vmem:[%s10 + $0x2fc] sm:$0xf]
      %v2595 = vld [vmem:[%s10 + $0x300] sm:$0xf]
      %v2596 = vld [vmem:[%s10 + $0x304] sm:$0xf]
      %v2597 = vld [vmem:[%s10 + $0x308] sm:$0xf]
      %v2598 = vld [vmem:[%s10 + $0x30c] sm:$0xf]
      %v2599 = vld [vmem:[%s10 + $0x310] sm:$0xf]
      %v2600 = vld [vmem:[%s10 + $0x314] sm:$0xf]
      %v2601 = vld [vmem:[%s10 + $0x318] sm:$0xf]
      %v2602 = vld [vmem:[%s10 + $0x31c] sm:$0xf]
      %v2603 = vld [vmem:[%s10 + $0x320] sm:$0xf]
      %v2604 = vld [vmem:[%s10 + $0x324] sm:$0xf]
      %v2605 = vld [vmem:[%s10 + $0x328] sm:$0xf]
      %v2606 = vld [vmem:[%s10 + $0x32c] sm:$0xf]
      %v2607 = vld [vmem:[%s10 + $0x330] sm:$0xf]
      %v2608 = vld [vmem:[%s10 + $0x334] sm:$0xf]
      %v2609 = vld [vmem:[%s10 + $0x338] sm:$0xf]
      %v2610 = vld [vmem:[%s10 + $0x33c] sm:$0xf]
      %v2611 = vld [vmem:[%s10 + $0x340] sm:$0xf]
      %v2612 = vld [vmem:[%s10 + $0x344] sm:$0xf]
      %v2613 = vld [vmem:[%s10 + $0x348] sm:$0xf]
      %v2614 = vld [vmem:[%s10 + $0x34c] sm:$0xf]
      %v2615 = vld [vmem:[%s10 + $0x350] sm:$0xf]
      %v2616 = vld [vmem:[%s10 + $0x354] sm:$0xf]
      %v2617 = vld [vmem:[%s10 + $0x358] sm:$0xf]
      %v2618 = vld [vmem:[%s10 + $0x35c] sm:$0xf]
      %v2619 = vld [vmem:[%s10 + $0x360] sm:$0xf]
      %v2620 = vld [vmem:[%s10 + $0x364] sm:$0xf]
      %v2621 = vld [vmem:[%s10 + $0x368] sm:$0xf]
      %v2622 = vld [vmem:[%s10 + $0x36c] sm:$0xf]
      %v2623 = vld [vmem:[%s10 + $0x370] sm:$0xf]
      %v2624 = vld [vmem:[%s10 + $0x374] sm:$0xf]
      %v2625 = vld [vmem:[%s10 + $0x378] sm:$0xf]
      %v2626 = vld [vmem:[%s10 + $0x37c] sm:$0xf]
      %v2627 = vld [vmem:[%s10 + $0x380] sm:$0xf]
      %v2628 = vld [vmem:[%s10 + $0x384] sm:$0xf]
      %v2629 = vld [vmem:[%s10 + $0x388] sm:$0xf]
      %v2630 = vld [vmem:[%s10 + $0x38c] sm:$0xf]
      %v2631 = vld [vmem:[%s10 + $0x390] sm:$0xf]
      %v2632 = vld [vmem:[%s10 + $0x394] sm:$0xf]
      %v2633 = vld [vmem:[%s10 + $0x398] sm:$0xf]
      %v2634 = vld [vmem:[%s10 + $0x39c] sm:$0xf]
      %v2635 = vld [vmem:[%s10 + $0x3a0] sm:$0xf]
      %v2636 = vld [vmem:[%s10 + $0x3a4] sm:$0xf]
      %v2637 = vld [vmem:[%s10 + $0x3a8] sm:$0xf]
      %v2638 = vld [vmem:[%s10 + $0x3ac] sm:$0xf]
      %v2639 = vld [vmem:[%s10 + $0x3b0] sm:$0xf]
      %v2640 = vld [vmem:[%s10 + $0x3b4] sm:$0xf]
      %v2641 = vld [vmem:[%s10 + $0x3b8] sm:$0xf]
      %v2642 = vld [vmem:[%s10 + $0x3bc] sm:$0xf]
      %v2643 = vld [vmem:[%s10 + $0x3c0] sm:$0xf]
      %v2644 = vld [vmem:[%s10 + $0x3c4] sm:$0xf]
      %v2645 = vld [vmem:[%s10 + $0x3c8] sm:$0xf]
      %v2646 = vld [vmem:[%s10 + $0x3cc] sm:$0xf]
      %v2647 = vld [vmem:[%s10 + $0x3d0] sm:$0xf]
      %v2648 = vld [vmem:[%s10 + $0x3d4] sm:$0xf]
      %v2649 = vld [vmem:[%s10 + $0x3d8] sm:$0xf]
      %v2650 = vld [vmem:[%s10 + $0x3dc] sm:$0xf]
      %v2651 = vld [vmem:[%s10 + $0x3e0] sm:$0xf]
      %v2652 = vld [vmem:[%s10 + $0x3e4] sm:$0xf]
      %v2653 = vld [vmem:[%s10 + $0x3e8] sm:$0xf]
      %v2654 = vld [vmem:[%s10 + $0x3ec] sm:$0xf]
      %v2655 = vld [vmem:[%s10 + $0x3f0] sm:$0xf]
      %v2656 = vld [vmem:[%s10 + $0x3f4] sm:$0xf]
      %v2657 = vld [vmem:[%s10 + $0x3f8] sm:$0xf]
      %v2658 = vld [vmem:[%s10 + $0x3fc] sm:$0xf]
      %v2659 = vld [vmem:[%s11] sm:$0x1]
      %v2661 = vlaneseq
      %v2662 = vshrl.u32 %v2661, 7
      %v2663 = vsub.s32 0, %v2662
      %v2664 = vrot.slane %v2659, %v2663
      %v2922 = vunpack.c.l.b16 %v2403
      %v2923 = vunpack.c.l.b16 %v2404
      %v2924 = vunpack.c.l.b16 %v2405
      %v2925 = vunpack.c.l.b16 %v2406
      %v2926 = vunpack.c.l.b16 %v2407
      %v2927 = vunpack.c.l.b16 %v2408
      %v2928 = vunpack.c.l.b16 %v2409
      %v2929 = vunpack.c.l.b16 %v2410
      %v2930 = vunpack.c.l.b16 %v2411
      %v2931 = vunpack.c.l.b16 %v2412
      %v2932 = vunpack.c.l.b16 %v2413
      %v2933 = vunpack.c.l.b16 %v2414
      %v2934 = vunpack.c.l.b16 %v2415
      %v2935 = vunpack.c.l.b16 %v2416
      %v2936 = vunpack.c.l.b16 %v2417
      %v2937 = vunpack.c.l.b16 %v2418
      %v2938 = vunpack.c.l.b16 %v2419
      %v2939 = vunpack.c.l.b16 %v2420
      %v2940 = vunpack.c.l.b16 %v2421
      %v2941 = vunpack.c.l.b16 %v2422
      %v2942 = vunpack.c.l.b16 %v2423
      %v2943 = vunpack.c.l.b16 %v2424
      %v2944 = vunpack.c.l.b16 %v2425
      %v2945 = vunpack.c.l.b16 %v2426
      %v2946 = vunpack.c.l.b16 %v2427
      %v2947 = vunpack.c.l.b16 %v2428
      %v2948 = vunpack.c.l.b16 %v2429
      %v2949 = vunpack.c.l.b16 %v2430
      %v2950 = vunpack.c.l.b16 %v2431
      %v2951 = vunpack.c.l.b16 %v2432
      %v2952 = vunpack.c.l.b16 %v2433
      %v2953 = vunpack.c.l.b16 %v2434
      %v2954 = vunpack.c.l.b16 %v2435
      %v2955 = vunpack.c.l.b16 %v2436
      %v2956 = vunpack.c.l.b16 %v2437
      %v2957 = vunpack.c.l.b16 %v2438
      %v2958 = vunpack.c.l.b16 %v2439
      %v2959 = vunpack.c.l.b16 %v2440
      %v2960 = vunpack.c.l.b16 %v2441
      %v2961 = vunpack.c.l.b16 %v2442
      %v2962 = vunpack.c.l.b16 %v2443
      %v2963 = vunpack.c.l.b16 %v2444
      %v2964 = vunpack.c.l.b16 %v2445
      %v2965 = vunpack.c.l.b16 %v2446
      %v2966 = vunpack.c.l.b16 %v2447
      %v2967 = vunpack.c.l.b16 %v2448
      %v2968 = vunpack.c.l.b16 %v2449
      %v2969 = vunpack.c.l.b16 %v2450
      %v2970 = vunpack.c.l.b16 %v2451
      %v2971 = vunpack.c.l.b16 %v2452
      %v2972 = vunpack.c.l.b16 %v2453
      %v2973 = vunpack.c.l.b16 %v2454
      %v2974 = vunpack.c.l.b16 %v2455
      %v2975 = vunpack.c.l.b16 %v2456
      %v2976 = vunpack.c.l.b16 %v2457
      %v2977 = vunpack.c.l.b16 %v2458
      %v2978 = vunpack.c.l.b16 %v2459
      %v2979 = vunpack.c.l.b16 %v2460
      %v2980 = vunpack.c.l.b16 %v2461
      %v2981 = vunpack.c.l.b16 %v2462
      %v2982 = vunpack.c.l.b16 %v2463
      %v2983 = vunpack.c.l.b16 %v2464
      %v2984 = vunpack.c.l.b16 %v2465
      %v2985 = vunpack.c.l.b16 %v2466
      %v2986 = vunpack.c.l.b16 %v2467
      %v2987 = vunpack.c.l.b16 %v2468
      %v2988 = vunpack.c.l.b16 %v2469
      %v2989 = vunpack.c.l.b16 %v2470
      %v2990 = vunpack.c.l.b16 %v2471
      %v2991 = vunpack.c.l.b16 %v2472
      %v2992 = vunpack.c.l.b16 %v2473
      %v2993 = vunpack.c.l.b16 %v2474
      %v2994 = vunpack.c.l.b16 %v2475
      %v2995 = vunpack.c.l.b16 %v2476
      %v2996 = vunpack.c.l.b16 %v2477
      %v2997 = vunpack.c.l.b16 %v2478
      %v2998 = vunpack.c.l.b16 %v2479
      %v2999 = vunpack.c.l.b16 %v2480
      %v3000 = vunpack.c.l.b16 %v2481
      %v3001 = vunpack.c.l.b16 %v2482
      %v3002 = vunpack.c.l.b16 %v2483
      %v3003 = vunpack.c.l.b16 %v2484
      %v3004 = vunpack.c.l.b16 %v2485
      %v3005 = vunpack.c.l.b16 %v2486
      %v3006 = vunpack.c.l.b16 %v2487
      %v3007 = vunpack.c.l.b16 %v2488
      %v3008 = vunpack.c.l.b16 %v2489
      %v3009 = vunpack.c.l.b16 %v2490
      %v3010 = vunpack.c.l.b16 %v2491
      %v3011 = vunpack.c.l.b16 %v2492
      %v3012 = vunpack.c.l.b16 %v2493
      %v3013 = vunpack.c.l.b16 %v2494
      %v3014 = vunpack.c.l.b16 %v2495
      %v3015 = vunpack.c.l.b16 %v2496
      %v3016 = vunpack.c.l.b16 %v2497
      %v3017 = vunpack.c.l.b16 %v2498
      %v3018 = vunpack.c.l.b16 %v2499
      %v3019 = vunpack.c.l.b16 %v2500
      %v3020 = vunpack.c.l.b16 %v2501
      %v3021 = vunpack.c.l.b16 %v2502
      %v3022 = vunpack.c.l.b16 %v2503
      %v3023 = vunpack.c.l.b16 %v2504
      %v3024 = vunpack.c.l.b16 %v2505
      %v3025 = vunpack.c.l.b16 %v2506
      %v3026 = vunpack.c.l.b16 %v2507
      %v3027 = vunpack.c.l.b16 %v2508
      %v3028 = vunpack.c.l.b16 %v2509
      %v3029 = vunpack.c.l.b16 %v2510
      %v3030 = vunpack.c.l.b16 %v2511
      %v3031 = vunpack.c.l.b16 %v2512
      %v3032 = vunpack.c.l.b16 %v2513
      %v3033 = vunpack.c.l.b16 %v2514
      %v3034 = vunpack.c.l.b16 %v2515
      %v3035 = vunpack.c.l.b16 %v2516
      %v3036 = vunpack.c.l.b16 %v2517
      %v3037 = vunpack.c.l.b16 %v2518
      %v3038 = vunpack.c.l.b16 %v2519
      %v3039 = vunpack.c.l.b16 %v2520
      %v3040 = vunpack.c.l.b16 %v2521
      %v3041 = vunpack.c.l.b16 %v2522
      %v3042 = vunpack.c.l.b16 %v2523
      %v3043 = vunpack.c.l.b16 %v2524
      %v3044 = vunpack.c.l.b16 %v2525
      %v3045 = vunpack.c.l.b16 %v2526
      %v3046 = vunpack.c.l.b16 %v2527
      %v3047 = vunpack.c.l.b16 %v2528
      %v3048 = vunpack.c.l.b16 %v2529
      %v3049 = vunpack.c.l.b16 %v2530
      %v3050 = vunpack.c.l.b16 %v2531
      %v3051 = vunpack.c.l.b16 %v2532
      %v3052 = vunpack.c.l.b16 %v2533
      %v3053 = vunpack.c.l.b16 %v2534
      %v3054 = vunpack.c.l.b16 %v2535
      %v3055 = vunpack.c.l.b16 %v2536
      %v3056 = vunpack.c.l.b16 %v2537
      %v3057 = vunpack.c.l.b16 %v2538
      %v3058 = vunpack.c.l.b16 %v2539
      %v3059 = vunpack.c.l.b16 %v2540
      %v3060 = vunpack.c.l.b16 %v2541
      %v3061 = vunpack.c.l.b16 %v2542
      %v3062 = vunpack.c.l.b16 %v2543
      %v3063 = vunpack.c.l.b16 %v2544
      %v3064 = vunpack.c.l.b16 %v2545
      %v3065 = vunpack.c.l.b16 %v2546
      %v3066 = vunpack.c.l.b16 %v2547
      %v3067 = vunpack.c.l.b16 %v2548
      %v3068 = vunpack.c.l.b16 %v2549
      %v3069 = vunpack.c.l.b16 %v2550
      %v3070 = vunpack.c.l.b16 %v2551
      %v3071 = vunpack.c.l.b16 %v2552
      %v3072 = vunpack.c.l.b16 %v2553
      %v3073 = vunpack.c.l.b16 %v2554
      %v3074 = vunpack.c.l.b16 %v2555
      %v3075 = vunpack.c.l.b16 %v2556
      %v3076 = vunpack.c.l.b16 %v2557
      %v3077 = vunpack.c.l.b16 %v2558
      %v3078 = vunpack.c.l.b16 %v2559
      %v3079 = vunpack.c.l.b16 %v2560
      %v3080 = vunpack.c.l.b16 %v2561
      %v3081 = vunpack.c.l.b16 %v2562
      %v3082 = vunpack.c.l.b16 %v2563
      %v3083 = vunpack.c.l.b16 %v2564
      %v3084 = vunpack.c.l.b16 %v2565
      %v3085 = vunpack.c.l.b16 %v2566
      %v3086 = vunpack.c.l.b16 %v2567
      %v3087 = vunpack.c.l.b16 %v2568
      %v3088 = vunpack.c.l.b16 %v2569
      %v3089 = vunpack.c.l.b16 %v2570
      %v3090 = vunpack.c.l.b16 %v2571
      %v3091 = vunpack.c.l.b16 %v2572
      %v3092 = vunpack.c.l.b16 %v2573
      %v3093 = vunpack.c.l.b16 %v2574
      %v3094 = vunpack.c.l.b16 %v2575
      %v3095 = vunpack.c.l.b16 %v2576
      %v3096 = vunpack.c.l.b16 %v2577
      %v3097 = vunpack.c.l.b16 %v2578
      %v3098 = vunpack.c.l.b16 %v2579
      %v3099 = vunpack.c.l.b16 %v2580
      %v3100 = vunpack.c.l.b16 %v2581
      %v3101 = vunpack.c.l.b16 %v2582
      %v3102 = vunpack.c.l.b16 %v2583
      %v3103 = vunpack.c.l.b16 %v2584
      %v3104 = vunpack.c.l.b16 %v2585
      %v3105 = vunpack.c.l.b16 %v2586
      %v3106 = vunpack.c.l.b16 %v2587
      %v3107 = vunpack.c.l.b16 %v2588
      %v3108 = vunpack.c.l.b16 %v2589
      %v3109 = vunpack.c.l.b16 %v2590
      %v3110 = vunpack.c.l.b16 %v2591
      %v3111 = vunpack.c.l.b16 %v2592
      %v3112 = vunpack.c.l.b16 %v2593
      %v3113 = vunpack.c.l.b16 %v2594
      %v3114 = vunpack.c.l.b16 %v2595
      %v3115 = vunpack.c.l.b16 %v2596
      %v3116 = vunpack.c.l.b16 %v2597
      %v3117 = vunpack.c.l.b16 %v2598
      %v3118 = vunpack.c.l.b16 %v2599
      %v3119 = vunpack.c.l.b16 %v2600
      %v3120 = vunpack.c.l.b16 %v2601
      %v3121 = vunpack.c.l.b16 %v2602
      %v3122 = vunpack.c.l.b16 %v2603
      %v3123 = vunpack.c.l.b16 %v2604
      %v3124 = vunpack.c.l.b16 %v2605
      %v3125 = vunpack.c.l.b16 %v2606
      %v3126 = vunpack.c.l.b16 %v2607
      %v3127 = vunpack.c.l.b16 %v2608
      %v3128 = vunpack.c.l.b16 %v2609
      %v3129 = vunpack.c.l.b16 %v2610
      %v3130 = vunpack.c.l.b16 %v2611
      %v3131 = vunpack.c.l.b16 %v2612
      %v3132 = vunpack.c.l.b16 %v2613
      %v3133 = vunpack.c.l.b16 %v2614
      %v3134 = vunpack.c.l.b16 %v2615
      %v3135 = vunpack.c.l.b16 %v2616
      %v3136 = vunpack.c.l.b16 %v2617
      %v3137 = vunpack.c.l.b16 %v2618
      %v3138 = vunpack.c.l.b16 %v2619
      %v3139 = vunpack.c.l.b16 %v2620
      %v3140 = vunpack.c.l.b16 %v2621
      %v3141 = vunpack.c.l.b16 %v2622
      %v3142 = vunpack.c.l.b16 %v2623
      %v3143 = vunpack.c.l.b16 %v2624
      %v3144 = vunpack.c.l.b16 %v2625
      %v3145 = vunpack.c.l.b16 %v2626
      %v3146 = vunpack.c.l.b16 %v2627
      %v3147 = vunpack.c.l.b16 %v2628
      %v3148 = vunpack.c.l.b16 %v2629
      %v3149 = vunpack.c.l.b16 %v2630
      %v3150 = vunpack.c.l.b16 %v2631
      %v3151 = vunpack.c.l.b16 %v2632
      %v3152 = vunpack.c.l.b16 %v2633
      %v3153 = vunpack.c.l.b16 %v2634
      %v3154 = vunpack.c.l.b16 %v2635
      %v3155 = vunpack.c.l.b16 %v2636
      %v3156 = vunpack.c.l.b16 %v2637
      %v3157 = vunpack.c.l.b16 %v2638
      %v3158 = vunpack.c.l.b16 %v2639
      %v3159 = vunpack.c.l.b16 %v2640
      %v3160 = vunpack.c.l.b16 %v2641
      %v3161 = vunpack.c.l.b16 %v2642
      %v3162 = vunpack.c.l.b16 %v2643
      %v3163 = vunpack.c.l.b16 %v2644
      %v3164 = vunpack.c.l.b16 %v2645
      %v3165 = vunpack.c.l.b16 %v2646
      %v3166 = vunpack.c.l.b16 %v2647
      %v3167 = vunpack.c.l.b16 %v2648
      %v3168 = vunpack.c.l.b16 %v2649
      %v3169 = vunpack.c.l.b16 %v2650
      %v3170 = vunpack.c.l.b16 %v2651
      %v3171 = vunpack.c.l.b16 %v2652
      %v3172 = vunpack.c.l.b16 %v2653
      %v3173 = vunpack.c.l.b16 %v2654
      %v3174 = vunpack.c.l.b16 %v2655
      %v3175 = vunpack.c.l.b16 %v2656
      %v3176 = vunpack.c.l.b16 %v2657
      %v3177 = vunpack.c.l.b16 %v2658
      %v3178 = vpack.c.b16 %v2923, %v2922
      %v3179 = vpack.c.b16 %v2925, %v2924
      %v3180 = vpack.c.b16 %v2927, %v2926
      %v3181 = vpack.c.b16 %v2929, %v2928
      %v3182 = vpack.c.b16 %v2931, %v2930
      %v3183 = vpack.c.b16 %v2933, %v2932
      %v3184 = vpack.c.b16 %v2935, %v2934
      %v3185 = vpack.c.b16 %v2937, %v2936
      %v3186 = vpack.c.b16 %v2939, %v2938
      %v3187 = vpack.c.b16 %v2941, %v2940
      %v3188 = vpack.c.b16 %v2943, %v2942
      %v3189 = vpack.c.b16 %v2945, %v2944
      %v3190 = vpack.c.b16 %v2947, %v2946
      %v3191 = vpack.c.b16 %v2949, %v2948
      %v3192 = vpack.c.b16 %v2951, %v2950
      %v3193 = vpack.c.b16 %v2953, %v2952
      %v3194 = vpack.c.b16 %v2955, %v2954
      %v3195 = vpack.c.b16 %v2957, %v2956
      %v3196 = vpack.c.b16 %v2959, %v2958
      %v3197 = vpack.c.b16 %v2961, %v2960
      %v3198 = vpack.c.b16 %v2963, %v2962
      %v3199 = vpack.c.b16 %v2965, %v2964
      %v3200 = vpack.c.b16 %v2967, %v2966
      %v3201 = vpack.c.b16 %v2969, %v2968
      %v3202 = vpack.c.b16 %v2971, %v2970
      %v3203 = vpack.c.b16 %v2973, %v2972
      %v3204 = vpack.c.b16 %v2975, %v2974
      %v3205 = vpack.c.b16 %v2977, %v2976
      %v3206 = vpack.c.b16 %v2979, %v2978
      %v3207 = vpack.c.b16 %v2981, %v2980
      %v3208 = vpack.c.b16 %v2983, %v2982
      %v3209 = vpack.c.b16 %v2985, %v2984
      %v3210 = vpack.c.b16 %v2987, %v2986
      %v3211 = vpack.c.b16 %v2989, %v2988
      %v3212 = vpack.c.b16 %v2991, %v2990
      %v3213 = vpack.c.b16 %v2993, %v2992
      %v3214 = vpack.c.b16 %v2995, %v2994
      %v3215 = vpack.c.b16 %v2997, %v2996
      %v3216 = vpack.c.b16 %v2999, %v2998
      %v3217 = vpack.c.b16 %v3001, %v3000
      %v3218 = vpack.c.b16 %v3003, %v3002
      %v3219 = vpack.c.b16 %v3005, %v3004
      %v3220 = vpack.c.b16 %v3007, %v3006
      %v3221 = vpack.c.b16 %v3009, %v3008
      %v3222 = vpack.c.b16 %v3011, %v3010
      %v3223 = vpack.c.b16 %v3013, %v3012
      %v3224 = vpack.c.b16 %v3015, %v3014
      %v3225 = vpack.c.b16 %v3017, %v3016
      %v3226 = vpack.c.b16 %v3019, %v3018
      %v3227 = vpack.c.b16 %v3021, %v3020
      %v3228 = vpack.c.b16 %v3023, %v3022
      %v3229 = vpack.c.b16 %v3025, %v3024
      %v3230 = vpack.c.b16 %v3027, %v3026
      %v3231 = vpack.c.b16 %v3029, %v3028
      %v3232 = vpack.c.b16 %v3031, %v3030
      %v3233 = vpack.c.b16 %v3033, %v3032
      %v3234 = vpack.c.b16 %v3035, %v3034
      %v3235 = vpack.c.b16 %v3037, %v3036
      %v3236 = vpack.c.b16 %v3039, %v3038
      %v3237 = vpack.c.b16 %v3041, %v3040
      %v3238 = vpack.c.b16 %v3043, %v3042
      %v3239 = vpack.c.b16 %v3045, %v3044
      %v3240 = vpack.c.b16 %v3047, %v3046
      %v3241 = vpack.c.b16 %v3049, %v3048
      %v3242 = vpack.c.b16 %v3051, %v3050
      %v3243 = vpack.c.b16 %v3053, %v3052
      %v3244 = vpack.c.b16 %v3055, %v3054
      %v3245 = vpack.c.b16 %v3057, %v3056
      %v3246 = vpack.c.b16 %v3059, %v3058
      %v3247 = vpack.c.b16 %v3061, %v3060
      %v3248 = vpack.c.b16 %v3063, %v3062
      %v3249 = vpack.c.b16 %v3065, %v3064
      %v3250 = vpack.c.b16 %v3067, %v3066
      %v3251 = vpack.c.b16 %v3069, %v3068
      %v3252 = vpack.c.b16 %v3071, %v3070
      %v3253 = vpack.c.b16 %v3073, %v3072
      %v3254 = vpack.c.b16 %v3075, %v3074
      %v3255 = vpack.c.b16 %v3077, %v3076
      %v3256 = vpack.c.b16 %v3079, %v3078
      %v3257 = vpack.c.b16 %v3081, %v3080
      %v3258 = vpack.c.b16 %v3083, %v3082
      %v3259 = vpack.c.b16 %v3085, %v3084
      %v3260 = vpack.c.b16 %v3087, %v3086
      %v3261 = vpack.c.b16 %v3089, %v3088
      %v3262 = vpack.c.b16 %v3091, %v3090
      %v3263 = vpack.c.b16 %v3093, %v3092
      %v3264 = vpack.c.b16 %v3095, %v3094
      %v3265 = vpack.c.b16 %v3097, %v3096
      %v3266 = vpack.c.b16 %v3099, %v3098
      %v3267 = vpack.c.b16 %v3101, %v3100
      %v3268 = vpack.c.b16 %v3103, %v3102
      %v3269 = vpack.c.b16 %v3105, %v3104
      %v3270 = vpack.c.b16 %v3107, %v3106
      %v3271 = vpack.c.b16 %v3109, %v3108
      %v3272 = vpack.c.b16 %v3111, %v3110
      %v3273 = vpack.c.b16 %v3113, %v3112
      %v3274 = vpack.c.b16 %v3115, %v3114
      %v3275 = vpack.c.b16 %v3117, %v3116
      %v3276 = vpack.c.b16 %v3119, %v3118
      %v3277 = vpack.c.b16 %v3121, %v3120
      %v3278 = vpack.c.b16 %v3123, %v3122
      %v3279 = vpack.c.b16 %v3125, %v3124
      %v3280 = vpack.c.b16 %v3127, %v3126
      %v3281 = vpack.c.b16 %v3129, %v3128
      %v3282 = vpack.c.b16 %v3131, %v3130
      %v3283 = vpack.c.b16 %v3133, %v3132
      %v3284 = vpack.c.b16 %v3135, %v3134
      %v3285 = vpack.c.b16 %v3137, %v3136
      %v3286 = vpack.c.b16 %v3139, %v3138
      %v3287 = vpack.c.b16 %v3141, %v3140
      %v3288 = vpack.c.b16 %v3143, %v3142
      %v3289 = vpack.c.b16 %v3145, %v3144
      %v3290 = vpack.c.b16 %v3147, %v3146
      %v3291 = vpack.c.b16 %v3149, %v3148
      %v3292 = vpack.c.b16 %v3151, %v3150
      %v3293 = vpack.c.b16 %v3153, %v3152
      %v3294 = vpack.c.b16 %v3155, %v3154
      %v3295 = vpack.c.b16 %v3157, %v3156
      %v3296 = vpack.c.b16 %v3159, %v3158
      %v3297 = vpack.c.b16 %v3161, %v3160
      %v3298 = vpack.c.b16 %v3163, %v3162
      %v3299 = vpack.c.b16 %v3165, %v3164
      %v3300 = vpack.c.b16 %v3167, %v3166
      %v3301 = vpack.c.b16 %v3169, %v3168
      %v3302 = vpack.c.b16 %v3171, %v3170
      %v3303 = vpack.c.b16 %v3173, %v3172
      %v3304 = vpack.c.b16 %v3175, %v3174
      %v3305 = vpack.c.b16 %v3177, %v3176
      %3434 = vmatprep.subr.bf16.mxu0 0
      %3435 = vmatpush1.bf16.msra.mxu0 %v3185
      %3436 = vmatprep.subr.bf16.mxu0 0
      %3437 = vmatpush1.bf16.msra.mxu0 %v3184
      %3438 = vmatprep.subr.bf16.mxu0 0
      %3439 = vmatpush1.bf16.msra.mxu0 %v3183
      %3440 = vmatprep.subr.bf16.mxu0 0
      %3441 = vmatpush1.bf16.msra.mxu0 %v3182
      %3442 = vmatprep.subr.bf16.mxu0 0
      %3443 = vmatpush1.bf16.msra.mxu0 %v3181
      %3444 = vmatprep.subr.bf16.mxu0 0
      %3445 = vmatpush1.bf16.msra.mxu0 %v3180
      %3446 = vmatprep.subr.bf16.mxu0 0
      %3447 = vmatpush1.bf16.msra.mxu0 %v3179
      %3448 = vmatprep.subr.bf16.mxu0 0
      %3449 = vmatpush1.bf16.msra.mxu0 %v3178
      %3450 = vmatprep.subr.bf16.mxu0 0
      %3451 = vmatpush2.bf16.msra.mxu0 %v3193
      %3452 = vmatprep.subr.bf16.mxu0 0
      %3453 = vmatpush2.bf16.msra.mxu0 %v3192
      %3454 = vmatprep.subr.bf16.mxu0 0
      %3455 = vmatpush2.bf16.msra.mxu0 %v3191
      %3456 = vmatprep.subr.bf16.mxu0 0
      %3457 = vmatpush2.bf16.msra.mxu0 %v3190
      %3458 = vmatprep.subr.bf16.mxu0 0
      %3459 = vmatpush2.bf16.msra.mxu0 %v3189
      %3460 = vmatprep.subr.bf16.mxu0 0
      %3461 = vmatpush2.bf16.msra.mxu0 %v3188
      %3462 = vmatprep.subr.bf16.mxu0 0
      %3463 = vmatpush2.bf16.msra.mxu0 %v3187
      %3464 = vmatprep.subr.bf16.mxu0 0
      %3465 = vmatpush2.bf16.msra.mxu0 %v3186
      %3466 = vmatprep.mubr.bf16.mxu0 %v2388
      %3467 = vmatmul.mubr.bf16.gmra.mxu0 %v2387
      %v3468 = vpop.f32.mrf.mxu0
      %v3469 = vadd.f32 %v2664, %v3468
      %v3470 = vpop.f32.mrf.mxu0
      %v3471 = vpop.f32.mrf.mxu0
      %v3472 = vpop.f32.mrf.mxu0
      %3473 = vdwg.mxu0
      %3474 = vmatprep.subr.bf16.mxu0 0
      %3475 = vmatpush1.bf16.msra.mxu0 %v3201
      %3476 = vmatprep.subr.bf16.mxu0 0
      %3477 = vmatpush1.bf16.msra.mxu0 %v3200
      %3478 = vmatprep.subr.bf16.mxu0 0
      %3479 = vmatpush1.bf16.msra.mxu0 %v3199
      %3480 = vmatprep.subr.bf16.mxu0 0
      %3481 = vmatpush1.bf16.msra.mxu0 %v3198
      %3482 = vmatprep.subr.bf16.mxu0 0
      %3483 = vmatpush1.bf16.msra.mxu0 %v3197
      %3484 = vmatprep.subr.bf16.mxu0 0
      %3485 = vmatpush1.bf16.msra.mxu0 %v3196
      %3486 = vmatprep.subr.bf16.mxu0 0
      %3487 = vmatpush1.bf16.msra.mxu0 %v3195
      %3488 = vmatprep.subr.bf16.mxu0 0
      %3489 = vmatpush1.bf16.msra.mxu0 %v3194
      %3490 = vmatprep.subr.bf16.mxu0 0
      %3491 = vmatpush2.bf16.msra.mxu0 %v3209
      %3492 = vmatprep.subr.bf16.mxu0 0
      %3493 = vmatpush2.bf16.msra.mxu0 %v3208
      %3494 = vmatprep.subr.bf16.mxu0 0
      %3495 = vmatpush2.bf16.msra.mxu0 %v3207
      %3496 = vmatprep.subr.bf16.mxu0 0
      %3497 = vmatpush2.bf16.msra.mxu0 %v3206
      %3498 = vmatprep.subr.bf16.mxu0 0
      %3499 = vmatpush2.bf16.msra.mxu0 %v3205
      %3500 = vmatprep.subr.bf16.mxu0 0
      %3501 = vmatpush2.bf16.msra.mxu0 %v3204
      %3502 = vmatprep.subr.bf16.mxu0 0
      %3503 = vmatpush2.bf16.msra.mxu0 %v3203
      %3504 = vmatprep.subr.bf16.mxu0 0
      %3505 = vmatpush2.bf16.msra.mxu0 %v3202
      %3506 = vmatprep.mubr.bf16.mxu0 %v2390
      %3507 = vmatmul.mubr.bf16.gmra.mxu0 %v2389
      %v3508 = vpop.f32.mrf.mxu0
      %v3509 = vadd.f32 %v3469, %v3508
      %v3510 = vpop.f32.mrf.mxu0
      %v3511 = vpop.f32.mrf.mxu0
      %v3512 = vpop.f32.mrf.mxu0
      %3513 = vdwg.mxu0
      %3514 = vmatprep.subr.bf16.mxu0 0
      %3515 = vmatpush1.bf16.msra.mxu0 %v3217
      %3516 = vmatprep.subr.bf16.mxu0 0
      %3517 = vmatpush1.bf16.msra.mxu0 %v3216
      %3518 = vmatprep.subr.bf16.mxu0 0
      %3519 = vmatpush1.bf16.msra.mxu0 %v3215
      %3520 = vmatprep.subr.bf16.mxu0 0
      %3521 = vmatpush1.bf16.msra.mxu0 %v3214
      %3522 = vmatprep.subr.bf16.mxu0 0
      %3523 = vmatpush1.bf16.msra.mxu0 %v3213
      %3524 = vmatprep.subr.bf16.mxu0 0
      %3525 = vmatpush1.bf16.msra.mxu0 %v3212
      %3526 = vmatprep.subr.bf16.mxu0 0
      %3527 = vmatpush1.bf16.msra.mxu0 %v3211
      %3528 = vmatprep.subr.bf16.mxu0 0
      %3529 = vmatpush1.bf16.msra.mxu0 %v3210
      %3530 = vmatprep.subr.bf16.mxu0 0
      %3531 = vmatpush2.bf16.msra.mxu0 %v3225
      %3532 = vmatprep.subr.bf16.mxu0 0
      %3533 = vmatpush2.bf16.msra.mxu0 %v3224
      %3534 = vmatprep.subr.bf16.mxu0 0
      %3535 = vmatpush2.bf16.msra.mxu0 %v3223
      %3536 = vmatprep.subr.bf16.mxu0 0
      %3537 = vmatpush2.bf16.msra.mxu0 %v3222
      %3538 = vmatprep.subr.bf16.mxu0 0
      %3539 = vmatpush2.bf16.msra.mxu0 %v3221
      %3540 = vmatprep.subr.bf16.mxu0 0
      %3541 = vmatpush2.bf16.msra.mxu0 %v3220
      %3542 = vmatprep.subr.bf16.mxu0 0
      %3543 = vmatpush2.bf16.msra.mxu0 %v3219
      %3544 = vmatprep.subr.bf16.mxu0 0
      %3545 = vmatpush2.bf16.msra.mxu0 %v3218
      %3546 = vmatprep.mubr.bf16.mxu0 %v2392
      %3547 = vmatmul.mubr.bf16.gmra.mxu0 %v2391
      %v3548 = vpop.f32.mrf.mxu0
      %v3549 = vadd.f32 %v3509, %v3548
      %v3550 = vpop.f32.mrf.mxu0
      %v3551 = vpop.f32.mrf.mxu0
      %v3552 = vpop.f32.mrf.mxu0
      %3553 = vdwg.mxu0
      %3554 = vmatprep.subr.bf16.mxu0 0
      %3555 = vmatpush1.bf16.msra.mxu0 %v3233
      %3556 = vmatprep.subr.bf16.mxu0 0
      %3557 = vmatpush1.bf16.msra.mxu0 %v3232
      %3558 = vmatprep.subr.bf16.mxu0 0
      %3559 = vmatpush1.bf16.msra.mxu0 %v3231
      %3560 = vmatprep.subr.bf16.mxu0 0
      %3561 = vmatpush1.bf16.msra.mxu0 %v3230
      %3562 = vmatprep.subr.bf16.mxu0 0
      %3563 = vmatpush1.bf16.msra.mxu0 %v3229
      %3564 = vmatprep.subr.bf16.mxu0 0
      %3565 = vmatpush1.bf16.msra.mxu0 %v3228
      %3566 = vmatprep.subr.bf16.mxu0 0
      %3567 = vmatpush1.bf16.msra.mxu0 %v3227
      %3568 = vmatprep.subr.bf16.mxu0 0
      %3569 = vmatpush1.bf16.msra.mxu0 %v3226
      %3570 = vmatprep.subr.bf16.mxu0 0
      %3571 = vmatpush2.bf16.msra.mxu0 %v3241
      %3572 = vmatprep.subr.bf16.mxu0 0
      %3573 = vmatpush2.bf16.msra.mxu0 %v3240
      %3574 = vmatprep.subr.bf16.mxu0 0
      %3575 = vmatpush2.bf16.msra.mxu0 %v3239
      %3576 = vmatprep.subr.bf16.mxu0 0
      %3577 = vmatpush2.bf16.msra.mxu0 %v3238
      %3578 = vmatprep.subr.bf16.mxu0 0
      %3579 = vmatpush2.bf16.msra.mxu0 %v3237
      %3580 = vmatprep.subr.bf16.mxu0 0
      %3581 = vmatpush2.bf16.msra.mxu0 %v3236
      %3582 = vmatprep.subr.bf16.mxu0 0
      %3583 = vmatpush2.bf16.msra.mxu0 %v3235
      %3584 = vmatprep.subr.bf16.mxu0 0
      %3585 = vmatpush2.bf16.msra.mxu0 %v3234
      %3586 = vmatprep.mubr.bf16.mxu0 %v2394
      %3587 = vmatmul.mubr.bf16.gmra.mxu0 %v2393
      %v3588 = vpop.f32.mrf.mxu0
      %v3589 = vadd.f32 %v3549, %v3588
      %v3590 = vpop.f32.mrf.mxu0
      %v3591 = vpop.f32.mrf.mxu0
      %v3592 = vpop.f32.mrf.mxu0
      %3593 = vdwg.mxu0
      %3594 = vmatprep.subr.bf16.mxu0 0
      %3595 = vmatpush1.bf16.msra.mxu0 %v3249
      %3596 = vmatprep.subr.bf16.mxu0 0
      %3597 = vmatpush1.bf16.msra.mxu0 %v3248
      %3598 = vmatprep.subr.bf16.mxu0 0
      %3599 = vmatpush1.bf16.msra.mxu0 %v3247
      %3600 = vmatprep.subr.bf16.mxu0 0
      %3601 = vmatpush1.bf16.msra.mxu0 %v3246
      %3602 = vmatprep.subr.bf16.mxu0 0
      %3603 = vmatpush1.bf16.msra.mxu0 %v3245
      %3604 = vmatprep.subr.bf16.mxu0 0
      %3605 = vmatpush1.bf16.msra.mxu0 %v3244
      %3606 = vmatprep.subr.bf16.mxu0 0
      %3607 = vmatpush1.bf16.msra.mxu0 %v3243
      %3608 = vmatprep.subr.bf16.mxu0 0
      %3609 = vmatpush1.bf16.msra.mxu0 %v3242
      %3610 = vmatprep.subr.bf16.mxu0 0
      %3611 = vmatpush2.bf16.msra.mxu0 %v3257
      %3612 = vmatprep.subr.bf16.mxu0 0
      %3613 = vmatpush2.bf16.msra.mxu0 %v3256
      %3614 = vmatprep.subr.bf16.mxu0 0
      %3615 = vmatpush2.bf16.msra.mxu0 %v3255
      %3616 = vmatprep.subr.bf16.mxu0 0
      %3617 = vmatpush2.bf16.msra.mxu0 %v3254
      %3618 = vmatprep.subr.bf16.mxu0 0
      %3619 = vmatpush2.bf16.msra.mxu0 %v3253
      %3620 = vmatprep.subr.bf16.mxu0 0
      %3621 = vmatpush2.bf16.msra.mxu0 %v3252
      %3622 = vmatprep.subr.bf16.mxu0 0
      %3623 = vmatpush2.bf16.msra.mxu0 %v3251
      %3624 = vmatprep.subr.bf16.mxu0 0
      %3625 = vmatpush2.bf16.msra.mxu0 %v3250
      %3626 = vmatprep.mubr.bf16.mxu0 %v2396
      %3627 = vmatmul.mubr.bf16.gmra.mxu0 %v2395
      %v3628 = vpop.f32.mrf.mxu0
      %v3629 = vadd.f32 %v3589, %v3628
      %v3630 = vpop.f32.mrf.mxu0
      %v3631 = vpop.f32.mrf.mxu0
      %v3632 = vpop.f32.mrf.mxu0
      %3633 = vdwg.mxu0
      %3634 = vmatprep.subr.bf16.mxu0 0
      %3635 = vmatpush1.bf16.msra.mxu0 %v3265
      %3636 = vmatprep.subr.bf16.mxu0 0
      %3637 = vmatpush1.bf16.msra.mxu0 %v3264
      %3638 = vmatprep.subr.bf16.mxu0 0
      %3639 = vmatpush1.bf16.msra.mxu0 %v3263
      %3640 = vmatprep.subr.bf16.mxu0 0
      %3641 = vmatpush1.bf16.msra.mxu0 %v3262
      %3642 = vmatprep.subr.bf16.mxu0 0
      %3643 = vmatpush1.bf16.msra.mxu0 %v3261
      %3644 = vmatprep.subr.bf16.mxu0 0
      %3645 = vmatpush1.bf16.msra.mxu0 %v3260
      %3646 = vmatprep.subr.bf16.mxu0 0
      %3647 = vmatpush1.bf16.msra.mxu0 %v3259
      %3648 = vmatprep.subr.bf16.mxu0 0
      %3649 = vmatpush1.bf16.msra.mxu0 %v3258
      %3650 = vmatprep.subr.bf16.mxu0 0
      %3651 = vmatpush2.bf16.msra.mxu0 %v3273
      %3652 = vmatprep.subr.bf16.mxu0 0
      %3653 = vmatpush2.bf16.msra.mxu0 %v3272
      %3654 = vmatprep.subr.bf16.mxu0 0
      %3655 = vmatpush2.bf16.msra.mxu0 %v3271
      %3656 = vmatprep.subr.bf16.mxu0 0
      %3657 = vmatpush2.bf16.msra.mxu0 %v3270
      %3658 = vmatprep.subr.bf16.mxu0 0
      %3659 = vmatpush2.bf16.msra.mxu0 %v3269
      %3660 = vmatprep.subr.bf16.mxu0 0
      %3661 = vmatpush2.bf16.msra.mxu0 %v3268
      %3662 = vmatprep.subr.bf16.mxu0 0
      %3663 = vmatpush2.bf16.msra.mxu0 %v3267
      %3664 = vmatprep.subr.bf16.mxu0 0
      %3665 = vmatpush2.bf16.msra.mxu0 %v3266
      %3666 = vmatprep.mubr.bf16.mxu0 %v2398
      %3667 = vmatmul.mubr.bf16.gmra.mxu0 %v2397
      %v3668 = vpop.f32.mrf.mxu0
      %v3669 = vadd.f32 %v3629, %v3668
      %v3670 = vpop.f32.mrf.mxu0
      %v3671 = vpop.f32.mrf.mxu0
      %v3672 = vpop.f32.mrf.mxu0
      %3673 = vdwg.mxu0
      %3674 = vmatprep.subr.bf16.mxu0 0
      %3675 = vmatpush1.bf16.msra.mxu0 %v3281
      %3676 = vmatprep.subr.bf16.mxu0 0
      %3677 = vmatpush1.bf16.msra.mxu0 %v3280
      %3678 = vmatprep.subr.bf16.mxu0 0
      %3679 = vmatpush1.bf16.msra.mxu0 %v3279
      %3680 = vmatprep.subr.bf16.mxu0 0
      %3681 = vmatpush1.bf16.msra.mxu0 %v3278
      %3682 = vmatprep.subr.bf16.mxu0 0
      %3683 = vmatpush1.bf16.msra.mxu0 %v3277
      %3684 = vmatprep.subr.bf16.mxu0 0
      %3685 = vmatpush1.bf16.msra.mxu0 %v3276
      %3686 = vmatprep.subr.bf16.mxu0 0
      %3687 = vmatpush1.bf16.msra.mxu0 %v3275
      %3688 = vmatprep.subr.bf16.mxu0 0
      %3689 = vmatpush1.bf16.msra.mxu0 %v3274
      %3690 = vmatprep.subr.bf16.mxu0 0
      %3691 = vmatpush2.bf16.msra.mxu0 %v3289
      %3692 = vmatprep.subr.bf16.mxu0 0
      %3693 = vmatpush2.bf16.msra.mxu0 %v3288
      %3694 = vmatprep.subr.bf16.mxu0 0
      %3695 = vmatpush2.bf16.msra.mxu0 %v3287
      %3696 = vmatprep.subr.bf16.mxu0 0
      %3697 = vmatpush2.bf16.msra.mxu0 %v3286
      %3698 = vmatprep.subr.bf16.mxu0 0
      %3699 = vmatpush2.bf16.msra.mxu0 %v3285
      %3700 = vmatprep.subr.bf16.mxu0 0
      %3701 = vmatpush2.bf16.msra.mxu0 %v3284
      %3702 = vmatprep.subr.bf16.mxu0 0
      %3703 = vmatpush2.bf16.msra.mxu0 %v3283
      %3704 = vmatprep.subr.bf16.mxu0 0
      %3705 = vmatpush2.bf16.msra.mxu0 %v3282
      %3706 = vmatprep.mubr.bf16.mxu0 %v2400
      %3707 = vmatmul.mubr.bf16.gmra.mxu0 %v2399
      %v3708 = vpop.f32.mrf.mxu0
      %v3709 = vadd.f32 %v3669, %v3708
      %v3710 = vpop.f32.mrf.mxu0
      %v3711 = vpop.f32.mrf.mxu0
      %v3712 = vpop.f32.mrf.mxu0
      %3713 = vdwg.mxu0
      %3714 = vmatprep.subr.bf16.mxu0 0
      %3715 = vmatpush1.bf16.msra.mxu0 %v3297
      %3716 = vmatprep.subr.bf16.mxu0 0
      %3717 = vmatpush1.bf16.msra.mxu0 %v3296
      %3718 = vmatprep.subr.bf16.mxu0 0
      %3719 = vmatpush1.bf16.msra.mxu0 %v3295
      %3720 = vmatprep.subr.bf16.mxu0 0
      %3721 = vmatpush1.bf16.msra.mxu0 %v3294
      %3722 = vmatprep.subr.bf16.mxu0 0
      %3723 = vmatpush1.bf16.msra.mxu0 %v3293
      %3724 = vmatprep.subr.bf16.mxu0 0
      %3725 = vmatpush1.bf16.msra.mxu0 %v3292
      %3726 = vmatprep.subr.bf16.mxu0 0
      %3727 = vmatpush1.bf16.msra.mxu0 %v3291
      %3728 = vmatprep.subr.bf16.mxu0 0
      %3729 = vmatpush1.bf16.msra.mxu0 %v3290
      %3730 = vmatprep.subr.bf16.mxu0 0
      %3731 = vmatpush2.bf16.msra.mxu0 %v3305
      %3732 = vmatprep.subr.bf16.mxu0 0
      %3733 = vmatpush2.bf16.msra.mxu0 %v3304
      %3734 = vmatprep.subr.bf16.mxu0 0
      %3735 = vmatpush2.bf16.msra.mxu0 %v3303
      %3736 = vmatprep.subr.bf16.mxu0 0
      %3737 = vmatpush2.bf16.msra.mxu0 %v3302
      %3738 = vmatprep.subr.bf16.mxu0 0
      %3739 = vmatpush2.bf16.msra.mxu0 %v3301
      %3740 = vmatprep.subr.bf16.mxu0 0
      %3741 = vmatpush2.bf16.msra.mxu0 %v3300
      %3742 = vmatprep.subr.bf16.mxu0 0
      %3743 = vmatpush2.bf16.msra.mxu0 %v3299
      %3744 = vmatprep.subr.bf16.mxu0 0
      %3745 = vmatpush2.bf16.msra.mxu0 %v3298
      %3746 = vmatprep.mubr.bf16.mxu0 %v2402
      %3747 = vmatmul.mubr.bf16.gmra.mxu0 %v2401
      %v3748 = vpop.f32.mrf.mxu0
      %v3749 = vadd.f32 %v3709, %v3748
      %v3750 = vpop.f32.mrf.mxu0
      %v3751 = vpop.f32.mrf.mxu0
      %v3752 = vpop.f32.mrf.mxu0
      %3753 = vdwg.mxu0
      %v3754 = vadd.f32 %v1762, %v3749
      %v3755 = vsel %vm502, %v3754, 0.0
      %3756 = vadd.xlane.f32.xlu0 %v3755
      %v3757 = vpop.xlane.xlu0 %3756
      %v3758 = vmul.f32 %v3757, %v1736
      %v3759 = vsub.f32 %v3754, %v3758
      %v3760 = vmul.f32 %v3759, %v3759
      %v3761 = vsel %vm502, %v3760, 0.0
      %3762 = vadd.xlane.f32.xlu0 %v3761
      %v3763 = vpop.xlane.xlu0 %3762
      %v3764 = vmul.f32 %v3763, %v1736
      %v3765 = vadd.f32 %v3764, 1e-05
      %v3766 = vrsqrt.pop %v3765
      %v3767 = vmul.f32 %v3759, %v3766
      %v3768 = vld [vmem:[%s12] sm:$0x1]
      %v3770 = vlaneseq
      %v3771 = vshrl.u32 %v3770, 7
      %v3772 = vsub.s32 0, %v3771
      %v3773 = vrot.slane %v3768, %v3772
      %v3775 = vmul.f32 %v3767, %v3773
      %v3776 = vld [vmem:[%s13] sm:$0x1]
      %v3778 = vlaneseq
      %v3779 = vshrl.u32 %v3778, 7
      %v3780 = vsub.s32 0, %v3779
      %v3781 = vrot.slane %v3776, %v3780
      %v3783 = vadd.f32 %v3775, %v3781
      %v3784 = vpack.c.bf16 %v3783, %v3783
      %vm3785 = vcmask 257024
      %3786 = vst.msk [vmem:[%s476] sm:$0xf] %vm3785, %v3784
      %p3787 = scmp.lt.s32.totalorder %s25, 1
      %s3788 = scalar_select %p3787, %s25, 1
      %s3789 = smul.addr %s3788, 4
      %s3790 = scalar_lea.vmem %s14, %s3789
      // Predicated region
      $region77: #{wrapped_transformer_encoder_video.2} parent=75 // pred_check
        %p3791 = pneg %p347
      $region78: #{wrapped_transformer_encoder_video.2} parent=75 // pred_check_branch
        %3793 = sbr.rel (%p3791) target = $region80
      $region79: #{wrapped_transformer_encoder_video.2} parent=75 // pred_region
        _
      $region80: #{wrapped_transformer_encoder_video.2} parent=75 // pred_fallthru
        _
    $region76: #{wrapped_transformer_encoder_video.2} parent=5 // pred_fallthru
      _
    %p3794 = scmp.le.s32.totalorder 2, %s20
    // Predicated region
    $region81: #{wrapped_transformer_encoder_video.2} parent=5 // pred_check
      %p3795 = pneg %p3794
    $region82: #{wrapped_transformer_encoder_video.2} parent=5 // pred_check_branch
      %3797 = sbr.rel (%p3795) target = $region84
    $region83: #{wrapped_transformer_encoder_video.2} parent=5 // pred_region
      %s3798 = ssub.s32 %s20, 2
      // Predicated region
      $region85: #{wrapped_transformer_encoder_video.2} parent=83 // pred_check
        %p3799 = pneg %p353
      $region86: #{wrapped_transformer_encoder_video.2} parent=83 // pred_check_branch
        %3801 = sbr.rel (%p3799) target = $region88
      $region87: #{wrapped_transformer_encoder_video.2} parent=83 // pred_region
        %p3802 = scmp.lt.s32.totalorder %s26, 1
        %s3803 = scalar_select %p3802, %s26, 1
        %s3804 = smul.addr %s3803, 4
        %s3805 = scalar_lea.vmem %s14, %s3804
      $region88: #{wrapped_transformer_encoder_video.2} parent=83 // pred_fallthru
        _
    $region84: #{wrapped_transformer_encoder_video.2} parent=5 // pred_fallthru
      _
  $region6: #{wrapped_transformer_encoder_video.2} parent=0 // loop_footer
    %s24 = sadd.s32 1, %s20
  $region7: #{wrapped_transformer_encoder_video.2} parent=0 // loop_footer_branch
    %19 = sbr.rel target = $region3
  $region8: #{wrapped_transformer_encoder_video.2} parent=0 // loop_exit
    _

</llo_original>
